<compile_context>
chip_gen: v6e
topology: v6e:2x2x1
jax: 0.10.0
libtpu: 0.0.40
codegen_flags: <defaults>
</compile_context>

<pallas_src>
import functools

import numpy as np
import jax
import jax.numpy as jnp
from jax.experimental import pallas as pl
from jax.experimental.pallas import tpu as pltpu  # noqa: F401  (TPU backend)


CFG = dict(
    seq_len=8,        # cfg.MODEL.CVAE.SEQ_LEN
    latent=32,        # cfg.MODEL.CVAE.LATENT_SIZE
    num_classes=4,    # cfg.DATASET.NUM_CLASSES
    audio_in=64,      # cfg.MODEL.CVAE.AUDIO_EMB_IN_SIZE
    audio_out=6,      # cfg.MODEL.CVAE.AUDIO_EMB_OUT_SIZE
    enc_layers=[48, 32],   # ENCODER_LAYER_SIZES (48 = seq_len*6)
    dec_layers=[32, 48],   # DECODER_LAYER_SIZES (48 = seq_len*6)
    mel_h=16, mel_w=16,
)

PACK_LANES = 128   # lane-dense packed output slab width

# fixed positional order of the prepared weight operators fed to the kernel
_WEIGHT_KEYS = (
    "perm", "d1", "b1d", "d2", "b2d", "w3", "b3", "w3p", "b3p",
    "er1", "er1b", "er2", "er2b", "ew0", "eb0", "em_w", "em_b",
    "dw1", "db1", "dw2", "db2", "dr1", "dr1b", "dr2p", "pw_blk", "pb_fold",
)


# ----------------------------------------------------------------------------
# Exact dense-operator form of a small NCHW Conv2d (pure numpy, built once)
# ----------------------------------------------------------------------------
@functools.lru_cache(maxsize=None)
def _conv_dense_indices(O, C, kh, kw, H, W, stride, pad):
    Ho = (H + 2 * pad - kh) // stride + 1
    Wo = (W + 2 * pad - kw) // stride + 1
    o, c, ky, kx, yo, xo = np.meshgrid(
        np.arange(O), np.arange(C), np.arange(kh), np.arange(kw),
        np.arange(Ho), np.arange(Wo), indexing="ij")
    yi = yo * stride + ky - pad
    xi = xo * stride + kx - pad
    ok = (yi >= 0) & (yi < H) & (xi >= 0) & (xi < W)
    rows = (c * H * W + yi * W + xi)[ok]
    cols = (o * Ho * Wo + yo * Wo + xo)[ok]
    widx = (((o * C + c) * kh + ky) * kw + kx)[ok]
    return rows, cols, widx, Ho, Wo


def conv2d_as_dense_np(w, b, H, W, stride, pad):
    """Conv2d(NCHW) as x.reshape(N,-1) @ D + bd (channel-major flatten), numpy."""
    w = np.asarray(w, np.float32)
    b = np.asarray(b, np.float32)
    O, C, kh, kw = w.shape
    rows, cols, widx, Ho, Wo = _conv_dense_indices(O, C, kh, kw, H, W, stride, pad)
    D = np.zeros((C * H * W, O * Ho * Wo), np.float32)
    D[rows, cols] = w.reshape(-1)[widx]
    bd = np.repeat(b, Ho * Wo).reshape(1, -1)
    return D, bd, Ho, Wo


# ----------------------------------------------------------------------------
# The single fused Pallas kernel
# ----------------------------------------------------------------------------
def _fused_kernel(*refs):
    (x_ref, pose_ref, ref_ref, eps_ref, cbe_ref, cbd_ref,
     perm, d1, b1d, d2, b2d, w3, b3, w3p, b3p,
     er1, er1b, er2, er2b, ew0, eb0, em_w, em_b,
     dw1, db1, dw2, db2, dr1, dr1b, dr2p, pw_blk, pb_fold,
     emb_out, pack_out) = refs

    f32, bf16 = jnp.float32, jnp.bfloat16
    bs = pose_ref.shape[0]
    R = x_ref.shape[0]
    seq = R // bs

    def mm(a, w_ref):
        # bf16 MXU operands, f32 accumulation; activations stay f32 elsewhere
        return jnp.dot(a.astype(bf16), w_ref[...], preferred_element_type=f32)

    # ------------------- audio encoder (rows = frames) ----------------------
    # wav2lip frame-concat (t-major) row ordering folded in as a tiny matmul
    xt = jnp.dot(perm[...], x_ref[...].astype(bf16), preferred_element_type=f32)
    h = jnp.maximum(mm(xt, d1) + b1d[...], 0.0)          # conv1 (dense op) + ReLU
    h = jnp.maximum(mm(h, d2) + b2d[...], 0.0)           # conv2 (dense op) + ReLU
    emb = mm(h, w3) + b3[...]                            # (R, ain) frame embedding
    proj = mm(h, w3p) + b3p[...]                         # (R, 2*aout), parallel to emb
    emb_out[...] = emb

    # per-frame projections -> per-batch lane-flat layout (quirk-faithful):
    #   audio_flat[b, k*2*aout + j] = proj[b*seq + k, j]
    rows = []
    for b in range(bs):
        base = b * seq
        rows.append(jnp.concatenate(
            [proj[base + k:base + k + 1, :] for k in range(seq)], axis=1))
    audio_flat = jnp.concatenate(rows, axis=0)           # (bs, seq*2*aout)

    # ------------------------- CVAE encoder ---------------------------------
    pose = pose_ref[...]                                 # (bs, seq*6)
    g = jnp.maximum(mm(pose, er1) + er1b[...], 0.0)
    pose_emb = mm(g, er2) + er2b[...] + pose             # ResUnet residual block
    # single MLP matmul over the in-VMEM concat (weight rows pre-permuted to match)
    xin_e = jnp.concatenate([ref_ref[...], cbe_ref[...], pose_emb, audio_flat], axis=1)
    h2 = jnp.maximum(mm(xin_e, ew0) + eb0[...], 0.0)
    mu = mm(h2, em_w) + em_b[...]                        # (bs, lat); logvar == mu

    # --------------------- reparameterize + decoder -------------------------
    z = mu + eps_ref[...] * jnp.exp(0.5 * mu)
    zc = z + cbd_ref[...]
    xin_d = jnp.concatenate([ref_ref[...], zc, audio_flat], axis=1)
    h3 = jnp.maximum(mm(xin_d, dw1) + db1[...], 0.0)
    xout = jax.nn.sigmoid(mm(h3, dw2) + db2[...])        # (bs, seq*6)
    g2 = jnp.maximum(mm(xout, dr1) + dr1b[...], 0.0)
    # ResUnet residual block with the per-frame pose head folded into dr2p:
    #   pred = (g2@dr2 + dr2b + xout) @ blkdiag(pose_w) + pose_b
    pred = mm(g2, dr2p) + mm(xout, pw_blk) + pb_fold[...]

    # lane-dense packed output slab: [pred | mu | z | zero pad]
    pad_w = pack_out.shape[1] - (pred.shape[1] + 2 * mu.shape[1])
    pieces = [pred, mu, z]
    if pad_w:
        pieces.append(jnp.zeros((bs, pad_w), f32))
    pack_out[...] = jnp.concatenate(pieces, axis=1)


def _fullspec(shape):
    n = len(shape)
    return pl.BlockSpec(shape, lambda i, n=n: (0,) * n)


# ----------------------------------------------------------------------------
# One-time parameter preparation (numpy; nothing here runs per forward call)
# ----------------------------------------------------------------------------
def prepare_params(params, bs, cfg=CFG):
    seq, lat = cfg["seq_len"], cfg["latent"]
    aout = cfg["audio_out"]
    H, W = cfg["mel_h"], cfg["mel_w"]
    R = bs * seq
    f32 = np.float32
    assert seq * 6 + 2 * lat <= PACK_LANES

    def npf(a):
        return np.asarray(a, f32)

    pa, pe, pd = params["audio"], params["enc"], params["dec"]
    assert len(pe["mlp"]) == 1 and len(pd["mlp"]) == 2, "fused kernel assumes CFG layer counts"

    # t-major frame permutation:  xt[t*bs + b] = x[b*seq + t]
    perm = np.zeros((R, R), f32)
    for t in range(seq):
        for b in range(bs):
            perm[t * bs + b, b * seq + t] = 1.0

    # audio encoder: strided convs as exact dense operators + folded audio heads
    d1, b1d, H1, W1 = conv2d_as_dense_np(pa["w1"], pa["b1"], H, W, 2, 1)
    d2, b2d, _, _ = conv2d_as_dense_np(pa["w2"], pa["b2"], H1, W1, 2, 1)
    w3, b3 = npf(pa["w3"]), npf(pa["b3"]).reshape(1, -1)
    wa_cat = np.concatenate([npf(pe["audio_w"]), npf(pd["audio_w"])], axis=1)  # (ain, 2*aout)
    ba_cat = np.concatenate([npf(pe["audio_b"]), npf(pd["audio_b"])], axis=0)
    w3p = w3 @ wa_cat                       # proj = h @ w3p + b3p (parallel to emb)
    b3p = (b3 @ wa_cat + ba_cat).reshape(1, -1)

    # CVAE encoder: ResUnet dense ops + MLP-0 rows permuted to the kernel layout
    er1, er1b, _, _ = conv2d_as_dense_np(pe["resunet"]["w1"], pe["resunet"]["b1"], seq, 6, 1, 1)
    er2, er2b, _, _ = conv2d_as_dense_np(pe["resunet"]["w2"], pe["resunet"]["b2"], seq, 6, 1, 1)
    w0, b0 = npf(pe["mlp"][0][0]), npf(pe["mlp"][0][1])
    hid = w0.shape[1]
    pp = seq * 6
    # torch x_in  : [ref(6) | pose_emb(48) | audio_enc(48) | class_bias(lat)]
    # kernel xin_e: [ref(6) | class_bias(lat) | pose_emb(48) | audio_flat(seq*2*aout)]
    ew0 = np.zeros((6 + lat + pp + seq * 2 * aout, hid), f32)
    ew0[0:6] = w0[0:6]
    ew0[6:6 + lat] = w0[6 + pp + seq * aout:]
    ew0[6 + lat:6 + lat + pp] = w0[6:6 + pp]
    a0 = 6 + lat + pp
    for k in range(seq):
        ew0[a0 + k * 2 * aout: a0 + k * 2 * aout + aout] = \
            w0[6 + pp + k * aout: 6 + pp + (k + 1) * aout]
    eb0 = b0.reshape(1, -1)
    em_w, em_b = npf(pe["means_w"]), npf(pe["means_b"]).reshape(1, -1)

    # CVAE decoder: MLP-0 rows permuted; ResUnet dense ops; pose head folded
    (w1, b1), (w2, b2) = pd["mlp"]
    w1, b1, w2, b2 = npf(w1), npf(b1), npf(w2), npf(b2)
    hid_d = w1.shape[1]
    # torch x_in  : [ref(6) | z+cb(lat) | audio_dec(48)]
    # kernel xin_d: [ref(6) | z+cb(lat) | audio_flat(seq*2*aout)]
    dw1 = np.zeros((6 + lat + seq * 2 * aout, hid_d), f32)
    dw1[0:6 + lat] = w1[0:6 + lat]
    ad0 = 6 + lat
    for k in range(seq):
        dw1[ad0 + k * 2 * aout + aout: ad0 + (k + 1) * 2 * aout] = \
            w1[6 + lat + k * aout: 6 + lat + (k + 1) * aout]
    db1 = b1.reshape(1, -1)
    dw2, db2 = w2, b2.reshape(1, -1)
    dr1, dr1b, _, _ = conv2d_as_dense_np(pd["resunet"]["w1"], pd["resunet"]["b1"], seq, 6, 1, 1)
    dr2, dr2b, _, _ = conv2d_as_dense_np(pd["resunet"]["w2"], pd["resunet"]["b2"], seq, 6, 1, 1)
    pw_blk = np.kron(np.eye(seq, dtype=f32), npf(pd["pose_w"]))        # (48, 48)
    pb_blk = np.tile(npf(pd["pose_b"]), seq).reshape(1, -1)            # (1, 48)
    dr2p = dr2 @ pw_blk                                                # fold pose head
    pb_fold = dr2b @ pw_blk + pb_blk

    bf = lambda a: jnp.asarray(a, jnp.bfloat16)   # MXU operands
    fl = lambda a: jnp.asarray(a, jnp.float32)    # biases / tables
    return dict(
        perm=bf(perm), d1=bf(d1), b1d=fl(b1d), d2=bf(d2), b2d=fl(b2d),
        w3=bf(w3), b3=fl(b3), w3p=bf(w3p), b3p=fl(b3p),
        er1=bf(er1), er1b=fl(er1b), er2=bf(er2), er2b=fl(er2b),
        ew0=bf(ew0), eb0=fl(eb0), em_w=bf(em_w), em_b=fl(em_b),
        dw1=bf(dw1), db1=fl(db1), dw2=bf(dw2), db2=fl(db2),
        dr1=bf(dr1), dr1b=fl(dr1b), dr2p=bf(dr2p), pw_blk=bf(pw_blk), pb_fold=fl(pb_fold),
        enc_classbias=fl(pe["classbias"]),
        dec_classbias=fl(pd["classbias"]),
    )


# ----------------------------------------------------------------------------
# Forward pass: a few free slices/reshapes + 2 tiny gathers + ONE pallas_call
# ----------------------------------------------------------------------------
def audio2pose_forward(prep, x, eps):
    cfg = CFG
    seq, lat, ain = cfg["seq_len"], cfg["latent"], cfg["audio_in"]

    coeff_gt = x["gt"].astype(jnp.float32)                  # (bs, seq+1, 73)
    bs = coeff_gt.shape[0]
    pose_gt = coeff_gt[:, 1:, 64:70]                        # (bs, seq, 6)
    ref_frame = coeff_gt[:, :1, 64:70]                      # (bs, 1, 6)
    pose_motion_gt = pose_gt - ref_frame                    # tiny; fused by XLA
    ref = coeff_gt[:, 0, 64:70]                             # (bs, 6)
    class_id = x["class"]

    # x['indiv_mels'].squeeze(0); the unsqueeze(2) channel dim is implicit (C=1)
    mels = jnp.squeeze(x["indiv_mels"], 0)                  # (bs, seq, H, W)
    x_mel = mels.reshape(bs * seq, cfg["mel_h"] * cfg["mel_w"])   # contiguous -> free

    cb_e = prep["enc_classbias"][class_id]                  # (bs, lat) tiny gather
    cb_d = prep["dec_classbias"][class_id]                  # (bs, lat)
    pose_flat = pose_motion_gt.reshape(bs, seq * 6)         # contiguous -> free

    R = bs * seq
    inputs = [x_mel, pose_flat, ref, eps, cb_e, cb_d] + [prep[k] for k in _WEIGHT_KEYS]
    out_shapes = ((R, ain), (bs, PACK_LANES))
    emb_rows, pack = pl.pallas_call(
        _fused_kernel,
        out_shape=tuple(jax.ShapeDtypeStruct(s, jnp.float32) for s in out_shapes),
        grid=(1,),
        in_specs=[_fullspec(a.shape) for a in inputs],
        out_specs=tuple(_fullspec(s) for s in out_shapes),
    )(*inputs)

    mu = pack[:, seq * 6: seq * 6 + lat]
    logvar = mu            # SadTalker bug reproduced: logvar head == means head
    z = pack[:, seq * 6 + lat: seq * 6 + 2 * lat]
    pose_motion_pred = pack[:, :seq * 6].reshape(bs, seq, 6)
    audio_emb = emb_rows.reshape(bs, -1, ain)               # wav2lip reshape quirk kept
    pose_pred = ref_frame + pose_motion_pred                # tiny; fused by XLA

    return {
        "pose_motion_gt": pose_motion_gt,
        "ref": ref,
        "class": class_id,
        "audio_emb": audio_emb,
        "mu": mu,
        "logvar": logvar,
        "z": z,
        "pose_motion_pred": pose_motion_pred,
        "pose_pred": pose_pred,
        "pose_gt": pose_gt,
    }


# ----------------------------------------------------------------------------
# Deterministic parameter initialization (same structure as the conv model)
# ----------------------------------------------------------------------------
def _winit(key, shape, scale=0.1):
    return scale * jax.random.normal(key, shape, jnp.float32)


def init_params(key, cfg=CFG):
    ks = iter(jax.random.split(key, 64))
    seq, lat, ncls = cfg["seq_len"], cfg["latent"], cfg["num_classes"]
    ain, aout = cfg["audio_in"], cfg["audio_out"]

    def resunet_params():
        return dict(
            w1=_winit(next(ks), (8, 1, 3, 3)), b1=_winit(next(ks), (8,)),
            w2=_winit(next(ks), (1, 8, 3, 3)), b2=_winit(next(ks), (1,)),
        )

    feat = 16 * (cfg["mel_h"] // 4) * (cfg["mel_w"] // 4)
    audio = dict(
        w1=_winit(next(ks), (8, 1, 3, 3)),  b1=_winit(next(ks), (8,)),
        w2=_winit(next(ks), (16, 8, 3, 3)), b2=_winit(next(ks), (16,)),
        w3=_winit(next(ks), (feat, ain)),   b3=_winit(next(ks), (ain,)),
    )

    enc_sizes = list(cfg["enc_layers"])
    enc_sizes[0] += lat + seq * aout + 6
    enc_mlp = [(_winit(next(ks), (i, o)), _winit(next(ks), (o,)))
               for i, o in zip(enc_sizes[:-1], enc_sizes[1:])]
    enc = dict(
        resunet=resunet_params(),
        mlp=enc_mlp,
        means_w=_winit(next(ks), (enc_sizes[-1], lat)), means_b=_winit(next(ks), (lat,)),
        # linear_logvar exists in __init__ but is unused (bug reproduced above)
        logvar_w=_winit(next(ks), (enc_sizes[-1], lat)), logvar_b=_winit(next(ks), (lat,)),
        audio_w=_winit(next(ks), (ain, aout)), audio_b=_winit(next(ks), (aout,)),
        classbias=jax.random.normal(next(ks), (ncls, lat), jnp.float32),
    )

    dec_sizes = list(cfg["dec_layers"])
    dec_in = lat + seq * aout + 6
    dec_mlp = [(_winit(next(ks), (i, o)), _winit(next(ks), (o,)))
               for i, o in zip([dec_in] + dec_sizes[:-1], dec_sizes)]
    dec = dict(
        resunet=resunet_params(),
        mlp=dec_mlp,
        pose_w=_winit(next(ks), (6, 6)), pose_b=_winit(next(ks), (6,)),
        audio_w=_winit(next(ks), (ain, aout)), audio_b=_winit(next(ks), (aout,)),
        classbias=jax.random.normal(next(ks), (ncls, lat), jnp.float32),
    )
    return dict(audio=audio, enc=enc, dec=dec)


# ----------------------------------------------------------------------------
# Main
# ----------------------------------------------------------------------------
if __name__ == "__main__":
    bs = 2
    key = jax.random.PRNGKey(0)
    k_gt, k_cls, k_mel, k_eps = jax.random.split(key, 4)

    x = {
        "gt": jax.random.normal(k_gt, (bs, CFG["seq_len"] + 1, 73), jnp.float32),
        "class": jax.random.randint(k_cls, (bs,), 0, CFG["num_classes"]),
        "indiv_mels": jax.random.normal(
            k_mel, (1, bs, CFG["seq_len"], CFG["mel_h"], CFG["mel_w"]), jnp.float32),
    }
    eps = jax.random.normal(k_eps, (bs, CFG["latent"]), jnp.float32)

    params = init_params(jax.random.PRNGKey(42))
    prep = prepare_params(params, bs)          # one-time, outside the jit

    forward = jax.jit(audio2pose_forward)
    out = forward(prep, x, eps)
    jax.block_until_ready(out["pose_pred"])

    assert out["pose_pred"].shape == (bs, CFG["seq_len"], 6)
    assert out["pose_gt"].shape == (bs, CFG["seq_len"], 6)
    assert out["audio_emb"].shape == (bs, CFG["seq_len"], CFG["audio_in"])
    assert out["mu"].shape == (bs, CFG["latent"])
    assert out["z"].shape == (bs, CFG["latent"])
    print("KERNEL_OK")
</pallas_src>

<mosaic_0001>
module attributes {stable_mosaic.version = 11 : i64} {
  func.func @_fused_kernel(%arg0: i32, %arg1: memref<16x256xf32, #tpu.memory_space<vmem>>, %arg2: memref<2x48xf32, #tpu.memory_space<vmem>>, %arg3: memref<2x6xf32, #tpu.memory_space<vmem>>, %arg4: memref<2x32xf32, #tpu.memory_space<vmem>>, %arg5: memref<2x32xf32, #tpu.memory_space<vmem>>, %arg6: memref<2x32xf32, #tpu.memory_space<vmem>>, %arg7: memref<16x16xbf16, #tpu.memory_space<vmem>>, %arg8: memref<256x512xbf16, #tpu.memory_space<vmem>>, %arg9: memref<1x512xf32, #tpu.memory_space<vmem>>, %arg10: memref<512x256xbf16, #tpu.memory_space<vmem>>, %arg11: memref<1x256xf32, #tpu.memory_space<vmem>>, %arg12: memref<256x64xbf16, #tpu.memory_space<vmem>>, %arg13: memref<1x64xf32, #tpu.memory_space<vmem>>, %arg14: memref<256x12xbf16, #tpu.memory_space<vmem>>, %arg15: memref<1x12xf32, #tpu.memory_space<vmem>>, %arg16: memref<48x384xbf16, #tpu.memory_space<vmem>>, %arg17: memref<1x384xf32, #tpu.memory_space<vmem>>, %arg18: memref<384x48xbf16, #tpu.memory_space<vmem>>, %arg19: memref<1x48xf32, #tpu.memory_space<vmem>>, %arg20: memref<182x32xbf16, #tpu.memory_space<vmem>>, %arg21: memref<1x32xf32, #tpu.memory_space<vmem>>, %arg22: memref<32x32xbf16, #tpu.memory_space<vmem>>, %arg23: memref<1x32xf32, #tpu.memory_space<vmem>>, %arg24: memref<134x32xbf16, #tpu.memory_space<vmem>>, %arg25: memref<1x32xf32, #tpu.memory_space<vmem>>, %arg26: memref<32x48xbf16, #tpu.memory_space<vmem>>, %arg27: memref<1x48xf32, #tpu.memory_space<vmem>>, %arg28: memref<48x384xbf16, #tpu.memory_space<vmem>>, %arg29: memref<1x384xf32, #tpu.memory_space<vmem>>, %arg30: memref<384x48xbf16, #tpu.memory_space<vmem>>, %arg31: memref<48x48xbf16, #tpu.memory_space<vmem>>, %arg32: memref<1x48xf32, #tpu.memory_space<vmem>>, %arg33: memref<16x64xf32, #tpu.memory_space<vmem>>, %arg34: memref<2x128xf32, #tpu.memory_space<vmem>>) attributes {dimension_semantics = [#tpu.dimension_semantics<arbitrary>], iteration_bounds = array<i64: 1>, scalar_prefetch = 0 : i64, scratch_operands = 0 : i64, tpu.core_type = #tpu.core_type<tc>, window_params = [{pipeline_mode = #tpu.pipeline_mode<synchronous>, transform_indices = @transform_0, window_bounds = array<i64: 16, 256>}, {pipeline_mode = #tpu.pipeline_mode<synchronous>, transform_indices = @transform_1, window_bounds = array<i64: 2, 48>}, {pipeline_mode = #tpu.pipeline_mode<synchronous>, transform_indices = @transform_2, window_bounds = array<i64: 2, 6>}, {pipeline_mode = #tpu.pipeline_mode<synchronous>, transform_indices = @transform_3, window_bounds = array<i64: 2, 32>}, {pipeline_mode = #tpu.pipeline_mode<synchronous>, transform_indices = @transform_4, window_bounds = array<i64: 2, 32>}, {pipeline_mode = #tpu.pipeline_mode<synchronous>, transform_indices = @transform_5, window_bounds = array<i64: 2, 32>}, {pipeline_mode = #tpu.pipeline_mode<synchronous>, transform_indices = @transform_6, window_bounds = array<i64: 16, 16>}, {pipeline_mode = #tpu.pipeline_mode<synchronous>, transform_indices = @transform_7, window_bounds = array<i64: 256, 512>}, {pipeline_mode = #tpu.pipeline_mode<synchronous>, transform_indices = @transform_8, window_bounds = array<i64: 1, 512>}, {pipeline_mode = #tpu.pipeline_mode<synchronous>, transform_indices = @transform_9, window_bounds = array<i64: 512, 256>}, {pipeline_mode = #tpu.pipeline_mode<synchronous>, transform_indices = @transform_10, window_bounds = array<i64: 1, 256>}, {pipeline_mode = #tpu.pipeline_mode<synchronous>, transform_indices = @transform_11, window_bounds = array<i64: 256, 64>}, {pipeline_mode = #tpu.pipeline_mode<synchronous>, transform_indices = @transform_12, window_bounds = array<i64: 1, 64>}, {pipeline_mode = #tpu.pipeline_mode<synchronous>, transform_indices = @transform_13, window_bounds = array<i64: 256, 12>}, {pipeline_mode = #tpu.pipeline_mode<synchronous>, transform_indices = @transform_14, window_bounds = array<i64: 1, 12>}, {pipeline_mode = #tpu.pipeline_mode<synchronous>, transform_indices = @transform_15, window_bounds = array<i64: 48, 384>}, {pipeline_mode = #tpu.pipeline_mode<synchronous>, transform_indices = @transform_16, window_bounds = array<i64: 1, 384>}, {pipeline_mode = #tpu.pipeline_mode<synchronous>, transform_indices = @transform_17, window_bounds = array<i64: 384, 48>}, {pipeline_mode = #tpu.pipeline_mode<synchronous>, transform_indices = @transform_18, window_bounds = array<i64: 1, 48>}, {pipeline_mode = #tpu.pipeline_mode<synchronous>, transform_indices = @transform_19, window_bounds = array<i64: 182, 32>}, {pipeline_mode = #tpu.pipeline_mode<synchronous>, transform_indices = @transform_20, window_bounds = array<i64: 1, 32>}, {pipeline_mode = #tpu.pipeline_mode<synchronous>, transform_indices = @transform_21, window_bounds = array<i64: 32, 32>}, {pipeline_mode = #tpu.pipeline_mode<synchronous>, transform_indices = @transform_22, window_bounds = array<i64: 1, 32>}, {pipeline_mode = #tpu.pipeline_mode<synchronous>, transform_indices = @transform_23, window_bounds = array<i64: 134, 32>}, {pipeline_mode = #tpu.pipeline_mode<synchronous>, transform_indices = @transform_24, window_bounds = array<i64: 1, 32>}, {pipeline_mode = #tpu.pipeline_mode<synchronous>, transform_indices = @transform_25, window_bounds = array<i64: 32, 48>}, {pipeline_mode = #tpu.pipeline_mode<synchronous>, transform_indices = @transform_26, window_bounds = array<i64: 1, 48>}, {pipeline_mode = #tpu.pipeline_mode<synchronous>, transform_indices = @transform_27, window_bounds = array<i64: 48, 384>}, {pipeline_mode = #tpu.pipeline_mode<synchronous>, transform_indices = @transform_28, window_bounds = array<i64: 1, 384>}, {pipeline_mode = #tpu.pipeline_mode<synchronous>, transform_indices = @transform_29, window_bounds = array<i64: 384, 48>}, {pipeline_mode = #tpu.pipeline_mode<synchronous>, transform_indices = @transform_30, window_bounds = array<i64: 48, 48>}, {pipeline_mode = #tpu.pipeline_mode<synchronous>, transform_indices = @transform_31, window_bounds = array<i64: 1, 48>}, {pipeline_mode = #tpu.pipeline_mode<synchronous>, transform_indices = @transform_32, window_bounds = array<i64: 16, 64>}, {pipeline_mode = #tpu.pipeline_mode<synchronous>, transform_indices = @transform_33, window_bounds = array<i64: 2, 128>}]} {
    %c0 = arith.constant 0 : index
    %c0_0 = arith.constant 0 : index
    %0 = vector.load %arg7[%c0, %c0_0] : memref<16x16xbf16, #tpu.memory_space<vmem>>, vector<16x16xbf16>
    %c0_1 = arith.constant 0 : index
    %c0_2 = arith.constant 0 : index
    %1 = vector.load %arg1[%c0_1, %c0_2] : memref<16x256xf32, #tpu.memory_space<vmem>>, vector<16x256xf32>
    %2 = arith.truncf %1 : vector<16x256xf32> to vector<16x256xbf16>
    %cst = arith.constant dense<0.000000e+00> : vector<16x256xf32>
    %3 = tpu.matmul %0, %2, %cst {dimension_numbers = #tpu.dot_dimension_numbers<[1], [0], [0], [1], [0, 0, 1, 1], [], []>} : vector<16x16xbf16>, vector<16x256xbf16>, vector<16x256xf32> -> vector<16x256xf32>
    %4 = arith.truncf %3 : vector<16x256xf32> to vector<16x256xbf16>
    %c0_3 = arith.constant 0 : index
    %c0_4 = arith.constant 0 : index
    %5 = vector.load %arg8[%c0_3, %c0_4] : memref<256x512xbf16, #tpu.memory_space<vmem>>, vector<256x512xbf16>
    %cst_5 = arith.constant dense<0.000000e+00> : vector<16x512xf32>
    %6 = tpu.matmul %4, %5, %cst_5 {dimension_numbers = #tpu.dot_dimension_numbers<[1], [0], [0], [1], [0, 0, 1, 1], [], []>} : vector<16x256xbf16>, vector<256x512xbf16>, vector<16x512xf32> -> vector<16x512xf32>
    %c0_6 = arith.constant 0 : index
    %c0_7 = arith.constant 0 : index
    %7 = vector.load %arg9[%c0_6, %c0_7] : memref<1x512xf32, #tpu.memory_space<vmem>>, vector<1x512xf32>
    %8 = vector.broadcast %7 : vector<1x512xf32> to vector<16x512xf32>
    %9 = arith.addf %6, %8 : vector<16x512xf32>
    %cst_8 = arith.constant 0.000000e+00 : f32
    %10 = vector.broadcast %cst_8 : f32 to vector<16x512xf32>
    %11 = arith.maximumf %9, %10 : vector<16x512xf32>
    %12 = arith.truncf %11 : vector<16x512xf32> to vector<16x512xbf16>
    %c0_9 = arith.constant 0 : index
    %c0_10 = arith.constant 0 : index
    %13 = vector.load %arg10[%c0_9, %c0_10] : memref<512x256xbf16, #tpu.memory_space<vmem>>, vector<512x256xbf16>
    %cst_11 = arith.constant dense<0.000000e+00> : vector<16x256xf32>
    %14 = tpu.matmul %12, %13, %cst_11 {dimension_numbers = #tpu.dot_dimension_numbers<[1], [0], [0], [1], [0, 0, 1, 1], [], []>} : vector<16x512xbf16>, vector<512x256xbf16>, vector<16x256xf32> -> vector<16x256xf32>
    %c0_12 = arith.constant 0 : index
    %c0_13 = arith.constant 0 : index
    %15 = vector.load %arg11[%c0_12, %c0_13] : memref<1x256xf32, #tpu.memory_space<vmem>>, vector<1x256xf32>
    %16 = vector.broadcast %15 : vector<1x256xf32> to vector<16x256xf32>
    %17 = arith.addf %14, %16 : vector<16x256xf32>
    %cst_14 = arith.constant 0.000000e+00 : f32
    %18 = vector.broadcast %cst_14 : f32 to vector<16x256xf32>
    %19 = arith.maximumf %17, %18 : vector<16x256xf32>
    %20 = arith.truncf %19 : vector<16x256xf32> to vector<16x256xbf16>
    %c0_15 = arith.constant 0 : index
    %c0_16 = arith.constant 0 : index
    %21 = vector.load %arg12[%c0_15, %c0_16] : memref<256x64xbf16, #tpu.memory_space<vmem>>, vector<256x64xbf16>
    %cst_17 = arith.constant dense<0.000000e+00> : vector<16x64xf32>
    %22 = tpu.matmul %20, %21, %cst_17 {dimension_numbers = #tpu.dot_dimension_numbers<[1], [0], [0], [1], [0, 0, 1, 1], [], []>} : vector<16x256xbf16>, vector<256x64xbf16>, vector<16x64xf32> -> vector<16x64xf32>
    %c0_18 = arith.constant 0 : index
    %c0_19 = arith.constant 0 : index
    %23 = vector.load %arg13[%c0_18, %c0_19] : memref<1x64xf32, #tpu.memory_space<vmem>>, vector<1x64xf32>
    %24 = vector.broadcast %23 : vector<1x64xf32> to vector<16x64xf32>
    %25 = arith.addf %22, %24 : vector<16x64xf32>
    %26 = arith.truncf %19 : vector<16x256xf32> to vector<16x256xbf16>
    %c0_20 = arith.constant 0 : index
    %c0_21 = arith.constant 0 : index
    %27 = vector.load %arg14[%c0_20, %c0_21] : memref<256x12xbf16, #tpu.memory_space<vmem>>, vector<256x12xbf16>
    %cst_22 = arith.constant dense<0.000000e+00> : vector<16x12xf32>
    %28 = tpu.matmul %26, %27, %cst_22 {dimension_numbers = #tpu.dot_dimension_numbers<[1], [0], [0], [1], [0, 0, 1, 1], [], []>} : vector<16x256xbf16>, vector<256x12xbf16>, vector<16x12xf32> -> vector<16x12xf32>
    %c0_23 = arith.constant 0 : index
    %c0_24 = arith.constant 0 : index
    %29 = vector.load %arg15[%c0_23, %c0_24] : memref<1x12xf32, #tpu.memory_space<vmem>>, vector<1x12xf32>
    %30 = vector.broadcast %29 : vector<1x12xf32> to vector<16x12xf32>
    %31 = arith.addf %28, %30 : vector<16x12xf32>
    %c0_25 = arith.constant 0 : index
    %c0_26 = arith.constant 0 : index
    %32 = vector.load %arg33[%c0_25, %c0_26] : memref<16x64xf32, #tpu.memory_space<vmem>>, vector<16x64xf32>
    tpu.vector_store %arg33[%c0_25, %c0_26], %25 {strides = array<i32>} : memref<16x64xf32, #tpu.memory_space<vmem>>, vector<16x64xf32>,
    %33 = vector.extract_strided_slice %31 {offsets = [0, 0], sizes = [1, 12], strides = [1, 1]} : vector<16x12xf32> to vector<1x12xf32>
    %34 = vector.extract_strided_slice %31 {offsets = [1, 0], sizes = [1, 12], strides = [1, 1]} : vector<16x12xf32> to vector<1x12xf32>
    %35 = vector.extract_strided_slice %31 {offsets = [2, 0], sizes = [1, 12], strides = [1, 1]} : vector<16x12xf32> to vector<1x12xf32>
    %36 = vector.extract_strided_slice %31 {offsets = [3, 0], sizes = [1, 12], strides = [1, 1]} : vector<16x12xf32> to vector<1x12xf32>
    %37 = vector.extract_strided_slice %31 {offsets = [4, 0], sizes = [1, 12], strides = [1, 1]} : vector<16x12xf32> to vector<1x12xf32>
    %38 = vector.extract_strided_slice %31 {offsets = [5, 0], sizes = [1, 12], strides = [1, 1]} : vector<16x12xf32> to vector<1x12xf32>
    %39 = vector.extract_strided_slice %31 {offsets = [6, 0], sizes = [1, 12], strides = [1, 1]} : vector<16x12xf32> to vector<1x12xf32>
    %40 = vector.extract_strided_slice %31 {offsets = [7, 0], sizes = [1, 12], strides = [1, 1]} : vector<16x12xf32> to vector<1x12xf32>
    %41 = tpu.concatenate %33, %34, %35, %36, %37, %38, %39, %40 in 1 : vector<1x12xf32>, vector<1x12xf32>, vector<1x12xf32>, vector<1x12xf32>, vector<1x12xf32>, vector<1x12xf32>, vector<1x12xf32>, vector<1x12xf32> -> vector<1x96xf32>
    %42 = vector.extract_strided_slice %31 {offsets = [8, 0], sizes = [1, 12], strides = [1, 1]} : vector<16x12xf32> to vector<1x12xf32>
    %43 = vector.extract_strided_slice %31 {offsets = [9, 0], sizes = [1, 12], strides = [1, 1]} : vector<16x12xf32> to vector<1x12xf32>
    %44 = vector.extract_strided_slice %31 {offsets = [10, 0], sizes = [1, 12], strides = [1, 1]} : vector<16x12xf32> to vector<1x12xf32>
    %45 = vector.extract_strided_slice %31 {offsets = [11, 0], sizes = [1, 12], strides = [1, 1]} : vector<16x12xf32> to vector<1x12xf32>
    %46 = vector.extract_strided_slice %31 {offsets = [12, 0], sizes = [1, 12], strides = [1, 1]} : vector<16x12xf32> to vector<1x12xf32>
    %47 = vector.extract_strided_slice %31 {offsets = [13, 0], sizes = [1, 12], strides = [1, 1]} : vector<16x12xf32> to vector<1x12xf32>
    %48 = vector.extract_strided_slice %31 {offsets = [14, 0], sizes = [1, 12], strides = [1, 1]} : vector<16x12xf32> to vector<1x12xf32>
    %49 = vector.extract_strided_slice %31 {offsets = [15, 0], sizes = [1, 12], strides = [1, 1]} : vector<16x12xf32> to vector<1x12xf32>
    %50 = tpu.concatenate %42, %43, %44, %45, %46, %47, %48, %49 in 1 : vector<1x12xf32>, vector<1x12xf32>, vector<1x12xf32>, vector<1x12xf32>, vector<1x12xf32>, vector<1x12xf32>, vector<1x12xf32>, vector<1x12xf32> -> vector<1x96xf32>
    %51 = tpu.concatenate %41, %50 in 0 : vector<1x96xf32>, vector<1x96xf32> -> vector<2x96xf32>
    %c0_27 = arith.constant 0 : index
    %c0_28 = arith.constant 0 : index
    %52 = vector.load %arg2[%c0_27, %c0_28] : memref<2x48xf32, #tpu.memory_space<vmem>>, vector<2x48xf32>
    %53 = arith.truncf %52 : vector<2x48xf32> to vector<2x48xbf16>
    %c0_29 = arith.constant 0 : index
    %c0_30 = arith.constant 0 : index
    %54 = vector.load %arg16[%c0_29, %c0_30] : memref<48x384xbf16, #tpu.memory_space<vmem>>, vector<48x384xbf16>
    %cst_31 = arith.constant dense<0.000000e+00> : vector<2x384xf32>
    %55 = tpu.matmul %53, %54, %cst_31 {dimension_numbers = #tpu.dot_dimension_numbers<[1], [0], [0], [1], [0, 0, 1, 1], [], []>} : vector<2x48xbf16>, vector<48x384xbf16>, vector<2x384xf32> -> vector<2x384xf32>
    %c0_32 = arith.constant 0 : index
    %c0_33 = arith.constant 0 : index
    %56 = vector.load %arg17[%c0_32, %c0_33] : memref<1x384xf32, #tpu.memory_space<vmem>>, vector<1x384xf32>
    %57 = vector.broadcast %56 : vector<1x384xf32> to vector<2x384xf32>
    %58 = arith.addf %55, %57 : vector<2x384xf32>
    %cst_34 = arith.constant 0.000000e+00 : f32
    %59 = vector.broadcast %cst_34 : f32 to vector<2x384xf32>
    %60 = arith.maximumf %58, %59 : vector<2x384xf32>
    %61 = arith.truncf %60 : vector<2x384xf32> to vector<2x384xbf16>
    %c0_35 = arith.constant 0 : index
    %c0_36 = arith.constant 0 : index
    %62 = vector.load %arg18[%c0_35, %c0_36] : memref<384x48xbf16, #tpu.memory_space<vmem>>, vector<384x48xbf16>
    %cst_37 = arith.constant dense<0.000000e+00> : vector<2x48xf32>
    %63 = tpu.matmul %61, %62, %cst_37 {dimension_numbers = #tpu.dot_dimension_numbers<[1], [0], [0], [1], [0, 0, 1, 1], [], []>} : vector<2x384xbf16>, vector<384x48xbf16>, vector<2x48xf32> -> vector<2x48xf32>
    %c0_38 = arith.constant 0 : index
    %c0_39 = arith.constant 0 : index
    %64 = vector.load %arg19[%c0_38, %c0_39] : memref<1x48xf32, #tpu.memory_space<vmem>>, vector<1x48xf32>
    %65 = vector.broadcast %64 : vector<1x48xf32> to vector<2x48xf32>
    %66 = arith.addf %63, %65 : vector<2x48xf32>
    %67 = arith.addf %66, %52 : vector<2x48xf32>
    %c0_40 = arith.constant 0 : index
    %c0_41 = arith.constant 0 : index
    %68 = vector.load %arg3[%c0_40, %c0_41] : memref<2x6xf32, #tpu.memory_space<vmem>>, vector<2x6xf32>
    %c0_42 = arith.constant 0 : index
    %c0_43 = arith.constant 0 : index
    %69 = vector.load %arg5[%c0_42, %c0_43] : memref<2x32xf32, #tpu.memory_space<vmem>>, vector<2x32xf32>
    %70 = tpu.concatenate %68, %69, %67, %51 in 1 : vector<2x6xf32>, vector<2x32xf32>, vector<2x48xf32>, vector<2x96xf32> -> vector<2x182xf32>
    %71 = arith.truncf %70 : vector<2x182xf32> to vector<2x182xbf16>
    %c0_44 = arith.constant 0 : index
    %c0_45 = arith.constant 0 : index
    %72 = vector.load %arg20[%c0_44, %c0_45] : memref<182x32xbf16, #tpu.memory_space<vmem>>, vector<182x32xbf16>
    %cst_46 = arith.constant dense<0.000000e+00> : vector<2x32xf32>
    %73 = tpu.matmul %71, %72, %cst_46 {dimension_numbers = #tpu.dot_dimension_numbers<[1], [0], [0], [1], [0, 0, 1, 1], [], []>} : vector<2x182xbf16>, vector<182x32xbf16>, vector<2x32xf32> -> vector<2x32xf32>
    %c0_47 = arith.constant 0 : index
    %c0_48 = arith.constant 0 : index
    %74 = vector.load %arg21[%c0_47, %c0_48] : memref<1x32xf32, #tpu.memory_space<vmem>>, vector<1x32xf32>
    %75 = vector.broadcast %74 : vector<1x32xf32> to vector<2x32xf32>
    %76 = arith.addf %73, %75 : vector<2x32xf32>
    %cst_49 = arith.constant 0.000000e+00 : f32
    %77 = vector.broadcast %cst_49 : f32 to vector<2x32xf32>
    %78 = arith.maximumf %76, %77 : vector<2x32xf32>
    %79 = arith.truncf %78 : vector<2x32xf32> to vector<2x32xbf16>
    %c0_50 = arith.constant 0 : index
    %c0_51 = arith.constant 0 : index
    %80 = vector.load %arg22[%c0_50, %c0_51] : memref<32x32xbf16, #tpu.memory_space<vmem>>, vector<32x32xbf16>
    %cst_52 = arith.constant dense<0.000000e+00> : vector<2x32xf32>
    %81 = tpu.matmul %79, %80, %cst_52 {dimension_numbers = #tpu.dot_dimension_numbers<[1], [0], [0], [1], [0, 0, 1, 1], [], []>} : vector<2x32xbf16>, vector<32x32xbf16>, vector<2x32xf32> -> vector<2x32xf32>
    %c0_53 = arith.constant 0 : index
    %c0_54 = arith.constant 0 : index
    %82 = vector.load %arg23[%c0_53, %c0_54] : memref<1x32xf32, #tpu.memory_space<vmem>>, vector<1x32xf32>
    %83 = vector.broadcast %82 : vector<1x32xf32> to vector<2x32xf32>
    %84 = arith.addf %81, %83 : vector<2x32xf32>
    %c0_55 = arith.constant 0 : index
    %c0_56 = arith.constant 0 : index
    %85 = vector.load %arg4[%c0_55, %c0_56] : memref<2x32xf32, #tpu.memory_space<vmem>>, vector<2x32xf32>
    %cst_57 = arith.constant 5.000000e-01 : f32
    %86 = vector.broadcast %cst_57 : f32 to vector<2x32xf32>
    %87 = arith.mulf %86, %84 : vector<2x32xf32>
    %88 = math.exp %87 : vector<2x32xf32>
    %89 = arith.mulf %85, %88 : vector<2x32xf32>
    %90 = arith.addf %84, %89 : vector<2x32xf32>
    %c0_58 = arith.constant 0 : index
    %c0_59 = arith.constant 0 : index
    %91 = vector.load %arg6[%c0_58, %c0_59] : memref<2x32xf32, #tpu.memory_space<vmem>>, vector<2x32xf32>
    %92 = arith.addf %90, %91 : vector<2x32xf32>
    %c0_60 = arith.constant 0 : index
    %c0_61 = arith.constant 0 : index
    %93 = vector.load %arg3[%c0_60, %c0_61] : memref<2x6xf32, #tpu.memory_space<vmem>>, vector<2x6xf32>
    %94 = tpu.concatenate %93, %92, %51 in 1 : vector<2x6xf32>, vector<2x32xf32>, vector<2x96xf32> -> vector<2x134xf32>
    %95 = arith.truncf %94 : vector<2x134xf32> to vector<2x134xbf16>
    %c0_62 = arith.constant 0 : index
    %c0_63 = arith.constant 0 : index
    %96 = vector.load %arg24[%c0_62, %c0_63] : memref<134x32xbf16, #tpu.memory_space<vmem>>, vector<134x32xbf16>
    %cst_64 = arith.constant dense<0.000000e+00> : vector<2x32xf32>
    %97 = tpu.matmul %95, %96, %cst_64 {dimension_numbers = #tpu.dot_dimension_numbers<[1], [0], [0], [1], [0, 0, 1, 1], [], []>} : vector<2x134xbf16>, vector<134x32xbf16>, vector<2x32xf32> -> vector<2x32xf32>
    %c0_65 = arith.constant 0 : index
    %c0_66 = arith.constant 0 : index
    %98 = vector.load %arg25[%c0_65, %c0_66] : memref<1x32xf32, #tpu.memory_space<vmem>>, vector<1x32xf32>
    %99 = vector.broadcast %98 : vector<1x32xf32> to vector<2x32xf32>
    %100 = arith.addf %97, %99 : vector<2x32xf32>
    %cst_67 = arith.constant 0.000000e+00 : f32
    %101 = vector.broadcast %cst_67 : f32 to vector<2x32xf32>
    %102 = arith.maximumf %100, %101 : vector<2x32xf32>
    %103 = arith.truncf %102 : vector<2x32xf32> to vector<2x32xbf16>
    %c0_68 = arith.constant 0 : index
    %c0_69 = arith.constant 0 : index
    %104 = vector.load %arg26[%c0_68, %c0_69] : memref<32x48xbf16, #tpu.memory_space<vmem>>, vector<32x48xbf16>
    %cst_70 = arith.constant dense<0.000000e+00> : vector<2x48xf32>
    %105 = tpu.matmul %103, %104, %cst_70 {dimension_numbers = #tpu.dot_dimension_numbers<[1], [0], [0], [1], [0, 0, 1, 1], [], []>} : vector<2x32xbf16>, vector<32x48xbf16>, vector<2x48xf32> -> vector<2x48xf32>
    %c0_71 = arith.constant 0 : index
    %c0_72 = arith.constant 0 : index
    %106 = vector.load %arg27[%c0_71, %c0_72] : memref<1x48xf32, #tpu.memory_space<vmem>>, vector<1x48xf32>
    %107 = vector.broadcast %106 : vector<1x48xf32> to vector<2x48xf32>
    %108 = arith.addf %105, %107 : vector<2x48xf32>
    %109 = arith.negf %108 : vector<2x48xf32>
    %110 = math.exp %109 : vector<2x48xf32>
    %cst_73 = arith.constant 1.000000e+00 : f32
    %111 = vector.broadcast %cst_73 : f32 to vector<2x48xf32>
    %112 = arith.addf %111, %110 : vector<2x48xf32>
    %113 = arith.divf %111, %112 : vector<2x48xf32>
    %114 = arith.truncf %113 : vector<2x48xf32> to vector<2x48xbf16>
    %c0_74 = arith.constant 0 : index
    %c0_75 = arith.constant 0 : index
    %115 = vector.load %arg28[%c0_74, %c0_75] : memref<48x384xbf16, #tpu.memory_space<vmem>>, vector<48x384xbf16>
    %cst_76 = arith.constant dense<0.000000e+00> : vector<2x384xf32>
    %116 = tpu.matmul %114, %115, %cst_76 {dimension_numbers = #tpu.dot_dimension_numbers<[1], [0], [0], [1], [0, 0, 1, 1], [], []>} : vector<2x48xbf16>, vector<48x384xbf16>, vector<2x384xf32> -> vector<2x384xf32>
    %c0_77 = arith.constant 0 : index
    %c0_78 = arith.constant 0 : index
    %117 = vector.load %arg29[%c0_77, %c0_78] : memref<1x384xf32, #tpu.memory_space<vmem>>, vector<1x384xf32>
    %118 = vector.broadcast %117 : vector<1x384xf32> to vector<2x384xf32>
    %119 = arith.addf %116, %118 : vector<2x384xf32>
    %cst_79 = arith.constant 0.000000e+00 : f32
    %120 = vector.broadcast %cst_79 : f32 to vector<2x384xf32>
    %121 = arith.maximumf %119, %120 : vector<2x384xf32>
    %122 = arith.truncf %121 : vector<2x384xf32> to vector<2x384xbf16>
    %c0_80 = arith.constant 0 : index
    %c0_81 = arith.constant 0 : index
    %123 = vector.load %arg30[%c0_80, %c0_81] : memref<384x48xbf16, #tpu.memory_space<vmem>>, vector<384x48xbf16>
    %cst_82 = arith.constant dense<0.000000e+00> : vector<2x48xf32>
    %124 = tpu.matmul %122, %123, %cst_82 {dimension_numbers = #tpu.dot_dimension_numbers<[1], [0], [0], [1], [0, 0, 1, 1], [], []>} : vector<2x384xbf16>, vector<384x48xbf16>, vector<2x48xf32> -> vector<2x48xf32>
    %125 = arith.truncf %113 : vector<2x48xf32> to vector<2x48xbf16>
    %c0_83 = arith.constant 0 : index
    %c0_84 = arith.constant 0 : index
    %126 = vector.load %arg31[%c0_83, %c0_84] : memref<48x48xbf16, #tpu.memory_space<vmem>>, vector<48x48xbf16>
    %cst_85 = arith.constant dense<0.000000e+00> : vector<2x48xf32>
    %127 = tpu.matmul %125, %126, %cst_85 {dimension_numbers = #tpu.dot_dimension_numbers<[1], [0], [0], [1], [0, 0, 1, 1], [], []>} : vector<2x48xbf16>, vector<48x48xbf16>, vector<2x48xf32> -> vector<2x48xf32>
    %128 = arith.addf %124, %127 : vector<2x48xf32>
    %c0_86 = arith.constant 0 : index
    %c0_87 = arith.constant 0 : index
    %129 = vector.load %arg32[%c0_86, %c0_87] : memref<1x48xf32, #tpu.memory_space<vmem>>, vector<1x48xf32>
    %130 = vector.broadcast %129 : vector<1x48xf32> to vector<2x48xf32>
    %131 = arith.addf %128, %130 : vector<2x48xf32>
    %cst_88 = arith.constant 0.000000e+00 : f32
    %132 = vector.broadcast %cst_88 : f32 to vector<2x16xf32>
    %133 = tpu.concatenate %131, %84, %90, %132 in 1 : vector<2x48xf32>, vector<2x32xf32>, vector<2x32xf32>, vector<2x16xf32> -> vector<2x128xf32>
    %c0_89 = arith.constant 0 : index
    %c0_90 = arith.constant 0 : index
    %134 = vector.load %arg34[%c0_89, %c0_90] : memref<2x128xf32, #tpu.memory_space<vmem>>, vector<2x128xf32>
    tpu.vector_store %arg34[%c0_89, %c0_90], %133 {strides = array<i32>} : memref<2x128xf32, #tpu.memory_space<vmem>>, vector<2x128xf32>,
    return
  }
  func.func @transform_0(%arg0: i32) -> (i32, i32) {
    %c0_i32 = arith.constant 0 : i32
    %c0_i32_0 = arith.constant 0 : i32
    %c0_i32_1 = arith.constant 0 : i32
    return %c0_i32, %c0_i32_0 : i32, i32
  }
  func.func @transform_1(%arg0: i32) -> (i32, i32) {
    %c0_i32 = arith.constant 0 : i32
    %c0_i32_0 = arith.constant 0 : i32
    %c0_i32_1 = arith.constant 0 : i32
    return %c0_i32, %c0_i32_0 : i32, i32
  }
  func.func @transform_2(%arg0: i32) -> (i32, i32) {
    %c0_i32 = arith.constant 0 : i32
    %c0_i32_0 = arith.constant 0 : i32
    %c0_i32_1 = arith.constant 0 : i32
    return %c0_i32, %c0_i32_0 : i32, i32
  }
  func.func @transform_3(%arg0: i32) -> (i32, i32) {
    %c0_i32 = arith.constant 0 : i32
    %c0_i32_0 = arith.constant 0 : i32
    %c0_i32_1 = arith.constant 0 : i32
    return %c0_i32, %c0_i32_0 : i32, i32
  }
  func.func @transform_4(%arg0: i32) -> (i32, i32) {
    %c0_i32 = arith.constant 0 : i32
    %c0_i32_0 = arith.constant 0 : i32
    %c0_i32_1 = arith.constant 0 : i32
    return %c0_i32, %c0_i32_0 : i32, i32
  }
  func.func @transform_5(%arg0: i32) -> (i32, i32) {
    %c0_i32 = arith.constant 0 : i32
    %c0_i32_0 = arith.constant 0 : i32
    %c0_i32_1 = arith.constant 0 : i32
    return %c0_i32, %c0_i32_0 : i32, i32
  }
  func.func @transform_6(%arg0: i32) -> (i32, i32) {
    %c0_i32 = arith.constant 0 : i32
    %c0_i32_0 = arith.constant 0 : i32
    %c0_i32_1 = arith.constant 0 : i32
    return %c0_i32, %c0_i32_0 : i32, i32
  }
  func.func @transform_7(%arg0: i32) -> (i32, i32) {
    %c0_i32 = arith.constant 0 : i32
    %c0_i32_0 = arith.constant 0 : i32
    %c0_i32_1 = arith.constant 0 : i32
    return %c0_i32, %c0_i32_0 : i32, i32
  }
  func.func @transform_8(%arg0: i32) -> (i32, i32) {
    %c0_i32 = arith.constant 0 : i32
    %c0_i32_0 = arith.constant 0 : i32
    %c0_i32_1 = arith.constant 0 : i32
    return %c0_i32, %c0_i32_0 : i32, i32
  }
  func.func @transform_9(%arg0: i32) -> (i32, i32) {
    %c0_i32 = arith.constant 0 : i32
    %c0_i32_0 = arith.constant 0 : i32
    %c0_i32_1 = arith.constant 0 : i32
    return %c0_i32, %c0_i32_0 : i32, i32
  }
  func.func @transform_10(%arg0: i32) -> (i32, i32) {
    %c0_i32 = arith.constant 0 : i32
    %c0_i32_0 = arith.constant 0 : i32
    %c0_i32_1 = arith.constant 0 : i32
    return %c0_i32, %c0_i32_0 : i32, i32
  }
  func.func @transform_11(%arg0: i32) -> (i32, i32) {
    %c0_i32 = arith.constant 0 : i32
    %c0_i32_0 = arith.constant 0 : i32
    %c0_i32_1 = arith.constant 0 : i32
    return %c0_i32, %c0_i32_0 : i32, i32
  }
  func.func @transform_12(%arg0: i32) -> (i32, i32) {
    %c0_i32 = arith.constant 0 : i32
    %c0_i32_0 = arith.constant 0 : i32
    %c0_i32_1 = arith.constant 0 : i32
    return %c0_i32, %c0_i32_0 : i32, i32
  }
  func.func @transform_13(%arg0: i32) -> (i32, i32) {
    %c0_i32 = arith.constant 0 : i32
    %c0_i32_0 = arith.constant 0 : i32
    %c0_i32_1 = arith.constant 0 : i32
    return %c0_i32, %c0_i32_0 : i32, i32
  }
  func.func @transform_14(%arg0: i32) -> (i32, i32) {
    %c0_i32 = arith.constant 0 : i32
    %c0_i32_0 = arith.constant 0 : i32
    %c0_i32_1 = arith.constant 0 : i32
    return %c0_i32, %c0_i32_0 : i32, i32
  }
  func.func @transform_15(%arg0: i32) -> (i32, i32) {
    %c0_i32 = arith.constant 0 : i32
    %c0_i32_0 = arith.constant 0 : i32
    %c0_i32_1 = arith.constant 0 : i32
    return %c0_i32, %c0_i32_0 : i32, i32
  }
  func.func @transform_16(%arg0: i32) -> (i32, i32) {
    %c0_i32 = arith.constant 0 : i32
    %c0_i32_0 = arith.constant 0 : i32
    %c0_i32_1 = arith.constant 0 : i32
    return %c0_i32, %c0_i32_0 : i32, i32
  }
  func.func @transform_17(%arg0: i32) -> (i32, i32) {
    %c0_i32 = arith.constant 0 : i32
    %c0_i32_0 = arith.constant 0 : i32
    %c0_i32_1 = arith.constant 0 : i32
    return %c0_i32, %c0_i32_0 : i32, i32
  }
  func.func @transform_18(%arg0: i32) -> (i32, i32) {
    %c0_i32 = arith.constant 0 : i32
    %c0_i32_0 = arith.constant 0 : i32
    %c0_i32_1 = arith.constant 0 : i32
    return %c0_i32, %c0_i32_0 : i32, i32
  }
  func.func @transform_19(%arg0: i32) -> (i32, i32) {
    %c0_i32 = arith.constant 0 : i32
    %c0_i32_0 = arith.constant 0 : i32
    %c0_i32_1 = arith.constant 0 : i32
    return %c0_i32, %c0_i32_0 : i32, i32
  }
  func.func @transform_20(%arg0: i32) -> (i32, i32) {
    %c0_i32 = arith.constant 0 : i32
    %c0_i32_0 = arith.constant 0 : i32
    %c0_i32_1 = arith.constant 0 : i32
    return %c0_i32, %c0_i32_0 : i32, i32
  }
  func.func @transform_21(%arg0: i32) -> (i32, i32) {
    %c0_i32 = arith.constant 0 : i32
    %c0_i32_0 = arith.constant 0 : i32
    %c0_i32_1 = arith.constant 0 : i32
    return %c0_i32, %c0_i32_0 : i32, i32
  }
  func.func @transform_22(%arg0: i32) -> (i32, i32) {
    %c0_i32 = arith.constant 0 : i32
    %c0_i32_0 = arith.constant 0 : i32
    %c0_i32_1 = arith.constant 0 : i32
    return %c0_i32, %c0_i32_0 : i32, i32
  }
  func.func @transform_23(%arg0: i32) -> (i32, i32) {
    %c0_i32 = arith.constant 0 : i32
    %c0_i32_0 = arith.constant 0 : i32
    %c0_i32_1 = arith.constant 0 : i32
    return %c0_i32, %c0_i32_0 : i32, i32
  }
  func.func @transform_24(%arg0: i32) -> (i32, i32) {
    %c0_i32 = arith.constant 0 : i32
    %c0_i32_0 = arith.constant 0 : i32
    %c0_i32_1 = arith.constant 0 : i32
    return %c0_i32, %c0_i32_0 : i32, i32
  }
  func.func @transform_25(%arg0: i32) -> (i32, i32) {
    %c0_i32 = arith.constant 0 : i32
    %c0_i32_0 = arith.constant 0 : i32
    %c0_i32_1 = arith.constant 0 : i32
    return %c0_i32, %c0_i32_0 : i32, i32
  }
  func.func @transform_26(%arg0: i32) -> (i32, i32) {
    %c0_i32 = arith.constant 0 : i32
    %c0_i32_0 = arith.constant 0 : i32
    %c0_i32_1 = arith.constant 0 : i32
    return %c0_i32, %c0_i32_0 : i32, i32
  }
  func.func @transform_27(%arg0: i32) -> (i32, i32) {
    %c0_i32 = arith.constant 0 : i32
    %c0_i32_0 = arith.constant 0 : i32
    %c0_i32_1 = arith.constant 0 : i32
    return %c0_i32, %c0_i32_0 : i32, i32
  }
  func.func @transform_28(%arg0: i32) -> (i32, i32) {
    %c0_i32 = arith.constant 0 : i32
    %c0_i32_0 = arith.constant 0 : i32
    %c0_i32_1 = arith.constant 0 : i32
    return %c0_i32, %c0_i32_0 : i32, i32
  }
  func.func @transform_29(%arg0: i32) -> (i32, i32) {
    %c0_i32 = arith.constant 0 : i32
    %c0_i32_0 = arith.constant 0 : i32
    %c0_i32_1 = arith.constant 0 : i32
    return %c0_i32, %c0_i32_0 : i32, i32
  }
  func.func @transform_30(%arg0: i32) -> (i32, i32) {
    %c0_i32 = arith.constant 0 : i32
    %c0_i32_0 = arith.constant 0 : i32
    %c0_i32_1 = arith.constant 0 : i32
    return %c0_i32, %c0_i32_0 : i32, i32
  }
  func.func @transform_31(%arg0: i32) -> (i32, i32) {
    %c0_i32 = arith.constant 0 : i32
    %c0_i32_0 = arith.constant 0 : i32
    %c0_i32_1 = arith.constant 0 : i32
    return %c0_i32, %c0_i32_0 : i32, i32
  }
  func.func @transform_32(%arg0: i32) -> (i32, i32) {
    %c0_i32 = arith.constant 0 : i32
    %c0_i32_0 = arith.constant 0 : i32
    %c0_i32_1 = arith.constant 0 : i32
    return %c0_i32, %c0_i32_0 : i32, i32
  }
  func.func @transform_33(%arg0: i32) -> (i32, i32) {
    %c0_i32 = arith.constant 0 : i32
    %c0_i32_0 = arith.constant 0 : i32
    %c0_i32_1 = arith.constant 0 : i32
    return %c0_i32, %c0_i32_0 : i32, i32
  }
}

</mosaic_0001>

<llo_original>
// kernel: squeeze.3
$region0: #{squeeze.3}
  %s0 = inlined_call_operand.hbm [shape: f32[1,2,8,16,16], index: 0, kind: input, shape index: {}]
  %s1 = inlined_call_operand.vmem [shape: f32[16,256], index: 1, kind: output, shape index: {}]
  $region1: #{squeeze.3} parent=0
    #allocation0 [shape = 'u8[131072]{0}', space=vmem, size = 0x20000, scoped, tag = 'operand span for operand 0']
    #allocation1 [shape = 's32[1]{0}', space=sflag, size = 0x4, scoped, tag = 'scoped memory for squeeze.3']
    %2 = vsyncpa [#allocation1], 0
    %s4 = ssub.s32 4096, 4096
    %5 = vsyncadd [#allocation1], %s4
    %s7 = sshll.u32 [#allocation0], 4
    %s8 = int_to_ptr.vmem [resolvable:$true] %s7
    %10 = dma.hbm_to_vmem [thread:$0]  %s0, 4096, %s8, [#allocation1]
    %11 = dma.done [#allocation1], 4096
    %v12 = vld [vmem:[#allocation0] ss:$8 sm:$0xf]
    %v13 = vld [vmem:[#allocation0] ss:$8 sm:$0xf0]
    %vm14 = vcmask 1047556
    %v15 = vsel %vm14, %v13, %v12
    %vm16 = vcmask 130048
    %17 = vst.msk [vmem:[%s1] ss:$8 sm:$0x3] %vm16, %v15
    %s18 = scalar_lea.vmem %s1, 4294967281
    %19 = vst.msk [vmem:[%s18] ss:$8 sm:$0xc] %vm16, %v15
    %s20 = scalar_lea.vmem %s1, 4294967266
    %21 = vst.msk [vmem:[%s20] ss:$8 sm:$0x30] %vm16, %v15
    %s22 = scalar_lea.vmem %s1, 4294967251
    %23 = vst.msk [vmem:[%s22] ss:$8 sm:$0xc0] %vm16, %v15
    %s24 = scalar_lea.vmem [#allocation0], 64
    %v25 = vld [vmem:[%s24] ss:$8 sm:$0xf]
    %s26 = scalar_lea.vmem [#allocation0], 64
    %v27 = vld [vmem:[%s26] ss:$8 sm:$0xf0]
    %vm28 = vcmask 1047556
    %v29 = vsel %vm28, %v27, %v25
    %vm30 = vcmask 130048
    %s31 = scalar_lea.vmem %s1, 4
    %32 = vst.msk [vmem:[%s31] ss:$8 sm:$0x3] %vm30, %v29
    %s33 = scalar_lea.vmem %s1, 4294967285
    %34 = vst.msk [vmem:[%s33] ss:$8 sm:$0xc] %vm30, %v29
    %s35 = scalar_lea.vmem %s1, 4294967270
    %36 = vst.msk [vmem:[%s35] ss:$8 sm:$0x30] %vm30, %v29
    %s37 = scalar_lea.vmem %s1, 4294967255
    %38 = vst.msk [vmem:[%s37] ss:$8 sm:$0xc0] %vm30, %v29
    %s39 = scalar_lea.vmem [#allocation0], 128
    %v40 = vld [vmem:[%s39] ss:$8 sm:$0xf]
    %s41 = scalar_lea.vmem [#allocation0], 128
    %v42 = vld [vmem:[%s41] ss:$8 sm:$0xf0]
    %vm43 = vcmask 1047556
    %v44 = vsel %vm43, %v42, %v40
    %vm45 = vcmask 130048
    %s46 = scalar_lea.vmem %s1, 16
    %47 = vst.msk [vmem:[%s46] ss:$8 sm:$0x3] %vm45, %v44
    %s48 = scalar_lea.vmem %s1, 1
    %49 = vst.msk [vmem:[%s48] ss:$8 sm:$0xc] %vm45, %v44
    %s50 = scalar_lea.vmem %s1, 4294967282
    %51 = vst.msk [vmem:[%s50] ss:$8 sm:$0x30] %vm45, %v44
    %s52 = scalar_lea.vmem %s1, 4294967267
    %53 = vst.msk [vmem:[%s52] ss:$8 sm:$0xc0] %vm45, %v44
    %s54 = scalar_lea.vmem [#allocation0], 192
    %v55 = vld [vmem:[%s54] ss:$8 sm:$0xf]
    %s56 = scalar_lea.vmem [#allocation0], 192
    %v57 = vld [vmem:[%s56] ss:$8 sm:$0xf0]
    %vm58 = vcmask 1047556
    %v59 = vsel %vm58, %v57, %v55
    %vm60 = vcmask 130048
    %s61 = scalar_lea.vmem %s1, 20
    %62 = vst.msk [vmem:[%s61] ss:$8 sm:$0x3] %vm60, %v59
    %s63 = scalar_lea.vmem %s1, 5
    %64 = vst.msk [vmem:[%s63] ss:$8 sm:$0xc] %vm60, %v59
    %s65 = scalar_lea.vmem %s1, 4294967286
    %66 = vst.msk [vmem:[%s65] ss:$8 sm:$0x30] %vm60, %v59
    %s67 = scalar_lea.vmem %s1, 4294967271
    %68 = vst.msk [vmem:[%s67] ss:$8 sm:$0xc0] %vm60, %v59
    %s69 = scalar_lea.vmem [#allocation0], 7
    %s70 = smov 3
    %v71 = vld [vmem:[%s69] ss:$16 sm:%s70]
    %s72 = scalar_lea.vmem [#allocation0], 7
    %s73 = smov 12
    %v74 = vld [vmem:[%s72] ss:$16 sm:%s73]
    %vm75 = vcmask 1043458
    %v76 = vsel %vm75, %v74, %v71
    %s77 = scalar_lea.vmem [#allocation0], 7
    %s78 = smov 48
    %v79 = vld [vmem:[%s77] ss:$16 sm:%s78]
    %vm80 = vcmask 1045508
    %v81 = vsel %vm80, %v79, %v76
    %s82 = scalar_lea.vmem [#allocation0], 7
    %s83 = smov 192
    %v84 = vld [vmem:[%s82] ss:$16 sm:%s83]
    %vm85 = vcmask 1047558
    %v86 = vsel %vm85, %v84, %v81
    %87 = vrot.lane.b32.xlu0 %v86, 112
    %v88 = vpop.permute.xlu0 %87
    %vm89 = vcmask 1048448
    %90 = vst.msk [vmem:[%s1] sm:$0xff] %vm89, %v88
    %s91 = scalar_lea.vmem [#allocation0], 15
    %s92 = smov 3
    %v93 = vld [vmem:[%s91] ss:$16 sm:%s92]
    %s94 = scalar_lea.vmem [#allocation0], 15
    %s95 = smov 12
    %v96 = vld [vmem:[%s94] ss:$16 sm:%s95]
    %vm97 = vcmask 1043458
    %v98 = vsel %vm97, %v96, %v93
    %s99 = scalar_lea.vmem [#allocation0], 15
    %s100 = smov 48
    %v101 = vld [vmem:[%s99] ss:$16 sm:%s100]
    %vm102 = vcmask 1045508
    %v103 = vsel %vm102, %v101, %v98
    %s104 = scalar_lea.vmem [#allocation0], 15
    %s105 = smov 192
    %v106 = vld [vmem:[%s104] ss:$16 sm:%s105]
    %vm107 = vcmask 1047558
    %v108 = vsel %vm107, %v106, %v103
    %109 = vrot.lane.b32.xlu0 %v108, 112
    %v110 = vpop.permute.xlu0 %109
    %vm111 = vcmask 1048448
    %s112 = scalar_lea.vmem %s1, 8
    %113 = vst.msk [vmem:[%s112] sm:$0xff] %vm111, %v110
    %s114 = scalar_lea.vmem [#allocation0], 135
    %s115 = smov 3
    %v116 = vld [vmem:[%s114] ss:$16 sm:%s115]
    %s117 = scalar_lea.vmem [#allocation0], 135
    %s118 = smov 12
    %v119 = vld [vmem:[%s117] ss:$16 sm:%s118]
    %vm120 = vcmask 1043458
    %v121 = vsel %vm120, %v119, %v116
    %s122 = scalar_lea.vmem [#allocation0], 135
    %s123 = smov 48
    %v124 = vld [vmem:[%s122] ss:$16 sm:%s123]
    %vm125 = vcmask 1045508
    %v126 = vsel %vm125, %v124, %v121
    %s127 = scalar_lea.vmem [#allocation0], 135
    %s128 = smov 192
    %v129 = vld [vmem:[%s127] ss:$16 sm:%s128]
    %vm130 = vcmask 1047558
    %v131 = vsel %vm130, %v129, %v126
    %132 = vrot.lane.b32.xlu0 %v131, 112
    %v133 = vpop.permute.xlu0 %132
    %vm134 = vcmask 1048448
    %s135 = scalar_lea.vmem %s1, 16
    %136 = vst.msk [vmem:[%s135] sm:$0xff] %vm134, %v133
    %s137 = scalar_lea.vmem [#allocation0], 143
    %s138 = smov 3
    %v139 = vld [vmem:[%s137] ss:$16 sm:%s138]
    %s140 = scalar_lea.vmem [#allocation0], 143
    %s141 = smov 12
    %v142 = vld [vmem:[%s140] ss:$16 sm:%s141]
    %vm143 = vcmask 1043458
    %v144 = vsel %vm143, %v142, %v139
    %s145 = scalar_lea.vmem [#allocation0], 143
    %s146 = smov 48
    %v147 = vld [vmem:[%s145] ss:$16 sm:%s146]
    %vm148 = vcmask 1045508
    %v149 = vsel %vm148, %v147, %v144
    %s150 = scalar_lea.vmem [#allocation0], 143
    %s151 = smov 192
    %v152 = vld [vmem:[%s150] ss:$16 sm:%s151]
    %vm153 = vcmask 1047558
    %v154 = vsel %vm153, %v152, %v149
    %155 = vrot.lane.b32.xlu0 %v154, 112
    %v156 = vpop.permute.xlu0 %155
    %vm157 = vcmask 1048448
    %s158 = scalar_lea.vmem %s1, 24
    %159 = vst.msk [vmem:[%s158] sm:$0xff] %vm157, %v156
    %s160 = scalar_lea.vmem [#allocation0], 6
    %s161 = smov 3
    %v162 = vld [vmem:[%s160] ss:$16 sm:%s161]
    %s163 = scalar_lea.vmem [#allocation0], 6
    %s164 = smov 12
    %v165 = vld [vmem:[%s163] ss:$16 sm:%s164]
    %vm166 = vcmask 1043458
    %v167 = vsel %vm166, %v165, %v162
    %s168 = scalar_lea.vmem [#allocation0], 6
    %s169 = smov 48
    %v170 = vld [vmem:[%s168] ss:$16 sm:%s169]
    %vm171 = vcmask 1045508
    %v172 = vsel %vm171, %v170, %v167
    %s173 = scalar_lea.vmem [#allocation0], 6
    %s174 = smov 192
    %v175 = vld [vmem:[%s173] ss:$16 sm:%s174]
    %vm176 = vcmask 1047558
    %v177 = vsel %vm176, %v175, %v172
    %178 = vrot.lane.b32.xlu0 %v177, 96
    %v179 = vpop.permute.xlu0 %178
    %vm180 = vcmask 917248
    %181 = vst.msk [vmem:[%s1] sm:$0xff] %vm180, %v179
    %s182 = scalar_lea.vmem [#allocation0], 14
    %s183 = smov 3
    %v184 = vld [vmem:[%s182] ss:$16 sm:%s183]
    %s185 = scalar_lea.vmem [#allocation0], 14
    %s186 = smov 12
    %v187 = vld [vmem:[%s185] ss:$16 sm:%s186]
    %vm188 = vcmask 1043458
    %v189 = vsel %vm188, %v187, %v184
    %s190 = scalar_lea.vmem [#allocation0], 14
    %s191 = smov 48
    %v192 = vld [vmem:[%s190] ss:$16 sm:%s191]
    %vm193 = vcmask 1045508
    %v194 = vsel %vm193, %v192, %v189
    %s195 = scalar_lea.vmem [#allocation0], 14
    %s196 = smov 192
    %v197 = vld [vmem:[%s195] ss:$16 sm:%s196]
    %vm198 = vcmask 1047558
    %v199 = vsel %vm198, %v197, %v194
    %200 = vrot.lane.b32.xlu0 %v199, 96
    %v201 = vpop.permute.xlu0 %200
    %vm202 = vcmask 917248
    %s203 = scalar_lea.vmem %s1, 8
    %204 = vst.msk [vmem:[%s203] sm:$0xff] %vm202, %v201
    %s205 = scalar_lea.vmem [#allocation0], 134
    %s206 = smov 3
    %v207 = vld [vmem:[%s205] ss:$16 sm:%s206]
    %s208 = scalar_lea.vmem [#allocation0], 134
    %s209 = smov 12
    %v210 = vld [vmem:[%s208] ss:$16 sm:%s209]
    %vm211 = vcmask 1043458
    %v212 = vsel %vm211, %v210, %v207
    %s213 = scalar_lea.vmem [#allocation0], 134
    %s214 = smov 48
    %v215 = vld [vmem:[%s213] ss:$16 sm:%s214]
    %vm216 = vcmask 1045508
    %v217 = vsel %vm216, %v215, %v212
    %s218 = scalar_lea.vmem [#allocation0], 134
    %s219 = smov 192
    %v220 = vld [vmem:[%s218] ss:$16 sm:%s219]
    %vm221 = vcmask 1047558
    %v222 = vsel %vm221, %v220, %v217
    %223 = vrot.lane.b32.xlu0 %v222, 96
    %v224 = vpop.permute.xlu0 %223
    %vm225 = vcmask 917248
    %s226 = scalar_lea.vmem %s1, 16
    %227 = vst.msk [vmem:[%s226] sm:$0xff] %vm225, %v224
    %s228 = scalar_lea.vmem [#allocation0], 142
    %s229 = smov 3
    %v230 = vld [vmem:[%s228] ss:$16 sm:%s229]
    %s231 = scalar_lea.vmem [#allocation0], 142
    %s232 = smov 12
    %v233 = vld [vmem:[%s231] ss:$16 sm:%s232]
    %vm234 = vcmask 1043458
    %v235 = vsel %vm234, %v233, %v230
    %s236 = scalar_lea.vmem [#allocation0], 142
    %s237 = smov 48
    %v238 = vld [vmem:[%s236] ss:$16 sm:%s237]
    %vm239 = vcmask 1045508
    %v240 = vsel %vm239, %v238, %v235
    %s241 = scalar_lea.vmem [#allocation0], 142
    %s242 = smov 192
    %v243 = vld [vmem:[%s241] ss:$16 sm:%s242]
    %vm244 = vcmask 1047558
    %v245 = vsel %vm244, %v243, %v240
    %246 = vrot.lane.b32.xlu0 %v245, 96
    %v247 = vpop.permute.xlu0 %246
    %vm248 = vcmask 917248
    %s249 = scalar_lea.vmem %s1, 24
    %250 = vst.msk [vmem:[%s249] sm:$0xff] %vm248, %v247
    %s251 = scalar_lea.vmem [#allocation0], 5
    %s252 = smov 3
    %v253 = vld [vmem:[%s251] ss:$16 sm:%s252]
    %s254 = scalar_lea.vmem [#allocation0], 5
    %s255 = smov 12
    %v256 = vld [vmem:[%s254] ss:$16 sm:%s255]
    %vm257 = vcmask 1043458
    %v258 = vsel %vm257, %v256, %v253
    %s259 = scalar_lea.vmem [#allocation0], 5
    %s260 = smov 48
    %v261 = vld [vmem:[%s259] ss:$16 sm:%s260]
    %vm262 = vcmask 1045508
    %v263 = vsel %vm262, %v261, %v258
    %s264 = scalar_lea.vmem [#allocation0], 5
    %s265 = smov 192
    %v266 = vld [vmem:[%s264] ss:$16 sm:%s265]
    %vm267 = vcmask 1047558
    %v268 = vsel %vm267, %v266, %v263
    %269 = vrot.lane.b32.xlu0 %v268, 80
    %v270 = vpop.permute.xlu0 %269
    %vm271 = vcmask 786048
    %272 = vst.msk [vmem:[%s1] sm:$0xff] %vm271, %v270
    %s273 = scalar_lea.vmem [#allocation0], 13
    %s274 = smov 3
    %v275 = vld [vmem:[%s273] ss:$16 sm:%s274]
    %s276 = scalar_lea.vmem [#allocation0], 13
    %s277 = smov 12
    %v278 = vld [vmem:[%s276] ss:$16 sm:%s277]
    %vm279 = vcmask 1043458
    %v280 = vsel %vm279, %v278, %v275
    %s281 = scalar_lea.vmem [#allocation0], 13
    %s282 = smov 48
    %v283 = vld [vmem:[%s281] ss:$16 sm:%s282]
    %vm284 = vcmask 1045508
    %v285 = vsel %vm284, %v283, %v280
    %s286 = scalar_lea.vmem [#allocation0], 13
    %s287 = smov 192
    %v288 = vld [vmem:[%s286] ss:$16 sm:%s287]
    %vm289 = vcmask 1047558
    %v290 = vsel %vm289, %v288, %v285
    %291 = vrot.lane.b32.xlu0 %v290, 80
    %v292 = vpop.permute.xlu0 %291
    %vm293 = vcmask 786048
    %s294 = scalar_lea.vmem %s1, 8
    %295 = vst.msk [vmem:[%s294] sm:$0xff] %vm293, %v292
    %s296 = scalar_lea.vmem [#allocation0], 133
    %s297 = smov 3
    %v298 = vld [vmem:[%s296] ss:$16 sm:%s297]
    %s299 = scalar_lea.vmem [#allocation0], 133
    %s300 = smov 12
    %v301 = vld [vmem:[%s299] ss:$16 sm:%s300]
    %vm302 = vcmask 1043458
    %v303 = vsel %vm302, %v301, %v298
    %s304 = scalar_lea.vmem [#allocation0], 133
    %s305 = smov 48
    %v306 = vld [vmem:[%s304] ss:$16 sm:%s305]
    %vm307 = vcmask 1045508
    %v308 = vsel %vm307, %v306, %v303
    %s309 = scalar_lea.vmem [#allocation0], 133
    %s310 = smov 192
    %v311 = vld [vmem:[%s309] ss:$16 sm:%s310]
    %vm312 = vcmask 1047558
    %v313 = vsel %vm312, %v311, %v308
    %314 = vrot.lane.b32.xlu0 %v313, 80
    %v315 = vpop.permute.xlu0 %314
    %vm316 = vcmask 786048
    %s317 = scalar_lea.vmem %s1, 16
    %318 = vst.msk [vmem:[%s317] sm:$0xff] %vm316, %v315
    %s319 = scalar_lea.vmem [#allocation0], 141
    %s320 = smov 3
    %v321 = vld [vmem:[%s319] ss:$16 sm:%s320]
    %s322 = scalar_lea.vmem [#allocation0], 141
    %s323 = smov 12
    %v324 = vld [vmem:[%s322] ss:$16 sm:%s323]
    %vm325 = vcmask 1043458
    %v326 = vsel %vm325, %v324, %v321
    %s327 = scalar_lea.vmem [#allocation0], 141
    %s328 = smov 48
    %v329 = vld [vmem:[%s327] ss:$16 sm:%s328]
    %vm330 = vcmask 1045508
    %v331 = vsel %vm330, %v329, %v326
    %s332 = scalar_lea.vmem [#allocation0], 141
    %s333 = smov 192
    %v334 = vld [vmem:[%s332] ss:$16 sm:%s333]
    %vm335 = vcmask 1047558
    %v336 = vsel %vm335, %v334, %v331
    %337 = vrot.lane.b32.xlu0 %v336, 80
    %v338 = vpop.permute.xlu0 %337
    %vm339 = vcmask 786048
    %s340 = scalar_lea.vmem %s1, 24
    %341 = vst.msk [vmem:[%s340] sm:$0xff] %vm339, %v338
    %s342 = scalar_lea.vmem [#allocation0], 4
    %s343 = smov 3
    %v344 = vld [vmem:[%s342] ss:$16 sm:%s343]
    %s345 = scalar_lea.vmem [#allocation0], 4
    %s346 = smov 12
    %v347 = vld [vmem:[%s345] ss:$16 sm:%s346]
    %vm348 = vcmask 1043458
    %v349 = vsel %vm348, %v347, %v344
    %s350 = scalar_lea.vmem [#allocation0], 4
    %s351 = smov 48
    %v352 = vld [vmem:[%s350] ss:$16 sm:%s351]
    %vm353 = vcmask 1045508
    %v354 = vsel %vm353, %v352, %v349
    %s355 = scalar_lea.vmem [#allocation0], 4
    %s356 = smov 192
    %v357 = vld [vmem:[%s355] ss:$16 sm:%s356]
    %vm358 = vcmask 1047558
    %v359 = vsel %vm358, %v357, %v354
    %360 = vrot.lane.b32.xlu0 %v359, 64
    %v361 = vpop.permute.xlu0 %360
    %vm362 = vcmask 654848
    %363 = vst.msk [vmem:[%s1] sm:$0xff] %vm362, %v361
    %s364 = scalar_lea.vmem [#allocation0], 12
    %s365 = smov 3
    %v366 = vld [vmem:[%s364] ss:$16 sm:%s365]
    %s367 = scalar_lea.vmem [#allocation0], 12
    %s368 = smov 12
    %v369 = vld [vmem:[%s367] ss:$16 sm:%s368]
    %vm370 = vcmask 1043458
    %v371 = vsel %vm370, %v369, %v366
    %s372 = scalar_lea.vmem [#allocation0], 12
    %s373 = smov 48
    %v374 = vld [vmem:[%s372] ss:$16 sm:%s373]
    %vm375 = vcmask 1045508
    %v376 = vsel %vm375, %v374, %v371
    %s377 = scalar_lea.vmem [#allocation0], 12
    %s378 = smov 192
    %v379 = vld [vmem:[%s377] ss:$16 sm:%s378]
    %vm380 = vcmask 1047558
    %v381 = vsel %vm380, %v379, %v376
    %382 = vrot.lane.b32.xlu0 %v381, 64
    %v383 = vpop.permute.xlu0 %382
    %vm384 = vcmask 654848
    %s385 = scalar_lea.vmem %s1, 8
    %386 = vst.msk [vmem:[%s385] sm:$0xff] %vm384, %v383
    %s387 = scalar_lea.vmem [#allocation0], 132
    %s388 = smov 3
    %v389 = vld [vmem:[%s387] ss:$16 sm:%s388]
    %s390 = scalar_lea.vmem [#allocation0], 132
    %s391 = smov 12
    %v392 = vld [vmem:[%s390] ss:$16 sm:%s391]
    %vm393 = vcmask 1043458
    %v394 = vsel %vm393, %v392, %v389
    %s395 = scalar_lea.vmem [#allocation0], 132
    %s396 = smov 48
    %v397 = vld [vmem:[%s395] ss:$16 sm:%s396]
    %vm398 = vcmask 1045508
    %v399 = vsel %vm398, %v397, %v394
    %s400 = scalar_lea.vmem [#allocation0], 132
    %s401 = smov 192
    %v402 = vld [vmem:[%s400] ss:$16 sm:%s401]
    %vm403 = vcmask 1047558
    %v404 = vsel %vm403, %v402, %v399
    %405 = vrot.lane.b32.xlu0 %v404, 64
    %v406 = vpop.permute.xlu0 %405
    %vm407 = vcmask 654848
    %s408 = scalar_lea.vmem %s1, 16
    %409 = vst.msk [vmem:[%s408] sm:$0xff] %vm407, %v406
    %s410 = scalar_lea.vmem [#allocation0], 140
    %s411 = smov 3
    %v412 = vld [vmem:[%s410] ss:$16 sm:%s411]
    %s413 = scalar_lea.vmem [#allocation0], 140
    %s414 = smov 12
    %v415 = vld [vmem:[%s413] ss:$16 sm:%s414]
    %vm416 = vcmask 1043458
    %v417 = vsel %vm416, %v415, %v412
    %s418 = scalar_lea.vmem [#allocation0], 140
    %s419 = smov 48
    %v420 = vld [vmem:[%s418] ss:$16 sm:%s419]
    %vm421 = vcmask 1045508
    %v422 = vsel %vm421, %v420, %v417
    %s423 = scalar_lea.vmem [#allocation0], 140
    %s424 = smov 192
    %v425 = vld [vmem:[%s423] ss:$16 sm:%s424]
    %vm426 = vcmask 1047558
    %v427 = vsel %vm426, %v425, %v422
    %428 = vrot.lane.b32.xlu0 %v427, 64
    %v429 = vpop.permute.xlu0 %428
    %vm430 = vcmask 654848
    %s431 = scalar_lea.vmem %s1, 24
    %432 = vst.msk [vmem:[%s431] sm:$0xff] %vm430, %v429
    %s433 = scalar_lea.vmem [#allocation0], 3
    %s434 = smov 3
    %v435 = vld [vmem:[%s433] ss:$16 sm:%s434]
    %s436 = scalar_lea.vmem [#allocation0], 3
    %s437 = smov 12
    %v438 = vld [vmem:[%s436] ss:$16 sm:%s437]
    %vm439 = vcmask 1043458
    %v440 = vsel %vm439, %v438, %v435
    %s441 = scalar_lea.vmem [#allocation0], 3
    %s442 = smov 48
    %v443 = vld [vmem:[%s441] ss:$16 sm:%s442]
    %vm444 = vcmask 1045508
    %v445 = vsel %vm444, %v443, %v440
    %s446 = scalar_lea.vmem [#allocation0], 3
    %s447 = smov 192
    %v448 = vld [vmem:[%s446] ss:$16 sm:%s447]
    %vm449 = vcmask 1047558
    %v450 = vsel %vm449, %v448, %v445
    %451 = vrot.lane.b32.xlu0 %v450, 48
    %v452 = vpop.permute.xlu0 %451
    %vm453 = vcmask 523648
    %454 = vst.msk [vmem:[%s1] sm:$0xff] %vm453, %v452
    %s455 = scalar_lea.vmem [#allocation0], 11
    %s456 = smov 3
    %v457 = vld [vmem:[%s455] ss:$16 sm:%s456]
    %s458 = scalar_lea.vmem [#allocation0], 11
    %s459 = smov 12
    %v460 = vld [vmem:[%s458] ss:$16 sm:%s459]
    %vm461 = vcmask 1043458
    %v462 = vsel %vm461, %v460, %v457
    %s463 = scalar_lea.vmem [#allocation0], 11
    %s464 = smov 48
    %v465 = vld [vmem:[%s463] ss:$16 sm:%s464]
    %vm466 = vcmask 1045508
    %v467 = vsel %vm466, %v465, %v462
    %s468 = scalar_lea.vmem [#allocation0], 11
    %s469 = smov 192
    %v470 = vld [vmem:[%s468] ss:$16 sm:%s469]
    %vm471 = vcmask 1047558
    %v472 = vsel %vm471, %v470, %v467
    %473 = vrot.lane.b32.xlu0 %v472, 48
    %v474 = vpop.permute.xlu0 %473
    %vm475 = vcmask 523648
    %s476 = scalar_lea.vmem %s1, 8
    %477 = vst.msk [vmem:[%s476] sm:$0xff] %vm475, %v474
    %s478 = scalar_lea.vmem [#allocation0], 131
    %s479 = smov 3
    %v480 = vld [vmem:[%s478] ss:$16 sm:%s479]
    %s481 = scalar_lea.vmem [#allocation0], 131
    %s482 = smov 12
    %v483 = vld [vmem:[%s481] ss:$16 sm:%s482]
    %vm484 = vcmask 1043458
    %v485 = vsel %vm484, %v483, %v480
    %s486 = scalar_lea.vmem [#allocation0], 131
    %s487 = smov 48
    %v488 = vld [vmem:[%s486] ss:$16 sm:%s487]
    %vm489 = vcmask 1045508
    %v490 = vsel %vm489, %v488, %v485
    %s491 = scalar_lea.vmem [#allocation0], 131
    %s492 = smov 192
    %v493 = vld [vmem:[%s491] ss:$16 sm:%s492]
    %vm494 = vcmask 1047558
    %v495 = vsel %vm494, %v493, %v490
    %496 = vrot.lane.b32.xlu0 %v495, 48
    %v497 = vpop.permute.xlu0 %496
    %vm498 = vcmask 523648
    %s499 = scalar_lea.vmem %s1, 16
    %500 = vst.msk [vmem:[%s499] sm:$0xff] %vm498, %v497
    %s501 = scalar_lea.vmem [#allocation0], 139
    %s502 = smov 3
    %v503 = vld [vmem:[%s501] ss:$16 sm:%s502]
    %s504 = scalar_lea.vmem [#allocation0], 139
    %s505 = smov 12
    %v506 = vld [vmem:[%s504] ss:$16 sm:%s505]
    %vm507 = vcmask 1043458
    %v508 = vsel %vm507, %v506, %v503
    %s509 = scalar_lea.vmem [#allocation0], 139
    %s510 = smov 48
    %v511 = vld [vmem:[%s509] ss:$16 sm:%s510]
    %vm512 = vcmask 1045508
    %v513 = vsel %vm512, %v511, %v508
    %s514 = scalar_lea.vmem [#allocation0], 139
    %s515 = smov 192
    %v516 = vld [vmem:[%s514] ss:$16 sm:%s515]
    %vm517 = vcmask 1047558
    %v518 = vsel %vm517, %v516, %v513
    %519 = vrot.lane.b32.xlu0 %v518, 48
    %v520 = vpop.permute.xlu0 %519
    %vm521 = vcmask 523648
    %s522 = scalar_lea.vmem %s1, 24
    %523 = vst.msk [vmem:[%s522] sm:$0xff] %vm521, %v520
    %s524 = scalar_lea.vmem [#allocation0], 2
    %s525 = smov 3
    %v526 = vld [vmem:[%s524] ss:$16 sm:%s525]
    %s527 = scalar_lea.vmem [#allocation0], 2
    %s528 = smov 12
    %v529 = vld [vmem:[%s527] ss:$16 sm:%s528]
    %vm530 = vcmask 1043458
    %v531 = vsel %vm530, %v529, %v526
    %s532 = scalar_lea.vmem [#allocation0], 2
    %s533 = smov 48
    %v534 = vld [vmem:[%s532] ss:$16 sm:%s533]
    %vm535 = vcmask 1045508
    %v536 = vsel %vm535, %v534, %v531
    %s537 = scalar_lea.vmem [#allocation0], 2
    %s538 = smov 192
    %v539 = vld [vmem:[%s537] ss:$16 sm:%s538]
    %vm540 = vcmask 1047558
    %v541 = vsel %vm540, %v539, %v536
    %542 = vrot.lane.b32.xlu0 %v541, 32
    %v543 = vpop.permute.xlu0 %542
    %vm544 = vcmask 392448
    %545 = vst.msk [vmem:[%s1] sm:$0xff] %vm544, %v543
    %s546 = scalar_lea.vmem [#allocation0], 10
    %s547 = smov 3
    %v548 = vld [vmem:[%s546] ss:$16 sm:%s547]
    %s549 = scalar_lea.vmem [#allocation0], 10
    %s550 = smov 12
    %v551 = vld [vmem:[%s549] ss:$16 sm:%s550]
    %vm552 = vcmask 1043458
    %v553 = vsel %vm552, %v551, %v548
    %s554 = scalar_lea.vmem [#allocation0], 10
    %s555 = smov 48
    %v556 = vld [vmem:[%s554] ss:$16 sm:%s555]
    %vm557 = vcmask 1045508
    %v558 = vsel %vm557, %v556, %v553
    %s559 = scalar_lea.vmem [#allocation0], 10
    %s560 = smov 192
    %v561 = vld [vmem:[%s559] ss:$16 sm:%s560]
    %vm562 = vcmask 1047558
    %v563 = vsel %vm562, %v561, %v558
    %564 = vrot.lane.b32.xlu0 %v563, 32
    %v565 = vpop.permute.xlu0 %564
    %vm566 = vcmask 392448
    %s567 = scalar_lea.vmem %s1, 8
    %568 = vst.msk [vmem:[%s567] sm:$0xff] %vm566, %v565
    %s569 = scalar_lea.vmem [#allocation0], 130
    %s570 = smov 3
    %v571 = vld [vmem:[%s569] ss:$16 sm:%s570]
    %s572 = scalar_lea.vmem [#allocation0], 130
    %s573 = smov 12
    %v574 = vld [vmem:[%s572] ss:$16 sm:%s573]
    %vm575 = vcmask 1043458
    %v576 = vsel %vm575, %v574, %v571
    %s577 = scalar_lea.vmem [#allocation0], 130
    %s578 = smov 48
    %v579 = vld [vmem:[%s577] ss:$16 sm:%s578]
    %vm580 = vcmask 1045508
    %v581 = vsel %vm580, %v579, %v576
    %s582 = scalar_lea.vmem [#allocation0], 130
    %s583 = smov 192
    %v584 = vld [vmem:[%s582] ss:$16 sm:%s583]
    %vm585 = vcmask 1047558
    %v586 = vsel %vm585, %v584, %v581
    %587 = vrot.lane.b32.xlu0 %v586, 32
    %v588 = vpop.permute.xlu0 %587
    %vm589 = vcmask 392448
    %s590 = scalar_lea.vmem %s1, 16
    %591 = vst.msk [vmem:[%s590] sm:$0xff] %vm589, %v588
    %s592 = scalar_lea.vmem [#allocation0], 138
    %s593 = smov 3
    %v594 = vld [vmem:[%s592] ss:$16 sm:%s593]
    %s595 = scalar_lea.vmem [#allocation0], 138
    %s596 = smov 12
    %v597 = vld [vmem:[%s595] ss:$16 sm:%s596]
    %vm598 = vcmask 1043458
    %v599 = vsel %vm598, %v597, %v594
    %s600 = scalar_lea.vmem [#allocation0], 138
    %s601 = smov 48
    %v602 = vld [vmem:[%s600] ss:$16 sm:%s601]
    %vm603 = vcmask 1045508
    %v604 = vsel %vm603, %v602, %v599
    %s605 = scalar_lea.vmem [#allocation0], 138
    %s606 = smov 192
    %v607 = vld [vmem:[%s605] ss:$16 sm:%s606]
    %vm608 = vcmask 1047558
    %v609 = vsel %vm608, %v607, %v604
    %610 = vrot.lane.b32.xlu0 %v609, 32
    %v611 = vpop.permute.xlu0 %610
    %vm612 = vcmask 392448
    %s613 = scalar_lea.vmem %s1, 24
    %614 = vst.msk [vmem:[%s613] sm:$0xff] %vm612, %v611
    %s615 = scalar_lea.vmem [#allocation0], 1
    %s616 = smov 3
    %v617 = vld [vmem:[%s615] ss:$16 sm:%s616]
    %s618 = scalar_lea.vmem [#allocation0], 1
    %s619 = smov 12
    %v620 = vld [vmem:[%s618] ss:$16 sm:%s619]
    %vm621 = vcmask 1043458
    %v622 = vsel %vm621, %v620, %v617
    %s623 = scalar_lea.vmem [#allocation0], 1
    %s624 = smov 48
    %v625 = vld [vmem:[%s623] ss:$16 sm:%s624]
    %vm626 = vcmask 1045508
    %v627 = vsel %vm626, %v625, %v622
    %s628 = scalar_lea.vmem [#allocation0], 1
    %s629 = smov 192
    %v630 = vld [vmem:[%s628] ss:$16 sm:%s629]
    %vm631 = vcmask 1047558
    %v632 = vsel %vm631, %v630, %v627
    %633 = vrot.lane.b32.xlu0 %v632, 16
    %v634 = vpop.permute.xlu0 %633
    %vm635 = vcmask 261248
    %636 = vst.msk [vmem:[%s1] sm:$0xff] %vm635, %v634
    %s637 = scalar_lea.vmem [#allocation0], 9
    %s638 = smov 3
    %v639 = vld [vmem:[%s637] ss:$16 sm:%s638]
    %s640 = scalar_lea.vmem [#allocation0], 9
    %s641 = smov 12
    %v642 = vld [vmem:[%s640] ss:$16 sm:%s641]
    %vm643 = vcmask 1043458
    %v644 = vsel %vm643, %v642, %v639
    %s645 = scalar_lea.vmem [#allocation0], 9
    %s646 = smov 48
    %v647 = vld [vmem:[%s645] ss:$16 sm:%s646]
    %vm648 = vcmask 1045508
    %v649 = vsel %vm648, %v647, %v644
    %s650 = scalar_lea.vmem [#allocation0], 9
    %s651 = smov 192
    %v652 = vld [vmem:[%s650] ss:$16 sm:%s651]
    %vm653 = vcmask 1047558
    %v654 = vsel %vm653, %v652, %v649
    %655 = vrot.lane.b32.xlu0 %v654, 16
    %v656 = vpop.permute.xlu0 %655
    %vm657 = vcmask 261248
    %s658 = scalar_lea.vmem %s1, 8
    %659 = vst.msk [vmem:[%s658] sm:$0xff] %vm657, %v656
    %s660 = scalar_lea.vmem [#allocation0], 129
    %s661 = smov 3
    %v662 = vld [vmem:[%s660] ss:$16 sm:%s661]
    %s663 = scalar_lea.vmem [#allocation0], 129
    %s664 = smov 12
    %v665 = vld [vmem:[%s663] ss:$16 sm:%s664]
    %vm666 = vcmask 1043458
    %v667 = vsel %vm666, %v665, %v662
    %s668 = scalar_lea.vmem [#allocation0], 129
    %s669 = smov 48
    %v670 = vld [vmem:[%s668] ss:$16 sm:%s669]
    %vm671 = vcmask 1045508
    %v672 = vsel %vm671, %v670, %v667
    %s673 = scalar_lea.vmem [#allocation0], 129
    %s674 = smov 192
    %v675 = vld [vmem:[%s673] ss:$16 sm:%s674]
    %vm676 = vcmask 1047558
    %v677 = vsel %vm676, %v675, %v672
    %678 = vrot.lane.b32.xlu0 %v677, 16
    %v679 = vpop.permute.xlu0 %678
    %vm680 = vcmask 261248
    %s681 = scalar_lea.vmem %s1, 16
    %682 = vst.msk [vmem:[%s681] sm:$0xff] %vm680, %v679
    %s683 = scalar_lea.vmem [#allocation0], 137
    %s684 = smov 3
    %v685 = vld [vmem:[%s683] ss:$16 sm:%s684]
    %s686 = scalar_lea.vmem [#allocation0], 137
    %s687 = smov 12
    %v688 = vld [vmem:[%s686] ss:$16 sm:%s687]
    %vm689 = vcmask 1043458
    %v690 = vsel %vm689, %v688, %v685
    %s691 = scalar_lea.vmem [#allocation0], 137
    %s692 = smov 48
    %v693 = vld [vmem:[%s691] ss:$16 sm:%s692]
    %vm694 = vcmask 1045508
    %v695 = vsel %vm694, %v693, %v690
    %s696 = scalar_lea.vmem [#allocation0], 137
    %s697 = smov 192
    %v698 = vld [vmem:[%s696] ss:$16 sm:%s697]
    %vm699 = vcmask 1047558
    %v700 = vsel %vm699, %v698, %v695
    %701 = vrot.lane.b32.xlu0 %v700, 16
    %v702 = vpop.permute.xlu0 %701
    %vm703 = vcmask 261248
    %s704 = scalar_lea.vmem %s1, 24
    %705 = vst.msk [vmem:[%s704] sm:$0xff] %vm703, %v702
    %706 = vsyncpa [#allocation1], 1

// kernel: audio2pose_forward.1
$region0: #{audio2pose_forward.1}
  #allocation0 [shape = 'u32[]', space=smem, size = 0x4, offset = 0x4, fixed_abs, tag = 'smem constant byte address 0x4 - core index']
  #allocation1 [shape = 'u32[144,128]{1,0:T(1,128)}', space=vmem, size = 0x12000, scoped, tag = 'internal scratch']
  %s0 = inlined_call_operand.smem [shape: u32[34], index: -1, kind: input, shape index: {}]
  %s1 = sld [smem:[%s0]]
  %s2 = scalar_lea.smem %s0, 1
  %s3 = sld [smem:[%s2]]
  %s4 = scalar_lea.smem %s0, 2
  %s5 = sld [smem:[%s4]]
  %s6 = scalar_lea.smem %s0, 3
  %s7 = sld [smem:[%s6]]
  %s8 = scalar_lea.smem %s0, 4
  %s9 = sld [smem:[%s8]]
  %s10 = scalar_lea.smem %s0, 5
  %s11 = sld [smem:[%s10]]
  %s12 = scalar_lea.smem %s0, 6
  %s13 = sld [smem:[%s12]]
  %s14 = scalar_lea.smem %s0, 7
  %s15 = sld [smem:[%s14]]
  %s16 = scalar_lea.smem %s0, 8
  %s17 = sld [smem:[%s16]]
  %s18 = scalar_lea.smem %s0, 9
  %s19 = sld [smem:[%s18]]
  %s20 = scalar_lea.smem %s0, 10
  %s21 = sld [smem:[%s20]]
  %s22 = scalar_lea.smem %s0, 11
  %s23 = sld [smem:[%s22]]
  %s24 = scalar_lea.smem %s0, 12
  %s25 = sld [smem:[%s24]]
  %s26 = scalar_lea.smem %s0, 13
  %s27 = sld [smem:[%s26]]
  %s28 = scalar_lea.smem %s0, 14
  %s29 = sld [smem:[%s28]]
  %s30 = scalar_lea.smem %s0, 15
  %s31 = sld [smem:[%s30]]
  %s32 = scalar_lea.smem %s0, 16
  %s33 = sld [smem:[%s32]]
  %s34 = scalar_lea.smem %s0, 17
  %s35 = sld [smem:[%s34]]
  %s36 = scalar_lea.smem %s0, 18
  %s37 = sld [smem:[%s36]]
  %s38 = scalar_lea.smem %s0, 19
  %s39 = sld [smem:[%s38]]
  %s40 = scalar_lea.smem %s0, 20
  %s41 = sld [smem:[%s40]]
  %s42 = scalar_lea.smem %s0, 21
  %s43 = sld [smem:[%s42]]
  %s44 = scalar_lea.smem %s0, 22
  %s45 = sld [smem:[%s44]]
  %s46 = scalar_lea.smem %s0, 23
  %s47 = sld [smem:[%s46]]
  %s48 = scalar_lea.smem %s0, 24
  %s49 = sld [smem:[%s48]]
  %s50 = scalar_lea.smem %s0, 25
  %s51 = sld [smem:[%s50]]
  %s52 = scalar_lea.smem %s0, 26
  %s53 = sld [smem:[%s52]]
  %s54 = scalar_lea.smem %s0, 27
  %s55 = sld [smem:[%s54]]
  %s56 = scalar_lea.smem %s0, 28
  %s57 = sld [smem:[%s56]]
  %s58 = scalar_lea.smem %s0, 29
  %s59 = sld [smem:[%s58]]
  %s60 = scalar_lea.smem %s0, 30
  %s61 = sld [smem:[%s60]]
  %s62 = scalar_lea.smem %s0, 31
  %s63 = sld [smem:[%s62]]
  %s64 = scalar_lea.smem %s0, 32
  %s65 = sld [smem:[%s64]]
  %s66 = scalar_lea.smem %s0, 33
  %s67 = sld [smem:[%s66]]
  %68 = xla_tuple %s65, %s67
  %s69 = sld [smem:[#allocation0]]
  $region146: #{audio2pose_forward.1} parent=0
    _
  %s71 = ssub.s32 1, %s69
  %s72 = scalar_select 0, %s71, %s69
  $region1: #{audio2pose_forward.1} parent=0
    #allocation2 [shape = 'u8[8192]{0}', space=vmem, size = 0x2000, scoped, tag = 'output window, operand 0, single buffered']
    #allocation3 [shape = 's32[1]{0}', space=sflag, size = 0x4, scoped, tag = 'scoped memory for audio2pose_forward.1']
    %73 = vsyncpa [#allocation3], 0
    // Predicated region
    $region2: #{audio2pose_forward.1} parent=1 // pred_check
      _
    $region3: #{audio2pose_forward.1} parent=1 // pred_check_branch
      %75 = sbr.rel (0) target = $region5
    $region4: #{audio2pose_forward.1} parent=1 // pred_region
      _
    $region5: #{audio2pose_forward.1} parent=1 // pred_fallthru
      _
    // Predicated region
    $region6: #{audio2pose_forward.1} parent=1 // pred_check
      _
    $region7: #{audio2pose_forward.1} parent=1 // pred_check_branch
      %77 = sbr.rel (0) target = $region9
    $region8: #{audio2pose_forward.1} parent=1 // pred_region
      _
    $region9: #{audio2pose_forward.1} parent=1 // pred_fallthru
      _
    // Predicated region
    $region10: #{audio2pose_forward.1} parent=1 // pred_check
      _
    $region11: #{audio2pose_forward.1} parent=1 // pred_check_branch
      %79 = sbr.rel (0) target = $region13
    $region12: #{audio2pose_forward.1} parent=1 // pred_region
      _
    $region13: #{audio2pose_forward.1} parent=1 // pred_fallthru
      _
    // Predicated region
    $region14: #{audio2pose_forward.1} parent=1 // pred_check
      _
    $region15: #{audio2pose_forward.1} parent=1 // pred_check_branch
      %81 = sbr.rel (0) target = $region17
    $region16: #{audio2pose_forward.1} parent=1 // pred_region
      _
    $region17: #{audio2pose_forward.1} parent=1 // pred_fallthru
      _
    // Predicated region
    $region18: #{audio2pose_forward.1} parent=1 // pred_check
      _
    $region19: #{audio2pose_forward.1} parent=1 // pred_check_branch
      %83 = sbr.rel (0) target = $region21
    $region20: #{audio2pose_forward.1} parent=1 // pred_region
      _
    $region21: #{audio2pose_forward.1} parent=1 // pred_fallthru
      _
    // Predicated region
    $region22: #{audio2pose_forward.1} parent=1 // pred_check
      _
    $region23: #{audio2pose_forward.1} parent=1 // pred_check_branch
      %85 = sbr.rel (0) target = $region25
    $region24: #{audio2pose_forward.1} parent=1 // pred_region
      _
    $region25: #{audio2pose_forward.1} parent=1 // pred_fallthru
      _
    // Predicated region
    $region26: #{audio2pose_forward.1} parent=1 // pred_check
      _
    $region27: #{audio2pose_forward.1} parent=1 // pred_check_branch
      %87 = sbr.rel (0) target = $region29
    $region28: #{audio2pose_forward.1} parent=1 // pred_region
      _
    $region29: #{audio2pose_forward.1} parent=1 // pred_fallthru
      _
    // Predicated region
    $region30: #{audio2pose_forward.1} parent=1 // pred_check
      _
    $region31: #{audio2pose_forward.1} parent=1 // pred_check_branch
      %89 = sbr.rel (0) target = $region33
    $region32: #{audio2pose_forward.1} parent=1 // pred_region
      _
    $region33: #{audio2pose_forward.1} parent=1 // pred_fallthru
      _
    // Predicated region
    $region34: #{audio2pose_forward.1} parent=1 // pred_check
      _
    $region35: #{audio2pose_forward.1} parent=1 // pred_check_branch
      %91 = sbr.rel (0) target = $region37
    $region36: #{audio2pose_forward.1} parent=1 // pred_region
      _
    $region37: #{audio2pose_forward.1} parent=1 // pred_fallthru
      _
    // Predicated region
    $region38: #{audio2pose_forward.1} parent=1 // pred_check
      _
    $region39: #{audio2pose_forward.1} parent=1 // pred_check_branch
      %93 = sbr.rel (0) target = $region41
    $region40: #{audio2pose_forward.1} parent=1 // pred_region
      _
    $region41: #{audio2pose_forward.1} parent=1 // pred_fallthru
      _
    // Predicated region
    $region42: #{audio2pose_forward.1} parent=1 // pred_check
      _
    $region43: #{audio2pose_forward.1} parent=1 // pred_check_branch
      %95 = sbr.rel (0) target = $region45
    $region44: #{audio2pose_forward.1} parent=1 // pred_region
      _
    $region45: #{audio2pose_forward.1} parent=1 // pred_fallthru
      _
    // Predicated region
    $region46: #{audio2pose_forward.1} parent=1 // pred_check
      _
    $region47: #{audio2pose_forward.1} parent=1 // pred_check_branch
      %97 = sbr.rel (0) target = $region49
    $region48: #{audio2pose_forward.1} parent=1 // pred_region
      _
    $region49: #{audio2pose_forward.1} parent=1 // pred_fallthru
      _
    // Predicated region
    $region50: #{audio2pose_forward.1} parent=1 // pred_check
      _
    $region51: #{audio2pose_forward.1} parent=1 // pred_check_branch
      %99 = sbr.rel (0) target = $region53
    $region52: #{audio2pose_forward.1} parent=1 // pred_region
      _
    $region53: #{audio2pose_forward.1} parent=1 // pred_fallthru
      _
    // Predicated region
    $region54: #{audio2pose_forward.1} parent=1 // pred_check
      _
    $region55: #{audio2pose_forward.1} parent=1 // pred_check_branch
      %101 = sbr.rel (0) target = $region57
    $region56: #{audio2pose_forward.1} parent=1 // pred_region
      _
    $region57: #{audio2pose_forward.1} parent=1 // pred_fallthru
      _
    // Predicated region
    $region58: #{audio2pose_forward.1} parent=1 // pred_check
      _
    $region59: #{audio2pose_forward.1} parent=1 // pred_check_branch
      %103 = sbr.rel (0) target = $region61
    $region60: #{audio2pose_forward.1} parent=1 // pred_region
      _
    $region61: #{audio2pose_forward.1} parent=1 // pred_fallthru
      _
    // Predicated region
    $region62: #{audio2pose_forward.1} parent=1 // pred_check
      _
    $region63: #{audio2pose_forward.1} parent=1 // pred_check_branch
      %105 = sbr.rel (0) target = $region65
    $region64: #{audio2pose_forward.1} parent=1 // pred_region
      _
    $region65: #{audio2pose_forward.1} parent=1 // pred_fallthru
      _
    // Predicated region
    $region66: #{audio2pose_forward.1} parent=1 // pred_check
      _
    $region67: #{audio2pose_forward.1} parent=1 // pred_check_branch
      %107 = sbr.rel (0) target = $region69
    $region68: #{audio2pose_forward.1} parent=1 // pred_region
      _
    $region69: #{audio2pose_forward.1} parent=1 // pred_fallthru
      _
    // Predicated region
    $region70: #{audio2pose_forward.1} parent=1 // pred_check
      _
    $region71: #{audio2pose_forward.1} parent=1 // pred_check_branch
      %109 = sbr.rel (0) target = $region73
    $region72: #{audio2pose_forward.1} parent=1 // pred_region
      _
    $region73: #{audio2pose_forward.1} parent=1 // pred_fallthru
      _
    // Predicated region
    $region74: #{audio2pose_forward.1} parent=1 // pred_check
      _
    $region75: #{audio2pose_forward.1} parent=1 // pred_check_branch
      %111 = sbr.rel (0) target = $region77
    $region76: #{audio2pose_forward.1} parent=1 // pred_region
      _
    $region77: #{audio2pose_forward.1} parent=1 // pred_fallthru
      _
    // Predicated region
    $region78: #{audio2pose_forward.1} parent=1 // pred_check
      _
    $region79: #{audio2pose_forward.1} parent=1 // pred_check_branch
      %113 = sbr.rel (0) target = $region81
    $region80: #{audio2pose_forward.1} parent=1 // pred_region
      _
    $region81: #{audio2pose_forward.1} parent=1 // pred_fallthru
      _
    // Predicated region
    $region82: #{audio2pose_forward.1} parent=1 // pred_check
      _
    $region83: #{audio2pose_forward.1} parent=1 // pred_check_branch
      %115 = sbr.rel (0) target = $region85
    $region84: #{audio2pose_forward.1} parent=1 // pred_region
      _
    $region85: #{audio2pose_forward.1} parent=1 // pred_fallthru
      _
    // Predicated region
    $region86: #{audio2pose_forward.1} parent=1 // pred_check
      _
    $region87: #{audio2pose_forward.1} parent=1 // pred_check_branch
      %117 = sbr.rel (0) target = $region89
    $region88: #{audio2pose_forward.1} parent=1 // pred_region
      _
    $region89: #{audio2pose_forward.1} parent=1 // pred_fallthru
      _
    // Predicated region
    $region90: #{audio2pose_forward.1} parent=1 // pred_check
      _
    $region91: #{audio2pose_forward.1} parent=1 // pred_check_branch
      %119 = sbr.rel (0) target = $region93
    $region92: #{audio2pose_forward.1} parent=1 // pred_region
      _
    $region93: #{audio2pose_forward.1} parent=1 // pred_fallthru
      _
    // Predicated region
    $region94: #{audio2pose_forward.1} parent=1 // pred_check
      _
    $region95: #{audio2pose_forward.1} parent=1 // pred_check_branch
      %121 = sbr.rel (0) target = $region97
    $region96: #{audio2pose_forward.1} parent=1 // pred_region
      _
    $region97: #{audio2pose_forward.1} parent=1 // pred_fallthru
      _
    // Predicated region
    $region98: #{audio2pose_forward.1} parent=1 // pred_check
      _
    $region99: #{audio2pose_forward.1} parent=1 // pred_check_branch
      %123 = sbr.rel (0) target = $region101
    $region100: #{audio2pose_forward.1} parent=1 // pred_region
      _
    $region101: #{audio2pose_forward.1} parent=1 // pred_fallthru
      _
    // Predicated region
    $region102: #{audio2pose_forward.1} parent=1 // pred_check
      _
    $region103: #{audio2pose_forward.1} parent=1 // pred_check_branch
      %125 = sbr.rel (0) target = $region105
    $region104: #{audio2pose_forward.1} parent=1 // pred_region
      _
    $region105: #{audio2pose_forward.1} parent=1 // pred_fallthru
      _
    // Predicated region
    $region106: #{audio2pose_forward.1} parent=1 // pred_check
      _
    $region107: #{audio2pose_forward.1} parent=1 // pred_check_branch
      %127 = sbr.rel (0) target = $region109
    $region108: #{audio2pose_forward.1} parent=1 // pred_region
      _
    $region109: #{audio2pose_forward.1} parent=1 // pred_fallthru
      _
    // Predicated region
    $region110: #{audio2pose_forward.1} parent=1 // pred_check
      _
    $region111: #{audio2pose_forward.1} parent=1 // pred_check_branch
      %129 = sbr.rel (0) target = $region113
    $region112: #{audio2pose_forward.1} parent=1 // pred_region
      _
    $region113: #{audio2pose_forward.1} parent=1 // pred_fallthru
      _
    // Predicated region
    $region114: #{audio2pose_forward.1} parent=1 // pred_check
      _
    $region115: #{audio2pose_forward.1} parent=1 // pred_check_branch
      %131 = sbr.rel (0) target = $region117
    $region116: #{audio2pose_forward.1} parent=1 // pred_region
      _
    $region117: #{audio2pose_forward.1} parent=1 // pred_fallthru
      _
    // Predicated region
    $region118: #{audio2pose_forward.1} parent=1 // pred_check
      _
    $region119: #{audio2pose_forward.1} parent=1 // pred_check_branch
      %133 = sbr.rel (0) target = $region121
    $region120: #{audio2pose_forward.1} parent=1 // pred_region
      _
    $region121: #{audio2pose_forward.1} parent=1 // pred_fallthru
      _
    // Predicated region
    $region122: #{audio2pose_forward.1} parent=1 // pred_check
      _
    $region123: #{audio2pose_forward.1} parent=1 // pred_check_branch
      %135 = sbr.rel (0) target = $region125
    $region124: #{audio2pose_forward.1} parent=1 // pred_region
      _
    $region125: #{audio2pose_forward.1} parent=1 // pred_fallthru
      _
    // Predicated region
    $region126: #{audio2pose_forward.1} parent=1 // pred_check
      _
    $region127: #{audio2pose_forward.1} parent=1 // pred_check_branch
      %137 = sbr.rel (0) target = $region129
    $region128: #{audio2pose_forward.1} parent=1 // pred_region
      _
    $region129: #{audio2pose_forward.1} parent=1 // pred_fallthru
      _
    %v139 = vld [vmem:[%s13] sm:$0xf]
    %v140 = vld [vmem:[%s13 + $0x4] sm:$0xf]
    %v141 = vld [vmem:[%s1] sm:$0xff]
    %v142 = vld [vmem:[%s1 + $0x8] sm:$0xff]
    %v143 = vld [vmem:[%s1 + $0x10] sm:$0xff]
    %v144 = vld [vmem:[%s1 + $0x18] sm:$0xff]
    %v145 = vpack.c.bf16 %v143, %v141
    %v146 = vpack.c.bf16 %v144, %v142
    %v149 = vunpack.c.l.b16 %v139
    %v150 = vunpack.c.l.b16 %v140
    %v151 = vpack.c.b16 %v150, %v149
    %vm152 = vcmask 130048
    %v154 = vsel %vm152, %v151, 0
    %156 = vmatprep.subr.bf16.mxu0 0
    %157 = vmatpush1.bf16.msra.mxu0 0
    %158 = vmatprep.subr.bf16.mxu0 0
    %159 = vmatpush1.bf16.msra.mxu0 0
    %160 = vmatprep.subr.bf16.mxu0 0
    %161 = vmatpush1.bf16.msra.mxu0 0
    %162 = vmatprep.subr.bf16.mxu0 0
    %163 = vmatpush1.bf16.msra.mxu0 0
    %164 = vmatprep.subr.bf16.mxu0 0
    %165 = vmatpush1.bf16.msra.mxu0 0
    %166 = vmatprep.subr.bf16.mxu0 0
    %167 = vmatpush1.bf16.msra.mxu0 0
    %168 = vmatprep.subr.bf16.mxu0 0
    %169 = vmatpush1.bf16.msra.mxu0 0
    %170 = vmatprep.subr.bf16.mxu0 %v146
    %171 = vmatpush1.bf16.msra.mxu0 %v145
    %172 = vmatprep.subr.bf16.mxu0 0
    %173 = vmatpush2.bf16.msra.mxu0 0
    %174 = vmatprep.subr.bf16.mxu0 0
    %175 = vmatpush2.bf16.msra.mxu0 0
    %176 = vmatprep.subr.bf16.mxu0 0
    %177 = vmatpush2.bf16.msra.mxu0 0
    %178 = vmatprep.subr.bf16.mxu0 0
    %179 = vmatpush2.bf16.msra.mxu0 0
    %180 = vmatprep.subr.bf16.mxu0 0
    %181 = vmatpush2.bf16.msra.mxu0 0
    %182 = vmatprep.subr.bf16.mxu0 0
    %183 = vmatpush2.bf16.msra.mxu0 0
    %184 = vmatprep.subr.bf16.mxu0 0
    %185 = vmatpush2.bf16.msra.mxu0 0
    %186 = vmatprep.subr.bf16.mxu0 0
    %187 = vmatpush2.bf16.msra.mxu0 0
    %188 = vmatprep.mubr.bf16.mxu0 0
    %189 = vmatmul.mubr.bf16.gmra.mxu0 %v154
    %v190 = vpop.f32.mrf.mxu0
    %v191 = vadd.f32 0.0, %v190
    %v192 = vpop.f32.mrf.mxu0
    %v193 = vadd.f32 0.0, %v192
    %v194 = vpop.f32.mrf.mxu0
    %v195 = vadd.f32 0.0, %v194
    %v196 = vpop.f32.mrf.mxu0
    %v197 = vadd.f32 0.0, %v196
    %198 = vdwg.mxu0
    %v199 = vpack.c.bf16 %v195, %v191
    %v200 = vpack.c.bf16 %v197, %v193
    %v201 = vld [vmem:[%s15] sm:$0xff]
    %v202 = vld [vmem:[%s15 + $0x8] sm:$0xff]
    %v203 = vld [vmem:[%s15 + $0x10] sm:$0xff]
    %v204 = vld [vmem:[%s15 + $0x18] sm:$0xff]
    %v205 = vld [vmem:[%s15 + $0x20] sm:$0xff]
    %v206 = vld [vmem:[%s15 + $0x28] sm:$0xff]
    %v207 = vld [vmem:[%s15 + $0x30] sm:$0xff]
    %v208 = vld [vmem:[%s15 + $0x38] sm:$0xff]
    %v209 = vld [vmem:[%s15 + $0x40] sm:$0xff]
    %v210 = vld [vmem:[%s15 + $0x48] sm:$0xff]
    %v211 = vld [vmem:[%s15 + $0x50] sm:$0xff]
    %v212 = vld [vmem:[%s15 + $0x58] sm:$0xff]
    %v213 = vld [vmem:[%s15 + $0x60] sm:$0xff]
    %v214 = vld [vmem:[%s15 + $0x68] sm:$0xff]
    %v215 = vld [vmem:[%s15 + $0x70] sm:$0xff]
    %v216 = vld [vmem:[%s15 + $0x78] sm:$0xff]
    %v217 = vld [vmem:[%s15 + $0x80] sm:$0xff]
    %v218 = vld [vmem:[%s15 + $0x88] sm:$0xff]
    %v219 = vld [vmem:[%s15 + $0x90] sm:$0xff]
    %v220 = vld [vmem:[%s15 + $0x98] sm:$0xff]
    %v221 = vld [vmem:[%s15 + $0xa0] sm:$0xff]
    %v222 = vld [vmem:[%s15 + $0xa8] sm:$0xff]
    %v223 = vld [vmem:[%s15 + $0xb0] sm:$0xff]
    %v224 = vld [vmem:[%s15 + $0xb8] sm:$0xff]
    %v225 = vld [vmem:[%s15 + $0xc0] sm:$0xff]
    %v226 = vld [vmem:[%s15 + $0xc8] sm:$0xff]
    %v227 = vld [vmem:[%s15 + $0xd0] sm:$0xff]
    %v228 = vld [vmem:[%s15 + $0xd8] sm:$0xff]
    %v229 = vld [vmem:[%s15 + $0xe0] sm:$0xff]
    %v230 = vld [vmem:[%s15 + $0xe8] sm:$0xff]
    %v231 = vld [vmem:[%s15 + $0xf0] sm:$0xff]
    %v232 = vld [vmem:[%s15 + $0xf8] sm:$0xff]
    %v233 = vld [vmem:[%s15 + $0x100] sm:$0xff]
    %v234 = vld [vmem:[%s15 + $0x108] sm:$0xff]
    %v235 = vld [vmem:[%s15 + $0x110] sm:$0xff]
    %v236 = vld [vmem:[%s15 + $0x118] sm:$0xff]
    %v237 = vld [vmem:[%s15 + $0x120] sm:$0xff]
    %v238 = vld [vmem:[%s15 + $0x128] sm:$0xff]
    %v239 = vld [vmem:[%s15 + $0x130] sm:$0xff]
    %v240 = vld [vmem:[%s15 + $0x138] sm:$0xff]
    %v241 = vld [vmem:[%s15 + $0x140] sm:$0xff]
    %v242 = vld [vmem:[%s15 + $0x148] sm:$0xff]
    %v243 = vld [vmem:[%s15 + $0x150] sm:$0xff]
    %v244 = vld [vmem:[%s15 + $0x158] sm:$0xff]
    %v245 = vld [vmem:[%s15 + $0x160] sm:$0xff]
    %v246 = vld [vmem:[%s15 + $0x168] sm:$0xff]
    %v247 = vld [vmem:[%s15 + $0x170] sm:$0xff]
    %v248 = vld [vmem:[%s15 + $0x178] sm:$0xff]
    %v249 = vld [vmem:[%s15 + $0x180] sm:$0xff]
    %v250 = vld [vmem:[%s15 + $0x188] sm:$0xff]
    %v251 = vld [vmem:[%s15 + $0x190] sm:$0xff]
    %v252 = vld [vmem:[%s15 + $0x198] sm:$0xff]
    %v253 = vld [vmem:[%s15 + $0x1a0] sm:$0xff]
    %v254 = vld [vmem:[%s15 + $0x1a8] sm:$0xff]
    %v255 = vld [vmem:[%s15 + $0x1b0] sm:$0xff]
    %v256 = vld [vmem:[%s15 + $0x1b8] sm:$0xff]
    %v257 = vld [vmem:[%s15 + $0x1c0] sm:$0xff]
    %v258 = vld [vmem:[%s15 + $0x1c8] sm:$0xff]
    %v259 = vld [vmem:[%s15 + $0x1d0] sm:$0xff]
    %v260 = vld [vmem:[%s15 + $0x1d8] sm:$0xff]
    %v261 = vld [vmem:[%s15 + $0x1e0] sm:$0xff]
    %v262 = vld [vmem:[%s15 + $0x1e8] sm:$0xff]
    %v263 = vld [vmem:[%s15 + $0x1f0] sm:$0xff]
    %v264 = vld [vmem:[%s15 + $0x1f8] sm:$0xff]
    %v265 = vld [vmem:[%s17] sm:$0xf]
    %v267 = vlaneseq
    %v268 = vshrl.u32 %v267, 7
    %v269 = vsub.s32 0, %v268
    %v270 = vrot.slane %v265, %v269
    %v271 = vlaneseq
    %v272 = vshrl.u32 %v271, 7
    %v273 = vsub.s32 1, %v272
    %v274 = vrot.slane %v265, %v273
    %v275 = vlaneseq
    %v276 = vshrl.u32 %v275, 7
    %v277 = vsub.s32 2, %v276
    %v278 = vrot.slane %v265, %v277
    %v279 = vlaneseq
    %v280 = vshrl.u32 %v279, 7
    %v281 = vsub.s32 3, %v280
    %v282 = vrot.slane %v265, %v281
    %v351 = vunpack.c.l.b16 %v201
    %v352 = vunpack.c.h.b16 %v201
    %v353 = vunpack.c.l.b16 %v202
    %v354 = vunpack.c.h.b16 %v202
    %v355 = vunpack.c.l.b16 %v203
    %v356 = vunpack.c.h.b16 %v203
    %v357 = vunpack.c.l.b16 %v204
    %v358 = vunpack.c.h.b16 %v204
    %v359 = vunpack.c.l.b16 %v205
    %v360 = vunpack.c.h.b16 %v205
    %v361 = vunpack.c.l.b16 %v206
    %v362 = vunpack.c.h.b16 %v206
    %v363 = vunpack.c.l.b16 %v207
    %v364 = vunpack.c.h.b16 %v207
    %v365 = vunpack.c.l.b16 %v208
    %v366 = vunpack.c.h.b16 %v208
    %v367 = vunpack.c.l.b16 %v209
    %v368 = vunpack.c.h.b16 %v209
    %v369 = vunpack.c.l.b16 %v210
    %v370 = vunpack.c.h.b16 %v210
    %v371 = vunpack.c.l.b16 %v211
    %v372 = vunpack.c.h.b16 %v211
    %v373 = vunpack.c.l.b16 %v212
    %v374 = vunpack.c.h.b16 %v212
    %v375 = vunpack.c.l.b16 %v213
    %v376 = vunpack.c.h.b16 %v213
    %v377 = vunpack.c.l.b16 %v214
    %v378 = vunpack.c.h.b16 %v214
    %v379 = vunpack.c.l.b16 %v215
    %v380 = vunpack.c.h.b16 %v215
    %v381 = vunpack.c.l.b16 %v216
    %v382 = vunpack.c.h.b16 %v216
    %v383 = vunpack.c.l.b16 %v217
    %v384 = vunpack.c.h.b16 %v217
    %v385 = vunpack.c.l.b16 %v218
    %v386 = vunpack.c.h.b16 %v218
    %v387 = vunpack.c.l.b16 %v219
    %v388 = vunpack.c.h.b16 %v219
    %v389 = vunpack.c.l.b16 %v220
    %v390 = vunpack.c.h.b16 %v220
    %v391 = vunpack.c.l.b16 %v221
    %v392 = vunpack.c.h.b16 %v221
    %v393 = vunpack.c.l.b16 %v222
    %v394 = vunpack.c.h.b16 %v222
    %v395 = vunpack.c.l.b16 %v223
    %v396 = vunpack.c.h.b16 %v223
    %v397 = vunpack.c.l.b16 %v224
    %v398 = vunpack.c.h.b16 %v224
    %v399 = vunpack.c.l.b16 %v225
    %v400 = vunpack.c.h.b16 %v225
    %v401 = vunpack.c.l.b16 %v226
    %v402 = vunpack.c.h.b16 %v226
    %v403 = vunpack.c.l.b16 %v227
    %v404 = vunpack.c.h.b16 %v227
    %v405 = vunpack.c.l.b16 %v228
    %v406 = vunpack.c.h.b16 %v228
    %v407 = vunpack.c.l.b16 %v229
    %v408 = vunpack.c.h.b16 %v229
    %v409 = vunpack.c.l.b16 %v230
    %v410 = vunpack.c.h.b16 %v230
    %v411 = vunpack.c.l.b16 %v231
    %v412 = vunpack.c.h.b16 %v231
    %v413 = vunpack.c.l.b16 %v232
    %v414 = vunpack.c.h.b16 %v232
    %v415 = vunpack.c.l.b16 %v233
    %v416 = vunpack.c.h.b16 %v233
    %v417 = vunpack.c.l.b16 %v234
    %v418 = vunpack.c.h.b16 %v234
    %v419 = vunpack.c.l.b16 %v235
    %v420 = vunpack.c.h.b16 %v235
    %v421 = vunpack.c.l.b16 %v236
    %v422 = vunpack.c.h.b16 %v236
    %v423 = vunpack.c.l.b16 %v237
    %v424 = vunpack.c.h.b16 %v237
    %v425 = vunpack.c.l.b16 %v238
    %v426 = vunpack.c.h.b16 %v238
    %v427 = vunpack.c.l.b16 %v239
    %v428 = vunpack.c.h.b16 %v239
    %v429 = vunpack.c.l.b16 %v240
    %v430 = vunpack.c.h.b16 %v240
    %v431 = vunpack.c.l.b16 %v241
    %v432 = vunpack.c.h.b16 %v241
    %v433 = vunpack.c.l.b16 %v242
    %v434 = vunpack.c.h.b16 %v242
    %v435 = vunpack.c.l.b16 %v243
    %v436 = vunpack.c.h.b16 %v243
    %v437 = vunpack.c.l.b16 %v244
    %v438 = vunpack.c.h.b16 %v244
    %v439 = vunpack.c.l.b16 %v245
    %v440 = vunpack.c.h.b16 %v245
    %v441 = vunpack.c.l.b16 %v246
    %v442 = vunpack.c.h.b16 %v246
    %v443 = vunpack.c.l.b16 %v247
    %v444 = vunpack.c.h.b16 %v247
    %v445 = vunpack.c.l.b16 %v248
    %v446 = vunpack.c.h.b16 %v248
    %v447 = vunpack.c.l.b16 %v249
    %v448 = vunpack.c.h.b16 %v249
    %v449 = vunpack.c.l.b16 %v250
    %v450 = vunpack.c.h.b16 %v250
    %v451 = vunpack.c.l.b16 %v251
    %v452 = vunpack.c.h.b16 %v251
    %v453 = vunpack.c.l.b16 %v252
    %v454 = vunpack.c.h.b16 %v252
    %v455 = vunpack.c.l.b16 %v253
    %v456 = vunpack.c.h.b16 %v253
    %v457 = vunpack.c.l.b16 %v254
    %v458 = vunpack.c.h.b16 %v254
    %v459 = vunpack.c.l.b16 %v255
    %v460 = vunpack.c.h.b16 %v255
    %v461 = vunpack.c.l.b16 %v256
    %v462 = vunpack.c.h.b16 %v256
    %v463 = vunpack.c.l.b16 %v257
    %v464 = vunpack.c.h.b16 %v257
    %v465 = vunpack.c.l.b16 %v258
    %v466 = vunpack.c.h.b16 %v258
    %v467 = vunpack.c.l.b16 %v259
    %v468 = vunpack.c.h.b16 %v259
    %v469 = vunpack.c.l.b16 %v260
    %v470 = vunpack.c.h.b16 %v260
    %v471 = vunpack.c.l.b16 %v261
    %v472 = vunpack.c.h.b16 %v261
    %v473 = vunpack.c.l.b16 %v262
    %v474 = vunpack.c.h.b16 %v262
    %v475 = vunpack.c.l.b16 %v263
    %v476 = vunpack.c.h.b16 %v263
    %v477 = vunpack.c.l.b16 %v264
    %v478 = vunpack.c.h.b16 %v264
    %v479 = vpack.c.b16 %v355, %v351
    %v480 = vpack.c.b16 %v356, %v352
    %v481 = vpack.c.b16 %v357, %v353
    %v482 = vpack.c.b16 %v358, %v354
    %v483 = vpack.c.b16 %v363, %v359
    %v484 = vpack.c.b16 %v364, %v360
    %v485 = vpack.c.b16 %v365, %v361
    %v486 = vpack.c.b16 %v366, %v362
    %v487 = vpack.c.b16 %v371, %v367
    %v488 = vpack.c.b16 %v372, %v368
    %v489 = vpack.c.b16 %v373, %v369
    %v490 = vpack.c.b16 %v374, %v370
    %v491 = vpack.c.b16 %v379, %v375
    %v492 = vpack.c.b16 %v380, %v376
    %v493 = vpack.c.b16 %v381, %v377
    %v494 = vpack.c.b16 %v382, %v378
    %v495 = vpack.c.b16 %v387, %v383
    %v496 = vpack.c.b16 %v388, %v384
    %v497 = vpack.c.b16 %v389, %v385
    %v498 = vpack.c.b16 %v390, %v386
    %v499 = vpack.c.b16 %v395, %v391
    %v500 = vpack.c.b16 %v396, %v392
    %v501 = vpack.c.b16 %v397, %v393
    %v502 = vpack.c.b16 %v398, %v394
    %v503 = vpack.c.b16 %v403, %v399
    %v504 = vpack.c.b16 %v404, %v400
    %v505 = vpack.c.b16 %v405, %v401
    %v506 = vpack.c.b16 %v406, %v402
    %v507 = vpack.c.b16 %v411, %v407
    %v508 = vpack.c.b16 %v412, %v408
    %v509 = vpack.c.b16 %v413, %v409
    %v510 = vpack.c.b16 %v414, %v410
    %v511 = vpack.c.b16 %v419, %v415
    %v512 = vpack.c.b16 %v420, %v416
    %v513 = vpack.c.b16 %v421, %v417
    %v514 = vpack.c.b16 %v422, %v418
    %v515 = vpack.c.b16 %v427, %v423
    %v516 = vpack.c.b16 %v428, %v424
    %v517 = vpack.c.b16 %v429, %v425
    %v518 = vpack.c.b16 %v430, %v426
    %v519 = vpack.c.b16 %v435, %v431
    %v520 = vpack.c.b16 %v436, %v432
    %v521 = vpack.c.b16 %v437, %v433
    %v522 = vpack.c.b16 %v438, %v434
    %v523 = vpack.c.b16 %v443, %v439
    %v524 = vpack.c.b16 %v444, %v440
    %v525 = vpack.c.b16 %v445, %v441
    %v526 = vpack.c.b16 %v446, %v442
    %v527 = vpack.c.b16 %v451, %v447
    %v528 = vpack.c.b16 %v452, %v448
    %v529 = vpack.c.b16 %v453, %v449
    %v530 = vpack.c.b16 %v454, %v450
    %v531 = vpack.c.b16 %v459, %v455
    %v532 = vpack.c.b16 %v460, %v456
    %v533 = vpack.c.b16 %v461, %v457
    %v534 = vpack.c.b16 %v462, %v458
    %v535 = vpack.c.b16 %v467, %v463
    %v536 = vpack.c.b16 %v468, %v464
    %v537 = vpack.c.b16 %v469, %v465
    %v538 = vpack.c.b16 %v470, %v466
    %v539 = vpack.c.b16 %v475, %v471
    %v540 = vpack.c.b16 %v476, %v472
    %v541 = vpack.c.b16 %v477, %v473
    %v542 = vpack.c.b16 %v478, %v474
    %607 = vmatprep.subr.bf16.mxu0 %v508
    %608 = vmatpush1.bf16.msra.mxu0 %v507
    %609 = vmatprep.subr.bf16.mxu0 %v504
    %610 = vmatpush1.bf16.msra.mxu0 %v503
    %611 = vmatprep.subr.bf16.mxu0 %v500
    %612 = vmatpush1.bf16.msra.mxu0 %v499
    %613 = vmatprep.subr.bf16.mxu0 %v496
    %614 = vmatpush1.bf16.msra.mxu0 %v495
    %615 = vmatprep.subr.bf16.mxu0 %v492
    %616 = vmatpush1.bf16.msra.mxu0 %v491
    %617 = vmatprep.subr.bf16.mxu0 %v488
    %618 = vmatpush1.bf16.msra.mxu0 %v487
    %619 = vmatprep.subr.bf16.mxu0 %v484
    %620 = vmatpush1.bf16.msra.mxu0 %v483
    %621 = vmatprep.subr.bf16.mxu0 %v480
    %622 = vmatpush1.bf16.msra.mxu0 %v479
    %623 = vmatprep.subr.bf16.mxu0 %v540
    %624 = vmatpush2.bf16.msra.mxu0 %v539
    %625 = vmatprep.subr.bf16.mxu0 %v536
    %626 = vmatpush2.bf16.msra.mxu0 %v535
    %627 = vmatprep.subr.bf16.mxu0 %v532
    %628 = vmatpush2.bf16.msra.mxu0 %v531
    %629 = vmatprep.subr.bf16.mxu0 %v528
    %630 = vmatpush2.bf16.msra.mxu0 %v527
    %631 = vmatprep.subr.bf16.mxu0 %v524
    %632 = vmatpush2.bf16.msra.mxu0 %v523
    %633 = vmatprep.subr.bf16.mxu0 %v520
    %634 = vmatpush2.bf16.msra.mxu0 %v519
    %635 = vmatprep.subr.bf16.mxu0 %v516
    %636 = vmatpush2.bf16.msra.mxu0 %v515
    %637 = vmatprep.subr.bf16.mxu0 %v512
    %638 = vmatpush2.bf16.msra.mxu0 %v511
    %639 = vmatprep.mubr.bf16.mxu0 %v200
    %640 = vmatmul.mubr.bf16.gmra.mxu0 %v199
    %v641 = vpop.f32.mrf.mxu0
    %v642 = vadd.f32 %v270, %v641
    %v643 = vpop.f32.mrf.mxu0
    %v644 = vadd.f32 %v274, %v643
    %v645 = vpop.f32.mrf.mxu0
    %v646 = vadd.f32 %v270, %v645
    %v647 = vpop.f32.mrf.mxu0
    %v648 = vadd.f32 %v274, %v647
    %649 = vdwg.mxu0
    %650 = vmatprep.subr.bf16.mxu0 %v510
    %651 = vmatpush1.bf16.msra.mxu0 %v509
    %652 = vmatprep.subr.bf16.mxu0 %v506
    %653 = vmatpush1.bf16.msra.mxu0 %v505
    %654 = vmatprep.subr.bf16.mxu0 %v502
    %655 = vmatpush1.bf16.msra.mxu0 %v501
    %656 = vmatprep.subr.bf16.mxu0 %v498
    %657 = vmatpush1.bf16.msra.mxu0 %v497
    %658 = vmatprep.subr.bf16.mxu0 %v494
    %659 = vmatpush1.bf16.msra.mxu0 %v493
    %660 = vmatprep.subr.bf16.mxu0 %v490
    %661 = vmatpush1.bf16.msra.mxu0 %v489
    %662 = vmatprep.subr.bf16.mxu0 %v486
    %663 = vmatpush1.bf16.msra.mxu0 %v485
    %664 = vmatprep.subr.bf16.mxu0 %v482
    %665 = vmatpush1.bf16.msra.mxu0 %v481
    %666 = vmatprep.subr.bf16.mxu0 %v542
    %667 = vmatpush2.bf16.msra.mxu0 %v541
    %668 = vmatprep.subr.bf16.mxu0 %v538
    %669 = vmatpush2.bf16.msra.mxu0 %v537
    %670 = vmatprep.subr.bf16.mxu0 %v534
    %671 = vmatpush2.bf16.msra.mxu0 %v533
    %672 = vmatprep.subr.bf16.mxu0 %v530
    %673 = vmatpush2.bf16.msra.mxu0 %v529
    %674 = vmatprep.subr.bf16.mxu0 %v526
    %675 = vmatpush2.bf16.msra.mxu0 %v525
    %676 = vmatprep.subr.bf16.mxu0 %v522
    %677 = vmatpush2.bf16.msra.mxu0 %v521
    %678 = vmatprep.subr.bf16.mxu0 %v518
    %679 = vmatpush2.bf16.msra.mxu0 %v517
    %680 = vmatprep.subr.bf16.mxu0 %v514
    %681 = vmatpush2.bf16.msra.mxu0 %v513
    %682 = vmatprep.mubr.bf16.mxu0 %v200
    %683 = vmatmul.mubr.bf16.gmra.mxu0 %v199
    %v684 = vpop.f32.mrf.mxu0
    %v685 = vadd.f32 %v278, %v684
    %v686 = vpop.f32.mrf.mxu0
    %v687 = vadd.f32 %v282, %v686
    %v688 = vpop.f32.mrf.mxu0
    %v689 = vadd.f32 %v278, %v688
    %v690 = vpop.f32.mrf.mxu0
    %v691 = vadd.f32 %v282, %v690
    %692 = vdwg.mxu0
    %v693 = vmax.f32 %v642, 0.0
    %v694 = vmax.f32 %v644, 0.0
    %v695 = vmax.f32 %v685, 0.0
    %v696 = vmax.f32 %v687, 0.0
    %v697 = vmax.f32 %v646, 0.0
    %v698 = vmax.f32 %v648, 0.0
    %v699 = vmax.f32 %v689, 0.0
    %v700 = vmax.f32 %v691, 0.0
    %v701 = vpack.c.bf16 %v697, %v693
    %v702 = vpack.c.bf16 %v698, %v694
    %v703 = vpack.c.bf16 %v699, %v695
    %v704 = vpack.c.bf16 %v700, %v696
    %v705 = vld [vmem:[%s19] sm:$0xff]
    %v706 = vld [vmem:[%s19 + $0x8] sm:$0xff]
    %v707 = vld [vmem:[%s19 + $0x10] sm:$0xff]
    %v708 = vld [vmem:[%s19 + $0x18] sm:$0xff]
    %v709 = vld [vmem:[%s19 + $0x20] sm:$0xff]
    %v710 = vld [vmem:[%s19 + $0x28] sm:$0xff]
    %v711 = vld [vmem:[%s19 + $0x30] sm:$0xff]
    %v712 = vld [vmem:[%s19 + $0x38] sm:$0xff]
    %v713 = vld [vmem:[%s19 + $0x40] sm:$0xff]
    %v714 = vld [vmem:[%s19 + $0x48] sm:$0xff]
    %v715 = vld [vmem:[%s19 + $0x50] sm:$0xff]
    %v716 = vld [vmem:[%s19 + $0x58] sm:$0xff]
    %v717 = vld [vmem:[%s19 + $0x60] sm:$0xff]
    %v718 = vld [vmem:[%s19 + $0x68] sm:$0xff]
    %v719 = vld [vmem:[%s19 + $0x70] sm:$0xff]
    %v720 = vld [vmem:[%s19 + $0x78] sm:$0xff]
    %v721 = vld [vmem:[%s19 + $0x80] sm:$0xff]
    %v722 = vld [vmem:[%s19 + $0x88] sm:$0xff]
    %v723 = vld [vmem:[%s19 + $0x90] sm:$0xff]
    %v724 = vld [vmem:[%s19 + $0x98] sm:$0xff]
    %v725 = vld [vmem:[%s19 + $0xa0] sm:$0xff]
    %v726 = vld [vmem:[%s19 + $0xa8] sm:$0xff]
    %v727 = vld [vmem:[%s19 + $0xb0] sm:$0xff]
    %v728 = vld [vmem:[%s19 + $0xb8] sm:$0xff]
    %v729 = vld [vmem:[%s19 + $0xc0] sm:$0xff]
    %v730 = vld [vmem:[%s19 + $0xc8] sm:$0xff]
    %v731 = vld [vmem:[%s19 + $0xd0] sm:$0xff]
    %v732 = vld [vmem:[%s19 + $0xd8] sm:$0xff]
    %v733 = vld [vmem:[%s19 + $0xe0] sm:$0xff]
    %v734 = vld [vmem:[%s19 + $0xe8] sm:$0xff]
    %v735 = vld [vmem:[%s19 + $0xf0] sm:$0xff]
    %v736 = vld [vmem:[%s19 + $0xf8] sm:$0xff]
    %v737 = vld [vmem:[%s19 + $0x100] sm:$0xff]
    %v738 = vld [vmem:[%s19 + $0x108] sm:$0xff]
    %v739 = vld [vmem:[%s19 + $0x110] sm:$0xff]
    %v740 = vld [vmem:[%s19 + $0x118] sm:$0xff]
    %v741 = vld [vmem:[%s19 + $0x120] sm:$0xff]
    %v742 = vld [vmem:[%s19 + $0x128] sm:$0xff]
    %v743 = vld [vmem:[%s19 + $0x130] sm:$0xff]
    %v744 = vld [vmem:[%s19 + $0x138] sm:$0xff]
    %v745 = vld [vmem:[%s19 + $0x140] sm:$0xff]
    %v746 = vld [vmem:[%s19 + $0x148] sm:$0xff]
    %v747 = vld [vmem:[%s19 + $0x150] sm:$0xff]
    %v748 = vld [vmem:[%s19 + $0x158] sm:$0xff]
    %v749 = vld [vmem:[%s19 + $0x160] sm:$0xff]
    %v750 = vld [vmem:[%s19 + $0x168] sm:$0xff]
    %v751 = vld [vmem:[%s19 + $0x170] sm:$0xff]
    %v752 = vld [vmem:[%s19 + $0x178] sm:$0xff]
    %v753 = vld [vmem:[%s19 + $0x180] sm:$0xff]
    %v754 = vld [vmem:[%s19 + $0x188] sm:$0xff]
    %v755 = vld [vmem:[%s19 + $0x190] sm:$0xff]
    %v756 = vld [vmem:[%s19 + $0x198] sm:$0xff]
    %v757 = vld [vmem:[%s19 + $0x1a0] sm:$0xff]
    %v758 = vld [vmem:[%s19 + $0x1a8] sm:$0xff]
    %v759 = vld [vmem:[%s19 + $0x1b0] sm:$0xff]
    %v760 = vld [vmem:[%s19 + $0x1b8] sm:$0xff]
    %v761 = vld [vmem:[%s19 + $0x1c0] sm:$0xff]
    %v762 = vld [vmem:[%s19 + $0x1c8] sm:$0xff]
    %v763 = vld [vmem:[%s19 + $0x1d0] sm:$0xff]
    %v764 = vld [vmem:[%s19 + $0x1d8] sm:$0xff]
    %v765 = vld [vmem:[%s19 + $0x1e0] sm:$0xff]
    %v766 = vld [vmem:[%s19 + $0x1e8] sm:$0xff]
    %v767 = vld [vmem:[%s19 + $0x1f0] sm:$0xff]
    %v768 = vld [vmem:[%s19 + $0x1f8] sm:$0xff]
    %v769 = vld [vmem:[%s21] sm:$0x3]
    %v771 = vlaneseq
    %v772 = vshrl.u32 %v771, 7
    %v773 = vsub.s32 0, %v772
    %v774 = vrot.slane %v769, %v773
    %v775 = vlaneseq
    %v776 = vshrl.u32 %v775, 7
    %v777 = vsub.s32 1, %v776
    %v778 = vrot.slane %v769, %v777
    %v845 = vunpack.c.l.b16 %v705
    %v846 = vunpack.c.h.b16 %v705
    %v847 = vunpack.c.l.b16 %v706
    %v848 = vunpack.c.h.b16 %v706
    %v849 = vunpack.c.l.b16 %v707
    %v850 = vunpack.c.h.b16 %v707
    %v851 = vunpack.c.l.b16 %v708
    %v852 = vunpack.c.h.b16 %v708
    %v853 = vunpack.c.l.b16 %v709
    %v854 = vunpack.c.h.b16 %v709
    %v855 = vunpack.c.l.b16 %v710
    %v856 = vunpack.c.h.b16 %v710
    %v857 = vunpack.c.l.b16 %v711
    %v858 = vunpack.c.h.b16 %v711
    %v859 = vunpack.c.l.b16 %v712
    %v860 = vunpack.c.h.b16 %v712
    %v861 = vunpack.c.l.b16 %v713
    %v862 = vunpack.c.h.b16 %v713
    %v863 = vunpack.c.l.b16 %v714
    %v864 = vunpack.c.h.b16 %v714
    %v865 = vunpack.c.l.b16 %v715
    %v866 = vunpack.c.h.b16 %v715
    %v867 = vunpack.c.l.b16 %v716
    %v868 = vunpack.c.h.b16 %v716
    %v869 = vunpack.c.l.b16 %v717
    %v870 = vunpack.c.h.b16 %v717
    %v871 = vunpack.c.l.b16 %v718
    %v872 = vunpack.c.h.b16 %v718
    %v873 = vunpack.c.l.b16 %v719
    %v874 = vunpack.c.h.b16 %v719
    %v875 = vunpack.c.l.b16 %v720
    %v876 = vunpack.c.h.b16 %v720
    %v877 = vunpack.c.l.b16 %v721
    %v878 = vunpack.c.h.b16 %v721
    %v879 = vunpack.c.l.b16 %v722
    %v880 = vunpack.c.h.b16 %v722
    %v881 = vunpack.c.l.b16 %v723
    %v882 = vunpack.c.h.b16 %v723
    %v883 = vunpack.c.l.b16 %v724
    %v884 = vunpack.c.h.b16 %v724
    %v885 = vunpack.c.l.b16 %v725
    %v886 = vunpack.c.h.b16 %v725
    %v887 = vunpack.c.l.b16 %v726
    %v888 = vunpack.c.h.b16 %v726
    %v889 = vunpack.c.l.b16 %v727
    %v890 = vunpack.c.h.b16 %v727
    %v891 = vunpack.c.l.b16 %v728
    %v892 = vunpack.c.h.b16 %v728
    %v893 = vunpack.c.l.b16 %v729
    %v894 = vunpack.c.h.b16 %v729
    %v895 = vunpack.c.l.b16 %v730
    %v896 = vunpack.c.h.b16 %v730
    %v897 = vunpack.c.l.b16 %v731
    %v898 = vunpack.c.h.b16 %v731
    %v899 = vunpack.c.l.b16 %v732
    %v900 = vunpack.c.h.b16 %v732
    %v901 = vunpack.c.l.b16 %v733
    %v902 = vunpack.c.h.b16 %v733
    %v903 = vunpack.c.l.b16 %v734
    %v904 = vunpack.c.h.b16 %v734
    %v905 = vunpack.c.l.b16 %v735
    %v906 = vunpack.c.h.b16 %v735
    %v907 = vunpack.c.l.b16 %v736
    %v908 = vunpack.c.h.b16 %v736
    %v909 = vunpack.c.l.b16 %v737
    %v910 = vunpack.c.h.b16 %v737
    %v911 = vunpack.c.l.b16 %v738
    %v912 = vunpack.c.h.b16 %v738
    %v913 = vunpack.c.l.b16 %v739
    %v914 = vunpack.c.h.b16 %v739
    %v915 = vunpack.c.l.b16 %v740
    %v916 = vunpack.c.h.b16 %v740
    %v917 = vunpack.c.l.b16 %v741
    %v918 = vunpack.c.h.b16 %v741
    %v919 = vunpack.c.l.b16 %v742
    %v920 = vunpack.c.h.b16 %v742
    %v921 = vunpack.c.l.b16 %v743
    %v922 = vunpack.c.h.b16 %v743
    %v923 = vunpack.c.l.b16 %v744
    %v924 = vunpack.c.h.b16 %v744
    %v925 = vunpack.c.l.b16 %v745
    %v926 = vunpack.c.h.b16 %v745
    %v927 = vunpack.c.l.b16 %v746
    %v928 = vunpack.c.h.b16 %v746
    %v929 = vunpack.c.l.b16 %v747
    %v930 = vunpack.c.h.b16 %v747
    %v931 = vunpack.c.l.b16 %v748
    %v932 = vunpack.c.h.b16 %v748
    %v933 = vunpack.c.l.b16 %v749
    %v934 = vunpack.c.h.b16 %v749
    %v935 = vunpack.c.l.b16 %v750
    %v936 = vunpack.c.h.b16 %v750
    %v937 = vunpack.c.l.b16 %v751
    %v938 = vunpack.c.h.b16 %v751
    %v939 = vunpack.c.l.b16 %v752
    %v940 = vunpack.c.h.b16 %v752
    %v941 = vunpack.c.l.b16 %v753
    %v942 = vunpack.c.h.b16 %v753
    %v943 = vunpack.c.l.b16 %v754
    %v944 = vunpack.c.h.b16 %v754
    %v945 = vunpack.c.l.b16 %v755
    %v946 = vunpack.c.h.b16 %v755
    %v947 = vunpack.c.l.b16 %v756
    %v948 = vunpack.c.h.b16 %v756
    %v949 = vunpack.c.l.b16 %v757
    %v950 = vunpack.c.h.b16 %v757
    %v951 = vunpack.c.l.b16 %v758
    %v952 = vunpack.c.h.b16 %v758
    %v953 = vunpack.c.l.b16 %v759
    %v954 = vunpack.c.h.b16 %v759
    %v955 = vunpack.c.l.b16 %v760
    %v956 = vunpack.c.h.b16 %v760
    %v957 = vunpack.c.l.b16 %v761
    %v958 = vunpack.c.h.b16 %v761
    %v959 = vunpack.c.l.b16 %v762
    %v960 = vunpack.c.h.b16 %v762
    %v961 = vunpack.c.l.b16 %v763
    %v962 = vunpack.c.h.b16 %v763
    %v963 = vunpack.c.l.b16 %v764
    %v964 = vunpack.c.h.b16 %v764
    %v965 = vunpack.c.l.b16 %v765
    %v966 = vunpack.c.h.b16 %v765
    %v967 = vunpack.c.l.b16 %v766
    %v968 = vunpack.c.h.b16 %v766
    %v969 = vunpack.c.l.b16 %v767
    %v970 = vunpack.c.h.b16 %v767
    %v971 = vunpack.c.l.b16 %v768
    %v972 = vunpack.c.h.b16 %v768
    %v973 = vpack.c.b16 %v847, %v845
    %v974 = vpack.c.b16 %v848, %v846
    %v975 = vpack.c.b16 %v851, %v849
    %v976 = vpack.c.b16 %v852, %v850
    %v977 = vpack.c.b16 %v855, %v853
    %v978 = vpack.c.b16 %v856, %v854
    %v979 = vpack.c.b16 %v859, %v857
    %v980 = vpack.c.b16 %v860, %v858
    %v981 = vpack.c.b16 %v863, %v861
    %v982 = vpack.c.b16 %v864, %v862
    %v983 = vpack.c.b16 %v867, %v865
    %v984 = vpack.c.b16 %v868, %v866
    %v985 = vpack.c.b16 %v871, %v869
    %v986 = vpack.c.b16 %v872, %v870
    %v987 = vpack.c.b16 %v875, %v873
    %v988 = vpack.c.b16 %v876, %v874
    %v989 = vpack.c.b16 %v879, %v877
    %v990 = vpack.c.b16 %v880, %v878
    %v991 = vpack.c.b16 %v883, %v881
    %v992 = vpack.c.b16 %v884, %v882
    %v993 = vpack.c.b16 %v887, %v885
    %v994 = vpack.c.b16 %v888, %v886
    %v995 = vpack.c.b16 %v891, %v889
    %v996 = vpack.c.b16 %v892, %v890
    %v997 = vpack.c.b16 %v895, %v893
    %v998 = vpack.c.b16 %v896, %v894
    %v999 = vpack.c.b16 %v899, %v897
    %v1000 = vpack.c.b16 %v900, %v898
    %v1001 = vpack.c.b16 %v903, %v901
    %v1002 = vpack.c.b16 %v904, %v902
    %v1003 = vpack.c.b16 %v907, %v905
    %v1004 = vpack.c.b16 %v908, %v906
    %v1005 = vpack.c.b16 %v911, %v909
    %v1006 = vpack.c.b16 %v912, %v910
    %v1007 = vpack.c.b16 %v915, %v913
    %v1008 = vpack.c.b16 %v916, %v914
    %v1009 = vpack.c.b16 %v919, %v917
    %v1010 = vpack.c.b16 %v920, %v918
    %v1011 = vpack.c.b16 %v923, %v921
    %v1012 = vpack.c.b16 %v924, %v922
    %v1013 = vpack.c.b16 %v927, %v925
    %v1014 = vpack.c.b16 %v928, %v926
    %v1015 = vpack.c.b16 %v931, %v929
    %v1016 = vpack.c.b16 %v932, %v930
    %v1017 = vpack.c.b16 %v935, %v933
    %v1018 = vpack.c.b16 %v936, %v934
    %v1019 = vpack.c.b16 %v939, %v937
    %v1020 = vpack.c.b16 %v940, %v938
    %v1021 = vpack.c.b16 %v943, %v941
    %v1022 = vpack.c.b16 %v944, %v942
    %v1023 = vpack.c.b16 %v947, %v945
    %v1024 = vpack.c.b16 %v948, %v946
    %v1025 = vpack.c.b16 %v951, %v949
    %v1026 = vpack.c.b16 %v952, %v950
    %v1027 = vpack.c.b16 %v955, %v953
    %v1028 = vpack.c.b16 %v956, %v954
    %v1029 = vpack.c.b16 %v959, %v957
    %v1030 = vpack.c.b16 %v960, %v958
    %v1031 = vpack.c.b16 %v963, %v961
    %v1032 = vpack.c.b16 %v964, %v962
    %v1033 = vpack.c.b16 %v967, %v965
    %v1034 = vpack.c.b16 %v968, %v966
    %v1035 = vpack.c.b16 %v971, %v969
    %v1036 = vpack.c.b16 %v972, %v970
    %1101 = vmatprep.subr.bf16.mxu0 %v988
    %1102 = vmatpush1.bf16.msra.mxu0 %v987
    %1103 = vmatprep.subr.bf16.mxu0 %v986
    %1104 = vmatpush1.bf16.msra.mxu0 %v985
    %1105 = vmatprep.subr.bf16.mxu0 %v984
    %1106 = vmatpush1.bf16.msra.mxu0 %v983
    %1107 = vmatprep.subr.bf16.mxu0 %v982
    %1108 = vmatpush1.bf16.msra.mxu0 %v981
    %1109 = vmatprep.subr.bf16.mxu0 %v980
    %1110 = vmatpush1.bf16.msra.mxu0 %v979
    %1111 = vmatprep.subr.bf16.mxu0 %v978
    %1112 = vmatpush1.bf16.msra.mxu0 %v977
    %1113 = vmatprep.subr.bf16.mxu0 %v976
    %1114 = vmatpush1.bf16.msra.mxu0 %v975
    %1115 = vmatprep.subr.bf16.mxu0 %v974
    %1116 = vmatpush1.bf16.msra.mxu0 %v973
    %1117 = vmatprep.subr.bf16.mxu0 %v1004
    %1118 = vmatpush2.bf16.msra.mxu0 %v1003
    %1119 = vmatprep.subr.bf16.mxu0 %v1002
    %1120 = vmatpush2.bf16.msra.mxu0 %v1001
    %1121 = vmatprep.subr.bf16.mxu0 %v1000
    %1122 = vmatpush2.bf16.msra.mxu0 %v999
    %1123 = vmatprep.subr.bf16.mxu0 %v998
    %1124 = vmatpush2.bf16.msra.mxu0 %v997
    %1125 = vmatprep.subr.bf16.mxu0 %v996
    %1126 = vmatpush2.bf16.msra.mxu0 %v995
    %1127 = vmatprep.subr.bf16.mxu0 %v994
    %1128 = vmatpush2.bf16.msra.mxu0 %v993
    %1129 = vmatprep.subr.bf16.mxu0 %v992
    %1130 = vmatpush2.bf16.msra.mxu0 %v991
    %1131 = vmatprep.subr.bf16.mxu0 %v990
    %1132 = vmatpush2.bf16.msra.mxu0 %v989
    %1133 = vmatprep.mubr.bf16.mxu0 %v702
    %1134 = vmatmul.mubr.bf16.gmra.mxu0 %v701
    %v1135 = vpop.f32.mrf.mxu0
    %v1136 = vadd.f32 %v774, %v1135
    %v1137 = vpop.f32.mrf.mxu0
    %v1138 = vadd.f32 %v778, %v1137
    %v1139 = vpop.f32.mrf.mxu0
    %v1140 = vadd.f32 %v774, %v1139
    %v1141 = vpop.f32.mrf.mxu0
    %v1142 = vadd.f32 %v778, %v1141
    %1143 = vdwg.mxu0
    %1144 = vmatprep.subr.bf16.mxu0 %v1020
    %1145 = vmatpush1.bf16.msra.mxu0 %v1019
    %1146 = vmatprep.subr.bf16.mxu0 %v1018
    %1147 = vmatpush1.bf16.msra.mxu0 %v1017
    %1148 = vmatprep.subr.bf16.mxu0 %v1016
    %1149 = vmatpush1.bf16.msra.mxu0 %v1015
    %1150 = vmatprep.subr.bf16.mxu0 %v1014
    %1151 = vmatpush1.bf16.msra.mxu0 %v1013
    %1152 = vmatprep.subr.bf16.mxu0 %v1012
    %1153 = vmatpush1.bf16.msra.mxu0 %v1011
    %1154 = vmatprep.subr.bf16.mxu0 %v1010
    %1155 = vmatpush1.bf16.msra.mxu0 %v1009
    %1156 = vmatprep.subr.bf16.mxu0 %v1008
    %1157 = vmatpush1.bf16.msra.mxu0 %v1007
    %1158 = vmatprep.subr.bf16.mxu0 %v1006
    %1159 = vmatpush1.bf16.msra.mxu0 %v1005
    %1160 = vmatprep.subr.bf16.mxu0 %v1036
    %1161 = vmatpush2.bf16.msra.mxu0 %v1035
    %1162 = vmatprep.subr.bf16.mxu0 %v1034
    %1163 = vmatpush2.bf16.msra.mxu0 %v1033
    %1164 = vmatprep.subr.bf16.mxu0 %v1032
    %1165 = vmatpush2.bf16.msra.mxu0 %v1031
    %1166 = vmatprep.subr.bf16.mxu0 %v1030
    %1167 = vmatpush2.bf16.msra.mxu0 %v1029
    %1168 = vmatprep.subr.bf16.mxu0 %v1028
    %1169 = vmatpush2.bf16.msra.mxu0 %v1027
    %1170 = vmatprep.subr.bf16.mxu0 %v1026
    %1171 = vmatpush2.bf16.msra.mxu0 %v1025
    %1172 = vmatprep.subr.bf16.mxu0 %v1024
    %1173 = vmatpush2.bf16.msra.mxu0 %v1023
    %1174 = vmatprep.subr.bf16.mxu0 %v1022
    %1175 = vmatpush2.bf16.msra.mxu0 %v1021
    %1176 = vmatprep.mubr.bf16.mxu0 %v704
    %1177 = vmatmul.mubr.bf16.gmra.mxu0 %v703
    %v1178 = vpop.f32.mrf.mxu0
    %v1179 = vadd.f32 %v1136, %v1178
    %v1180 = vpop.f32.mrf.mxu0
    %v1181 = vadd.f32 %v1138, %v1180
    %v1182 = vpop.f32.mrf.mxu0
    %v1183 = vadd.f32 %v1140, %v1182
    %v1184 = vpop.f32.mrf.mxu0
    %v1185 = vadd.f32 %v1142, %v1184
    %1186 = vdwg.mxu0
    %v1187 = vmax.f32 %v1179, 0.0
    %v1188 = vmax.f32 %v1181, 0.0
    %v1189 = vmax.f32 %v1183, 0.0
    %v1190 = vmax.f32 %v1185, 0.0
    %v1191 = vpack.c.bf16 %v1189, %v1187
    %v1192 = vpack.c.bf16 %v1190, %v1188
    %v1193 = vld [vmem:[%s23] sm:$0xf]
    %v1194 = vld [vmem:[%s23 + $0x4] sm:$0xf]
    %v1195 = vld [vmem:[%s23 + $0x8] sm:$0xf]
    %v1196 = vld [vmem:[%s23 + $0xc] sm:$0xf]
    %v1197 = vld [vmem:[%s23 + $0x10] sm:$0xf]
    %v1198 = vld [vmem:[%s23 + $0x14] sm:$0xf]
    %v1199 = vld [vmem:[%s23 + $0x18] sm:$0xf]
    %v1200 = vld [vmem:[%s23 + $0x1c] sm:$0xf]
    %v1201 = vld [vmem:[%s23 + $0x20] sm:$0xf]
    %v1202 = vld [vmem:[%s23 + $0x24] sm:$0xf]
    %v1203 = vld [vmem:[%s23 + $0x28] sm:$0xf]
    %v1204 = vld [vmem:[%s23 + $0x2c] sm:$0xf]
    %v1205 = vld [vmem:[%s23 + $0x30] sm:$0xf]
    %v1206 = vld [vmem:[%s23 + $0x34] sm:$0xf]
    %v1207 = vld [vmem:[%s23 + $0x38] sm:$0xf]
    %v1208 = vld [vmem:[%s23 + $0x3c] sm:$0xf]
    %v1209 = vld [vmem:[%s23 + $0x40] sm:$0xf]
    %v1210 = vld [vmem:[%s23 + $0x44] sm:$0xf]
    %v1211 = vld [vmem:[%s23 + $0x48] sm:$0xf]
    %v1212 = vld [vmem:[%s23 + $0x4c] sm:$0xf]
    %v1213 = vld [vmem:[%s23 + $0x50] sm:$0xf]
    %v1214 = vld [vmem:[%s23 + $0x54] sm:$0xf]
    %v1215 = vld [vmem:[%s23 + $0x58] sm:$0xf]
    %v1216 = vld [vmem:[%s23 + $0x5c] sm:$0xf]
    %v1217 = vld [vmem:[%s23 + $0x60] sm:$0xf]
    %v1218 = vld [vmem:[%s23 + $0x64] sm:$0xf]
    %v1219 = vld [vmem:[%s23 + $0x68] sm:$0xf]
    %v1220 = vld [vmem:[%s23 + $0x6c] sm:$0xf]
    %v1221 = vld [vmem:[%s23 + $0x70] sm:$0xf]
    %v1222 = vld [vmem:[%s23 + $0x74] sm:$0xf]
    %v1223 = vld [vmem:[%s23 + $0x78] sm:$0xf]
    %v1224 = vld [vmem:[%s23 + $0x7c] sm:$0xf]
    %v1225 = vld [vmem:[%s25] sm:$0x1]
    %v1227 = vlaneseq
    %v1228 = vshrl.u32 %v1227, 7
    %v1229 = vsub.s32 0, %v1228
    %v1230 = vrot.slane %v1225, %v1229
    %v1264 = vunpack.c.l.b16 %v1193
    %v1265 = vunpack.c.l.b16 %v1194
    %v1266 = vunpack.c.l.b16 %v1195
    %v1267 = vunpack.c.l.b16 %v1196
    %v1268 = vunpack.c.l.b16 %v1197
    %v1269 = vunpack.c.l.b16 %v1198
    %v1270 = vunpack.c.l.b16 %v1199
    %v1271 = vunpack.c.l.b16 %v1200
    %v1272 = vunpack.c.l.b16 %v1201
    %v1273 = vunpack.c.l.b16 %v1202
    %v1274 = vunpack.c.l.b16 %v1203
    %v1275 = vunpack.c.l.b16 %v1204
    %v1276 = vunpack.c.l.b16 %v1205
    %v1277 = vunpack.c.l.b16 %v1206
    %v1278 = vunpack.c.l.b16 %v1207
    %v1279 = vunpack.c.l.b16 %v1208
    %v1280 = vunpack.c.l.b16 %v1209
    %v1281 = vunpack.c.l.b16 %v1210
    %v1282 = vunpack.c.l.b16 %v1211
    %v1283 = vunpack.c.l.b16 %v1212
    %v1284 = vunpack.c.l.b16 %v1213
    %v1285 = vunpack.c.l.b16 %v1214
    %v1286 = vunpack.c.l.b16 %v1215
    %v1287 = vunpack.c.l.b16 %v1216
    %v1288 = vunpack.c.l.b16 %v1217
    %v1289 = vunpack.c.l.b16 %v1218
    %v1290 = vunpack.c.l.b16 %v1219
    %v1291 = vunpack.c.l.b16 %v1220
    %v1292 = vunpack.c.l.b16 %v1221
    %v1293 = vunpack.c.l.b16 %v1222
    %v1294 = vunpack.c.l.b16 %v1223
    %v1295 = vunpack.c.l.b16 %v1224
    %v1296 = vpack.c.b16 %v1265, %v1264
    %v1297 = vpack.c.b16 %v1267, %v1266
    %v1298 = vpack.c.b16 %v1269, %v1268
    %v1299 = vpack.c.b16 %v1271, %v1270
    %v1300 = vpack.c.b16 %v1273, %v1272
    %v1301 = vpack.c.b16 %v1275, %v1274
    %v1302 = vpack.c.b16 %v1277, %v1276
    %v1303 = vpack.c.b16 %v1279, %v1278
    %v1304 = vpack.c.b16 %v1281, %v1280
    %v1305 = vpack.c.b16 %v1283, %v1282
    %v1306 = vpack.c.b16 %v1285, %v1284
    %v1307 = vpack.c.b16 %v1287, %v1286
    %v1308 = vpack.c.b16 %v1289, %v1288
    %v1309 = vpack.c.b16 %v1291, %v1290
    %v1310 = vpack.c.b16 %v1293, %v1292
    %v1311 = vpack.c.b16 %v1295, %v1294
    %1328 = vmatprep.subr.bf16.mxu0 0
    %1329 = vmatpush1.bf16.msra.mxu0 %v1303
    %1330 = vmatprep.subr.bf16.mxu0 0
    %1331 = vmatpush1.bf16.msra.mxu0 %v1302
    %1332 = vmatprep.subr.bf16.mxu0 0
    %1333 = vmatpush1.bf16.msra.mxu0 %v1301
    %1334 = vmatprep.subr.bf16.mxu0 0
    %1335 = vmatpush1.bf16.msra.mxu0 %v1300
    %1336 = vmatprep.subr.bf16.mxu0 0
    %1337 = vmatpush1.bf16.msra.mxu0 %v1299
    %1338 = vmatprep.subr.bf16.mxu0 0
    %1339 = vmatpush1.bf16.msra.mxu0 %v1298
    %1340 = vmatprep.subr.bf16.mxu0 0
    %1341 = vmatpush1.bf16.msra.mxu0 %v1297
    %1342 = vmatprep.subr.bf16.mxu0 0
    %1343 = vmatpush1.bf16.msra.mxu0 %v1296
    %1344 = vmatprep.subr.bf16.mxu0 0
    %1345 = vmatpush2.bf16.msra.mxu0 %v1311
    %1346 = vmatprep.subr.bf16.mxu0 0
    %1347 = vmatpush2.bf16.msra.mxu0 %v1310
    %1348 = vmatprep.subr.bf16.mxu0 0
    %1349 = vmatpush2.bf16.msra.mxu0 %v1309
    %1350 = vmatprep.subr.bf16.mxu0 0
    %1351 = vmatpush2.bf16.msra.mxu0 %v1308
    %1352 = vmatprep.subr.bf16.mxu0 0
    %1353 = vmatpush2.bf16.msra.mxu0 %v1307
    %1354 = vmatprep.subr.bf16.mxu0 0
    %1355 = vmatpush2.bf16.msra.mxu0 %v1306
    %1356 = vmatprep.subr.bf16.mxu0 0
    %1357 = vmatpush2.bf16.msra.mxu0 %v1305
    %1358 = vmatprep.subr.bf16.mxu0 0
    %1359 = vmatpush2.bf16.msra.mxu0 %v1304
    %1360 = vmatprep.mubr.bf16.mxu0 %v1192
    %1361 = vmatmul.mubr.bf16.gmra.mxu0 %v1191
    %v1362 = vpop.f32.mrf.mxu0
    %v1363 = vadd.f32 %v1230, %v1362
    %v1364 = vpop.f32.mrf.mxu0
    %v1365 = vpop.f32.mrf.mxu0
    %v1366 = vadd.f32 %v1230, %v1365
    %v1367 = vpop.f32.mrf.mxu0
    %1368 = vdwg.mxu0
    %v1369 = vld [vmem:[%s27] sm:$0xf]
    %v1370 = vld [vmem:[%s27 + $0x4] sm:$0xf]
    %v1371 = vld [vmem:[%s27 + $0x8] sm:$0xf]
    %v1372 = vld [vmem:[%s27 + $0xc] sm:$0xf]
    %v1373 = vld [vmem:[%s27 + $0x10] sm:$0xf]
    %v1374 = vld [vmem:[%s27 + $0x14] sm:$0xf]
    %v1375 = vld [vmem:[%s27 + $0x18] sm:$0xf]
    %v1376 = vld [vmem:[%s27 + $0x1c] sm:$0xf]
    %v1377 = vld [vmem:[%s27 + $0x20] sm:$0xf]
    %v1378 = vld [vmem:[%s27 + $0x24] sm:$0xf]
    %v1379 = vld [vmem:[%s27 + $0x28] sm:$0xf]
    %v1380 = vld [vmem:[%s27 + $0x2c] sm:$0xf]
    %v1381 = vld [vmem:[%s27 + $0x30] sm:$0xf]
    %v1382 = vld [vmem:[%s27 + $0x34] sm:$0xf]
    %v1383 = vld [vmem:[%s27 + $0x38] sm:$0xf]
    %v1384 = vld [vmem:[%s27 + $0x3c] sm:$0xf]
    %v1385 = vld [vmem:[%s27 + $0x40] sm:$0xf]
    %v1386 = vld [vmem:[%s27 + $0x44] sm:$0xf]
    %v1387 = vld [vmem:[%s27 + $0x48] sm:$0xf]
    %v1388 = vld [vmem:[%s27 + $0x4c] sm:$0xf]
    %v1389 = vld [vmem:[%s27 + $0x50] sm:$0xf]
    %v1390 = vld [vmem:[%s27 + $0x54] sm:$0xf]
    %v1391 = vld [vmem:[%s27 + $0x58] sm:$0xf]
    %v1392 = vld [vmem:[%s27 + $0x5c] sm:$0xf]
    %v1393 = vld [vmem:[%s27 + $0x60] sm:$0xf]
    %v1394 = vld [vmem:[%s27 + $0x64] sm:$0xf]
    %v1395 = vld [vmem:[%s27 + $0x68] sm:$0xf]
    %v1396 = vld [vmem:[%s27 + $0x6c] sm:$0xf]
    %v1397 = vld [vmem:[%s27 + $0x70] sm:$0xf]
    %v1398 = vld [vmem:[%s27 + $0x74] sm:$0xf]
    %v1399 = vld [vmem:[%s27 + $0x78] sm:$0xf]
    %v1400 = vld [vmem:[%s27 + $0x7c] sm:$0xf]
    %v1401 = vld [vmem:[%s29] sm:$0x1]
    %v1403 = vlaneseq
    %v1404 = vshrl.u32 %v1403, 7
    %v1405 = vsub.s32 0, %v1404
    %v1406 = vrot.slane %v1401, %v1405
    %v1440 = vunpack.c.l.b16 %v1369
    %v1441 = vunpack.c.l.b16 %v1370
    %v1442 = vunpack.c.l.b16 %v1371
    %v1443 = vunpack.c.l.b16 %v1372
    %v1444 = vunpack.c.l.b16 %v1373
    %v1445 = vunpack.c.l.b16 %v1374
    %v1446 = vunpack.c.l.b16 %v1375
    %v1447 = vunpack.c.l.b16 %v1376
    %v1448 = vunpack.c.l.b16 %v1377
    %v1449 = vunpack.c.l.b16 %v1378
    %v1450 = vunpack.c.l.b16 %v1379
    %v1451 = vunpack.c.l.b16 %v1380
    %v1452 = vunpack.c.l.b16 %v1381
    %v1453 = vunpack.c.l.b16 %v1382
    %v1454 = vunpack.c.l.b16 %v1383
    %v1455 = vunpack.c.l.b16 %v1384
    %v1456 = vunpack.c.l.b16 %v1385
    %v1457 = vunpack.c.l.b16 %v1386
    %v1458 = vunpack.c.l.b16 %v1387
    %v1459 = vunpack.c.l.b16 %v1388
    %v1460 = vunpack.c.l.b16 %v1389
    %v1461 = vunpack.c.l.b16 %v1390
    %v1462 = vunpack.c.l.b16 %v1391
    %v1463 = vunpack.c.l.b16 %v1392
    %v1464 = vunpack.c.l.b16 %v1393
    %v1465 = vunpack.c.l.b16 %v1394
    %v1466 = vunpack.c.l.b16 %v1395
    %v1467 = vunpack.c.l.b16 %v1396
    %v1468 = vunpack.c.l.b16 %v1397
    %v1469 = vunpack.c.l.b16 %v1398
    %v1470 = vunpack.c.l.b16 %v1399
    %v1471 = vunpack.c.l.b16 %v1400
    %v1472 = vpack.c.b16 %v1441, %v1440
    %v1473 = vpack.c.b16 %v1443, %v1442
    %v1474 = vpack.c.b16 %v1445, %v1444
    %v1475 = vpack.c.b16 %v1447, %v1446
    %v1476 = vpack.c.b16 %v1449, %v1448
    %v1477 = vpack.c.b16 %v1451, %v1450
    %v1478 = vpack.c.b16 %v1453, %v1452
    %v1479 = vpack.c.b16 %v1455, %v1454
    %v1480 = vpack.c.b16 %v1457, %v1456
    %v1481 = vpack.c.b16 %v1459, %v1458
    %v1482 = vpack.c.b16 %v1461, %v1460
    %v1483 = vpack.c.b16 %v1463, %v1462
    %v1484 = vpack.c.b16 %v1465, %v1464
    %v1485 = vpack.c.b16 %v1467, %v1466
    %v1486 = vpack.c.b16 %v1469, %v1468
    %v1487 = vpack.c.b16 %v1471, %v1470
    %1504 = vmatprep.subr.bf16.mxu0 0
    %1505 = vmatpush1.bf16.msra.mxu0 %v1479
    %1506 = vmatprep.subr.bf16.mxu0 0
    %1507 = vmatpush1.bf16.msra.mxu0 %v1478
    %1508 = vmatprep.subr.bf16.mxu0 0
    %1509 = vmatpush1.bf16.msra.mxu0 %v1477
    %1510 = vmatprep.subr.bf16.mxu0 0
    %1511 = vmatpush1.bf16.msra.mxu0 %v1476
    %1512 = vmatprep.subr.bf16.mxu0 0
    %1513 = vmatpush1.bf16.msra.mxu0 %v1475
    %1514 = vmatprep.subr.bf16.mxu0 0
    %1515 = vmatpush1.bf16.msra.mxu0 %v1474
    %1516 = vmatprep.subr.bf16.mxu0 0
    %1517 = vmatpush1.bf16.msra.mxu0 %v1473
    %1518 = vmatprep.subr.bf16.mxu0 0
    %1519 = vmatpush1.bf16.msra.mxu0 %v1472
    %1520 = vmatprep.subr.bf16.mxu0 0
    %1521 = vmatpush2.bf16.msra.mxu0 %v1487
    %1522 = vmatprep.subr.bf16.mxu0 0
    %1523 = vmatpush2.bf16.msra.mxu0 %v1486
    %1524 = vmatprep.subr.bf16.mxu0 0
    %1525 = vmatpush2.bf16.msra.mxu0 %v1485
    %1526 = vmatprep.subr.bf16.mxu0 0
    %1527 = vmatpush2.bf16.msra.mxu0 %v1484
    %1528 = vmatprep.subr.bf16.mxu0 0
    %1529 = vmatpush2.bf16.msra.mxu0 %v1483
    %1530 = vmatprep.subr.bf16.mxu0 0
    %1531 = vmatpush2.bf16.msra.mxu0 %v1482
    %1532 = vmatprep.subr.bf16.mxu0 0
    %1533 = vmatpush2.bf16.msra.mxu0 %v1481
    %1534 = vmatprep.subr.bf16.mxu0 0
    %1535 = vmatpush2.bf16.msra.mxu0 %v1480
    %1536 = vmatprep.mubr.bf16.mxu0 %v1192
    %1537 = vmatmul.mubr.bf16.gmra.mxu0 %v1191
    %v1538 = vpop.f32.mrf.mxu0
    %v1539 = vadd.f32 %v1406, %v1538
    %v1540 = vpop.f32.mrf.mxu0
    %v1541 = vpop.f32.mrf.mxu0
    %v1542 = vadd.f32 %v1406, %v1541
    %v1543 = vpop.f32.mrf.mxu0
    %1544 = vdwg.mxu0
    %vm1545 = vcmask 523264
    %1546 = vst.msk [vmem:[#allocation2] sm:$0xff] %vm1545, %v1363
    %1547 = vst.msk [vmem:[#allocation2 + $0x8] sm:$0xff] %vm1545, %v1366
    %v1549 = vrot.slane %v1539, 1
    %1550 = vrot.lane.b32.xlu0 %v1549, 12
    %v1551 = vpop.permute.xlu0 %1550
    %v1553 = vrot.slane %v1539, 2
    %1554 = vrot.lane.b32.xlu0 %v1553, 24
    %v1555 = vpop.permute.xlu0 %1554
    %v1557 = vrot.slane %v1539, 3
    %1558 = vrot.lane.b32.xlu0 %v1557, 36
    %v1559 = vpop.permute.xlu0 %1558
    %v1561 = vrot.slane %v1539, 4
    %1562 = vrot.lane.b32.xlu0 %v1561, 48
    %v1563 = vpop.permute.xlu0 %1562
    %v1565 = vrot.slane %v1539, 5
    %1566 = vrot.lane.b32.xlu0 %v1565, 60
    %v1567 = vpop.permute.xlu0 %1566
    %v1569 = vrot.slane %v1539, 6
    %1570 = vrot.lane.b32.xlu0 %v1569, 72
    %v1571 = vpop.permute.xlu0 %1570
    %v1573 = vrot.slane %v1539, 7
    %1574 = vrot.lane.b32.xlu0 %v1573, 84
    %v1575 = vpop.permute.xlu0 %1574
    %vm1577 = vcmask 97280
    %v1578 = vsel %vm1577, %v1539, %v1551
    %vm1579 = vcmask 195584
    %v1580 = vsel %vm1579, %v1578, %v1555
    %vm1581 = vcmask 293888
    %v1582 = vsel %vm1581, %v1580, %v1559
    %vm1583 = vcmask 392192
    %v1584 = vsel %vm1583, %v1582, %v1563
    %vm1585 = vcmask 490496
    %v1586 = vsel %vm1585, %v1584, %v1567
    %vm1587 = vcmask 588800
    %v1588 = vsel %vm1587, %v1586, %v1571
    %vm1589 = vcmask 687104
    %v1590 = vsel %vm1589, %v1588, %v1575
    %v1592 = vrot.slane %v1542, 1
    %1593 = vrot.lane.b32.xlu0 %v1592, 12
    %v1594 = vpop.permute.xlu0 %1593
    %v1596 = vrot.slane %v1542, 2
    %1597 = vrot.lane.b32.xlu0 %v1596, 24
    %v1598 = vpop.permute.xlu0 %1597
    %v1600 = vrot.slane %v1542, 3
    %1601 = vrot.lane.b32.xlu0 %v1600, 36
    %v1602 = vpop.permute.xlu0 %1601
    %v1604 = vrot.slane %v1542, 4
    %1605 = vrot.lane.b32.xlu0 %v1604, 48
    %v1606 = vpop.permute.xlu0 %1605
    %v1608 = vrot.slane %v1542, 5
    %1609 = vrot.lane.b32.xlu0 %v1608, 60
    %v1610 = vpop.permute.xlu0 %1609
    %v1612 = vrot.slane %v1542, 6
    %1613 = vrot.lane.b32.xlu0 %v1612, 72
    %v1614 = vpop.permute.xlu0 %1613
    %v1616 = vrot.slane %v1542, 7
    %1617 = vrot.lane.b32.xlu0 %v1616, 84
    %v1618 = vpop.permute.xlu0 %1617
    %v1620 = vsel %vm1577, %v1542, %v1594
    %v1621 = vsel %vm1579, %v1620, %v1598
    %v1622 = vsel %vm1581, %v1621, %v1602
    %v1623 = vsel %vm1583, %v1622, %v1606
    %v1624 = vsel %vm1585, %v1623, %v1610
    %v1625 = vsel %vm1587, %v1624, %v1614
    %v1626 = vsel %vm1589, %v1625, %v1618
    %v1628 = vrot.slane %v1626, 7
    %vm1630 = vcmask 1040384
    %v1631 = vsel %vm1630, %v1590, %v1628
    %v1632 = vld [vmem:[%s3] sm:$0x3]
    %v1633 = vpack.c.bf16 %v1632, %v1632
    %v1634 = vld [vmem:[%s31] sm:$0xff]
    %v1635 = vld [vmem:[%s31 + $0x8] sm:$0xf]
    %v1636 = vld [vmem:[%s31 + $0xc] sm:$0xff]
    %v1637 = vld [vmem:[%s31 + $0x14] sm:$0xf]
    %v1638 = vld [vmem:[%s31 + $0x18] sm:$0xff]
    %v1639 = vld [vmem:[%s31 + $0x20] sm:$0xf]
    %v1640 = vld [vmem:[%s31 + $0x24] sm:$0xff]
    %v1641 = vld [vmem:[%s31 + $0x2c] sm:$0xf]
    %v1642 = vld [vmem:[%s31 + $0x30] sm:$0xff]
    %v1643 = vld [vmem:[%s31 + $0x38] sm:$0xf]
    %v1644 = vld [vmem:[%s31 + $0x3c] sm:$0xff]
    %v1645 = vld [vmem:[%s31 + $0x44] sm:$0xf]
    %v1646 = vld [vmem:[%s33] sm:$0x7]
    %v1648 = vlaneseq
    %v1649 = vshrl.u32 %v1648, 7
    %v1650 = vsub.s32 0, %v1649
    %v1651 = vrot.slane %v1646, %v1650
    %v1652 = vlaneseq
    %v1653 = vshrl.u32 %v1652, 7
    %v1654 = vsub.s32 1, %v1653
    %v1655 = vrot.slane %v1646, %v1654
    %v1656 = vlaneseq
    %v1657 = vshrl.u32 %v1656, 7
    %v1658 = vsub.s32 2, %v1657
    %v1659 = vrot.slane %v1646, %v1658
    %v1675 = vunpack.c.l.b16 %v1634
    %v1676 = vunpack.c.h.b16 %v1634
    %v1677 = vunpack.c.l.b16 %v1635
    %v1678 = vunpack.c.l.b16 %v1636
    %v1679 = vunpack.c.h.b16 %v1636
    %v1680 = vunpack.c.l.b16 %v1637
    %v1681 = vunpack.c.l.b16 %v1638
    %v1682 = vunpack.c.h.b16 %v1638
    %v1683 = vunpack.c.l.b16 %v1639
    %v1684 = vunpack.c.l.b16 %v1640
    %v1685 = vunpack.c.h.b16 %v1640
    %v1686 = vunpack.c.l.b16 %v1641
    %v1687 = vunpack.c.l.b16 %v1642
    %v1688 = vunpack.c.h.b16 %v1642
    %v1689 = vunpack.c.l.b16 %v1643
    %v1690 = vunpack.c.l.b16 %v1644
    %v1691 = vunpack.c.h.b16 %v1644
    %v1692 = vunpack.c.l.b16 %v1645
    %v1693 = vpack.c.b16 %v1678, %v1675
    %v1694 = vpack.c.b16 %v1679, %v1676
    %v1695 = vpack.c.b16 %v1680, %v1677
    %v1696 = vpack.c.b16 %v1684, %v1681
    %v1697 = vpack.c.b16 %v1685, %v1682
    %v1698 = vpack.c.b16 %v1686, %v1683
    %v1699 = vpack.c.b16 %v1690, %v1687
    %v1700 = vpack.c.b16 %v1691, %v1688
    %v1701 = vpack.c.b16 %v1692, %v1689
    %v1712 = vsel %vm1583, %v1633, 0
    %1714 = vmatprep.subr.bf16.mxu0 0
    %1715 = vmatpush1.bf16.msra.mxu0 0
    %1716 = vmatprep.subr.bf16.mxu0 0
    %1717 = vmatpush1.bf16.msra.mxu0 0
    %1718 = vmatprep.subr.bf16.mxu0 0
    %1719 = vmatpush1.bf16.msra.mxu0 0
    %1720 = vmatprep.subr.bf16.mxu0 0
    %1721 = vmatpush1.bf16.msra.mxu0 0
    %1722 = vmatprep.subr.bf16.mxu0 0
    %1723 = vmatpush1.bf16.msra.mxu0 0
    %1724 = vmatprep.subr.bf16.mxu0 %v1700
    %1725 = vmatpush1.bf16.msra.mxu0 %v1699
    %1726 = vmatprep.subr.bf16.mxu0 %v1697
    %1727 = vmatpush1.bf16.msra.mxu0 %v1696
    %1728 = vmatprep.subr.bf16.mxu0 %v1694
    %1729 = vmatpush1.bf16.msra.mxu0 %v1693
    %1730 = vmatprep.subr.bf16.mxu0 0
    %1731 = vmatpush2.bf16.msra.mxu0 0
    %1732 = vmatprep.subr.bf16.mxu0 0
    %1733 = vmatpush2.bf16.msra.mxu0 0
    %1734 = vmatprep.subr.bf16.mxu0 0
    %1735 = vmatpush2.bf16.msra.mxu0 0
    %1736 = vmatprep.subr.bf16.mxu0 0
    %1737 = vmatpush2.bf16.msra.mxu0 0
    %1738 = vmatprep.subr.bf16.mxu0 0
    %1739 = vmatpush2.bf16.msra.mxu0 0
    %1740 = vmatprep.subr.bf16.mxu0 0
    %1741 = vmatpush2.bf16.msra.mxu0 0
    %1742 = vmatprep.subr.bf16.mxu0 0
    %1743 = vmatpush2.bf16.msra.mxu0 0
    %1744 = vmatprep.subr.bf16.mxu0 0
    %1745 = vmatpush2.bf16.msra.mxu0 0
    %1746 = vmatprep.mubr.bf16.mxu0 0
    %1747 = vmatmul.mubr.bf16.gmra.mxu0 %v1712
    %v1748 = vpop.f32.mrf.mxu0
    %v1749 = vadd.f32 %v1651, %v1748
    %v1750 = vpop.f32.mrf.mxu0
    %v1751 = vadd.f32 %v1655, %v1750
    %v1752 = vpop.f32.mrf.mxu0
    %v1753 = vpop.f32.mrf.mxu0
    %1754 = vdwg.mxu0
    %1755 = vmatprep.subr.bf16.mxu0 0
    %1756 = vmatpush1.bf16.msra.mxu0 0
    %1757 = vmatprep.subr.bf16.mxu0 0
    %1758 = vmatpush1.bf16.msra.mxu0 0
    %1759 = vmatprep.subr.bf16.mxu0 0
    %1760 = vmatpush1.bf16.msra.mxu0 0
    %1761 = vmatprep.subr.bf16.mxu0 0
    %1762 = vmatpush1.bf16.msra.mxu0 0
    %1763 = vmatprep.subr.bf16.mxu0 0
    %1764 = vmatpush1.bf16.msra.mxu0 0
    %1765 = vmatprep.subr.bf16.mxu0 0
    %1766 = vmatpush1.bf16.msra.mxu0 %v1701
    %1767 = vmatprep.subr.bf16.mxu0 0
    %1768 = vmatpush1.bf16.msra.mxu0 %v1698
    %1769 = vmatprep.subr.bf16.mxu0 0
    %1770 = vmatpush1.bf16.msra.mxu0 %v1695
    %1771 = vmatprep.subr.bf16.mxu0 0
    %1772 = vmatpush2.bf16.msra.mxu0 0
    %1773 = vmatprep.subr.bf16.mxu0 0
    %1774 = vmatpush2.bf16.msra.mxu0 0
    %1775 = vmatprep.subr.bf16.mxu0 0
    %1776 = vmatpush2.bf16.msra.mxu0 0
    %1777 = vmatprep.subr.bf16.mxu0 0
    %1778 = vmatpush2.bf16.msra.mxu0 0
    %1779 = vmatprep.subr.bf16.mxu0 0
    %1780 = vmatpush2.bf16.msra.mxu0 0
    %1781 = vmatprep.subr.bf16.mxu0 0
    %1782 = vmatpush2.bf16.msra.mxu0 0
    %1783 = vmatprep.subr.bf16.mxu0 0
    %1784 = vmatpush2.bf16.msra.mxu0 0
    %1785 = vmatprep.subr.bf16.mxu0 0
    %1786 = vmatpush2.bf16.msra.mxu0 0
    %1787 = vmatprep.mubr.bf16.mxu0 0
    %1788 = vmatmul.mubr.bf16.gmra.mxu0 %v1712
    %v1789 = vpop.f32.mrf.mxu0
    %v1790 = vadd.f32 %v1659, %v1789
    %v1791 = vpop.f32.mrf.mxu0
    %v1792 = vpop.f32.mrf.mxu0
    %v1793 = vpop.f32.mrf.mxu0
    %1794 = vdwg.mxu0
    %v1795 = vmax.f32 %v1749, 0.0
    %v1796 = vmax.f32 %v1751, 0.0
    %v1797 = vmax.f32 %v1790, 0.0
    %v1798 = vpack.c.bf16 %v1795, %v1795
    %v1799 = vpack.c.bf16 %v1796, %v1796
    %v1800 = vpack.c.bf16 %v1797, %v1797
    %v1801 = vld [vmem:[%s35] sm:$0xf]
    %v1802 = vld [vmem:[%s35 + $0x4] sm:$0xf]
    %v1803 = vld [vmem:[%s35 + $0x8] sm:$0xf]
    %v1804 = vld [vmem:[%s35 + $0xc] sm:$0xf]
    %v1805 = vld [vmem:[%s35 + $0x10] sm:$0xf]
    %v1806 = vld [vmem:[%s35 + $0x14] sm:$0xf]
    %v1807 = vld [vmem:[%s35 + $0x18] sm:$0xf]
    %v1808 = vld [vmem:[%s35 + $0x1c] sm:$0xf]
    %v1809 = vld [vmem:[%s35 + $0x20] sm:$0xf]
    %v1810 = vld [vmem:[%s35 + $0x24] sm:$0xf]
    %v1811 = vld [vmem:[%s35 + $0x28] sm:$0xf]
    %v1812 = vld [vmem:[%s35 + $0x2c] sm:$0xf]
    %v1813 = vld [vmem:[%s35 + $0x30] sm:$0xf]
    %v1814 = vld [vmem:[%s35 + $0x34] sm:$0xf]
    %v1815 = vld [vmem:[%s35 + $0x38] sm:$0xf]
    %v1816 = vld [vmem:[%s35 + $0x3c] sm:$0xf]
    %v1817 = vld [vmem:[%s35 + $0x40] sm:$0xf]
    %v1818 = vld [vmem:[%s35 + $0x44] sm:$0xf]
    %v1819 = vld [vmem:[%s35 + $0x48] sm:$0xf]
    %v1820 = vld [vmem:[%s35 + $0x4c] sm:$0xf]
    %v1821 = vld [vmem:[%s35 + $0x50] sm:$0xf]
    %v1822 = vld [vmem:[%s35 + $0x54] sm:$0xf]
    %v1823 = vld [vmem:[%s35 + $0x58] sm:$0xf]
    %v1824 = vld [vmem:[%s35 + $0x5c] sm:$0xf]
    %v1825 = vld [vmem:[%s35 + $0x60] sm:$0xf]
    %v1826 = vld [vmem:[%s35 + $0x64] sm:$0xf]
    %v1827 = vld [vmem:[%s35 + $0x68] sm:$0xf]
    %v1828 = vld [vmem:[%s35 + $0x6c] sm:$0xf]
    %v1829 = vld [vmem:[%s35 + $0x70] sm:$0xf]
    %v1830 = vld [vmem:[%s35 + $0x74] sm:$0xf]
    %v1831 = vld [vmem:[%s35 + $0x78] sm:$0xf]
    %v1832 = vld [vmem:[%s35 + $0x7c] sm:$0xf]
    %v1833 = vld [vmem:[%s35 + $0x80] sm:$0xf]
    %v1834 = vld [vmem:[%s35 + $0x84] sm:$0xf]
    %v1835 = vld [vmem:[%s35 + $0x88] sm:$0xf]
    %v1836 = vld [vmem:[%s35 + $0x8c] sm:$0xf]
    %v1837 = vld [vmem:[%s35 + $0x90] sm:$0xf]
    %v1838 = vld [vmem:[%s35 + $0x94] sm:$0xf]
    %v1839 = vld [vmem:[%s35 + $0x98] sm:$0xf]
    %v1840 = vld [vmem:[%s35 + $0x9c] sm:$0xf]
    %v1841 = vld [vmem:[%s35 + $0xa0] sm:$0xf]
    %v1842 = vld [vmem:[%s35 + $0xa4] sm:$0xf]
    %v1843 = vld [vmem:[%s35 + $0xa8] sm:$0xf]
    %v1844 = vld [vmem:[%s35 + $0xac] sm:$0xf]
    %v1845 = vld [vmem:[%s35 + $0xb0] sm:$0xf]
    %v1846 = vld [vmem:[%s35 + $0xb4] sm:$0xf]
    %v1847 = vld [vmem:[%s35 + $0xb8] sm:$0xf]
    %v1848 = vld [vmem:[%s35 + $0xbc] sm:$0xf]
    %v1849 = vld [vmem:[%s37] sm:$0x1]
    %v1851 = vlaneseq
    %v1852 = vshrl.u32 %v1851, 7
    %v1853 = vsub.s32 0, %v1852
    %v1854 = vrot.slane %v1849, %v1853
    %v1904 = vunpack.c.l.b16 %v1801
    %v1905 = vunpack.c.l.b16 %v1802
    %v1906 = vunpack.c.l.b16 %v1803
    %v1907 = vunpack.c.l.b16 %v1804
    %v1908 = vunpack.c.l.b16 %v1805
    %v1909 = vunpack.c.l.b16 %v1806
    %v1910 = vunpack.c.l.b16 %v1807
    %v1911 = vunpack.c.l.b16 %v1808
    %v1912 = vunpack.c.l.b16 %v1809
    %v1913 = vunpack.c.l.b16 %v1810
    %v1914 = vunpack.c.l.b16 %v1811
    %v1915 = vunpack.c.l.b16 %v1812
    %v1916 = vunpack.c.l.b16 %v1813
    %v1917 = vunpack.c.l.b16 %v1814
    %v1918 = vunpack.c.l.b16 %v1815
    %v1919 = vunpack.c.l.b16 %v1816
    %v1920 = vunpack.c.l.b16 %v1817
    %v1921 = vunpack.c.l.b16 %v1818
    %v1922 = vunpack.c.l.b16 %v1819
    %v1923 = vunpack.c.l.b16 %v1820
    %v1924 = vunpack.c.l.b16 %v1821
    %v1925 = vunpack.c.l.b16 %v1822
    %v1926 = vunpack.c.l.b16 %v1823
    %v1927 = vunpack.c.l.b16 %v1824
    %v1928 = vunpack.c.l.b16 %v1825
    %v1929 = vunpack.c.l.b16 %v1826
    %v1930 = vunpack.c.l.b16 %v1827
    %v1931 = vunpack.c.l.b16 %v1828
    %v1932 = vunpack.c.l.b16 %v1829
    %v1933 = vunpack.c.l.b16 %v1830
    %v1934 = vunpack.c.l.b16 %v1831
    %v1935 = vunpack.c.l.b16 %v1832
    %v1936 = vunpack.c.l.b16 %v1833
    %v1937 = vunpack.c.l.b16 %v1834
    %v1938 = vunpack.c.l.b16 %v1835
    %v1939 = vunpack.c.l.b16 %v1836
    %v1940 = vunpack.c.l.b16 %v1837
    %v1941 = vunpack.c.l.b16 %v1838
    %v1942 = vunpack.c.l.b16 %v1839
    %v1943 = vunpack.c.l.b16 %v1840
    %v1944 = vunpack.c.l.b16 %v1841
    %v1945 = vunpack.c.l.b16 %v1842
    %v1946 = vunpack.c.l.b16 %v1843
    %v1947 = vunpack.c.l.b16 %v1844
    %v1948 = vunpack.c.l.b16 %v1845
    %v1949 = vunpack.c.l.b16 %v1846
    %v1950 = vunpack.c.l.b16 %v1847
    %v1951 = vunpack.c.l.b16 %v1848
    %v1952 = vpack.c.b16 %v1905, %v1904
    %v1953 = vpack.c.b16 %v1907, %v1906
    %v1954 = vpack.c.b16 %v1909, %v1908
    %v1955 = vpack.c.b16 %v1911, %v1910
    %v1956 = vpack.c.b16 %v1913, %v1912
    %v1957 = vpack.c.b16 %v1915, %v1914
    %v1958 = vpack.c.b16 %v1917, %v1916
    %v1959 = vpack.c.b16 %v1919, %v1918
    %v1960 = vpack.c.b16 %v1921, %v1920
    %v1961 = vpack.c.b16 %v1923, %v1922
    %v1962 = vpack.c.b16 %v1925, %v1924
    %v1963 = vpack.c.b16 %v1927, %v1926
    %v1964 = vpack.c.b16 %v1929, %v1928
    %v1965 = vpack.c.b16 %v1931, %v1930
    %v1966 = vpack.c.b16 %v1933, %v1932
    %v1967 = vpack.c.b16 %v1935, %v1934
    %v1968 = vpack.c.b16 %v1937, %v1936
    %v1969 = vpack.c.b16 %v1939, %v1938
    %v1970 = vpack.c.b16 %v1941, %v1940
    %v1971 = vpack.c.b16 %v1943, %v1942
    %v1972 = vpack.c.b16 %v1945, %v1944
    %v1973 = vpack.c.b16 %v1947, %v1946
    %v1974 = vpack.c.b16 %v1949, %v1948
    %v1975 = vpack.c.b16 %v1951, %v1950
    %2000 = vmatprep.subr.bf16.mxu0 0
    %2001 = vmatpush1.bf16.msra.mxu0 %v1959
    %2002 = vmatprep.subr.bf16.mxu0 0
    %2003 = vmatpush1.bf16.msra.mxu0 %v1958
    %2004 = vmatprep.subr.bf16.mxu0 0
    %2005 = vmatpush1.bf16.msra.mxu0 %v1957
    %2006 = vmatprep.subr.bf16.mxu0 0
    %2007 = vmatpush1.bf16.msra.mxu0 %v1956
    %2008 = vmatprep.subr.bf16.mxu0 0
    %2009 = vmatpush1.bf16.msra.mxu0 %v1955
    %2010 = vmatprep.subr.bf16.mxu0 0
    %2011 = vmatpush1.bf16.msra.mxu0 %v1954
    %2012 = vmatprep.subr.bf16.mxu0 0
    %2013 = vmatpush1.bf16.msra.mxu0 %v1953
    %2014 = vmatprep.subr.bf16.mxu0 0
    %2015 = vmatpush1.bf16.msra.mxu0 %v1952
    %2016 = vmatprep.subr.bf16.mxu0 0
    %2017 = vmatpush2.bf16.msra.mxu0 %v1967
    %2018 = vmatprep.subr.bf16.mxu0 0
    %2019 = vmatpush2.bf16.msra.mxu0 %v1966
    %2020 = vmatprep.subr.bf16.mxu0 0
    %2021 = vmatpush2.bf16.msra.mxu0 %v1965
    %2022 = vmatprep.subr.bf16.mxu0 0
    %2023 = vmatpush2.bf16.msra.mxu0 %v1964
    %2024 = vmatprep.subr.bf16.mxu0 0
    %2025 = vmatpush2.bf16.msra.mxu0 %v1963
    %2026 = vmatprep.subr.bf16.mxu0 0
    %2027 = vmatpush2.bf16.msra.mxu0 %v1962
    %2028 = vmatprep.subr.bf16.mxu0 0
    %2029 = vmatpush2.bf16.msra.mxu0 %v1961
    %2030 = vmatprep.subr.bf16.mxu0 0
    %2031 = vmatpush2.bf16.msra.mxu0 %v1960
    %2032 = vmatprep.mubr.bf16.mxu0 %v1799
    %2033 = vmatmul.mubr.bf16.gmra.mxu0 %v1798
    %v2034 = vpop.f32.mrf.mxu0
    %v2035 = vadd.f32 %v1854, %v2034
    %v2036 = vpop.f32.mrf.mxu0
    %v2037 = vpop.f32.mrf.mxu0
    %v2038 = vpop.f32.mrf.mxu0
    %2039 = vdwg.mxu0
    %2040 = vmatprep.subr.bf16.mxu0 0
    %2041 = vmatpush1.bf16.msra.mxu0 %v1975
    %2042 = vmatprep.subr.bf16.mxu0 0
    %2043 = vmatpush1.bf16.msra.mxu0 %v1974
    %2044 = vmatprep.subr.bf16.mxu0 0
    %2045 = vmatpush1.bf16.msra.mxu0 %v1973
    %2046 = vmatprep.subr.bf16.mxu0 0
    %2047 = vmatpush1.bf16.msra.mxu0 %v1972
    %2048 = vmatprep.subr.bf16.mxu0 0
    %2049 = vmatpush1.bf16.msra.mxu0 %v1971
    %2050 = vmatprep.subr.bf16.mxu0 0
    %2051 = vmatpush1.bf16.msra.mxu0 %v1970
    %2052 = vmatprep.subr.bf16.mxu0 0
    %2053 = vmatpush1.bf16.msra.mxu0 %v1969
    %2054 = vmatprep.subr.bf16.mxu0 0
    %2055 = vmatpush1.bf16.msra.mxu0 %v1968
    %2056 = vmatprep.subr.bf16.mxu0 0
    %2057 = vmatpush2.bf16.msra.mxu0 0
    %2058 = vmatprep.subr.bf16.mxu0 0
    %2059 = vmatpush2.bf16.msra.mxu0 0
    %2060 = vmatprep.subr.bf16.mxu0 0
    %2061 = vmatpush2.bf16.msra.mxu0 0
    %2062 = vmatprep.subr.bf16.mxu0 0
    %2063 = vmatpush2.bf16.msra.mxu0 0
    %2064 = vmatprep.subr.bf16.mxu0 0
    %2065 = vmatpush2.bf16.msra.mxu0 0
    %2066 = vmatprep.subr.bf16.mxu0 0
    %2067 = vmatpush2.bf16.msra.mxu0 0
    %2068 = vmatprep.subr.bf16.mxu0 0
    %2069 = vmatpush2.bf16.msra.mxu0 0
    %2070 = vmatprep.subr.bf16.mxu0 0
    %2071 = vmatpush2.bf16.msra.mxu0 0
    %2072 = vmatprep.mubr.bf16.mxu0 0
    %2073 = vmatmul.mubr.bf16.gmra.mxu0 %v1800
    %v2074 = vpop.f32.mrf.mxu0
    %v2075 = vadd.f32 %v2035, %v2074
    %v2076 = vpop.f32.mrf.mxu0
    %v2077 = vpop.f32.mrf.mxu0
    %v2078 = vpop.f32.mrf.mxu0
    %2079 = vdwg.mxu0
    %v2080 = vadd.f32 %v2075, %v1632
    %v2081 = vld [vmem:[%s5] sm:$0x3]
    %v2082 = vld [vmem:[%s9] sm:$0x3]
    %2084 = vrot.lane.b32.xlu0 %v2082, 6
    %v2085 = vpop.permute.xlu0 %2084
    %2088 = vrot.lane.b32.xlu0 %v2080, 38
    %v2089 = vpop.permute.xlu0 %2088
    %2092 = vrot.lane.b32.xlu0 %v1631, 86
    %v2093 = vpop.permute.xlu0 %2092
    %vm2095 = vcmask 48128
    %v2096 = vsel %vm2095, %v2081, %v2085
    %vm2097 = vcmask 310272
    %v2098 = vsel %vm2097, %v2096, %v2089
    %vm2099 = vcmask 703488
    %v2100 = vsel %vm2099, %v2098, %v2093
    %v2101 = vpack.c.bf16 %v2100, %v2100
    %v2102 = vpack.c.bf16 %v2093, %v2093
    %v2103 = vld [vmem:[%s39] sm:$0xf]
    %v2104 = vld [vmem:[%s39 + $0x4] sm:$0xf]
    %v2105 = vld [vmem:[%s39 + $0x8] sm:$0xf]
    %v2106 = vld [vmem:[%s39 + $0xc] sm:$0xf]
    %v2107 = vld [vmem:[%s39 + $0x10] sm:$0xf]
    %v2108 = vld [vmem:[%s39 + $0x14] sm:$0xf]
    %v2109 = vld [vmem:[%s39 + $0x18] sm:$0xf]
    %v2110 = vld [vmem:[%s39 + $0x1c] sm:$0xf]
    %v2111 = vld [vmem:[%s39 + $0x20] sm:$0xf]
    %v2112 = vld [vmem:[%s39 + $0x24] sm:$0xf]
    %v2113 = vld [vmem:[%s39 + $0x28] sm:$0xf]
    %v2114 = vld [vmem:[%s39 + $0x2c] sm:$0xf]
    %v2115 = vld [vmem:[%s39 + $0x30] sm:$0xf]
    %v2116 = vld [vmem:[%s39 + $0x34] sm:$0xf]
    %v2117 = vld [vmem:[%s39 + $0x38] sm:$0xf]
    %v2118 = vld [vmem:[%s39 + $0x3c] sm:$0xf]
    %v2119 = vld [vmem:[%s39 + $0x40] sm:$0xf]
    %v2120 = vld [vmem:[%s39 + $0x44] sm:$0xf]
    %v2121 = vld [vmem:[%s39 + $0x48] sm:$0xf]
    %v2122 = vld [vmem:[%s39 + $0x4c] sm:$0xf]
    %v2123 = vld [vmem:[%s39 + $0x50] sm:$0xf]
    %v2124 = vld [vmem:[%s39 + $0x54] sm:$0xf]
    %v2125 = vld [vmem:[%s39 + $0x58] sm:$0x7]
    %v2126 = vld [vmem:[%s41] sm:$0x1]
    %v2128 = vlaneseq
    %v2129 = vshrl.u32 %v2128, 7
    %v2130 = vsub.s32 0, %v2129
    %v2131 = vrot.slane %v2126, %v2130
    %v2156 = vunpack.c.l.b16 %v2103
    %v2157 = vunpack.c.l.b16 %v2104
    %v2158 = vunpack.c.l.b16 %v2105
    %v2159 = vunpack.c.l.b16 %v2106
    %v2160 = vunpack.c.l.b16 %v2107
    %v2161 = vunpack.c.l.b16 %v2108
    %v2162 = vunpack.c.l.b16 %v2109
    %v2163 = vunpack.c.l.b16 %v2110
    %v2164 = vunpack.c.l.b16 %v2111
    %v2165 = vunpack.c.l.b16 %v2112
    %v2166 = vunpack.c.l.b16 %v2113
    %v2167 = vunpack.c.l.b16 %v2114
    %v2168 = vunpack.c.l.b16 %v2115
    %v2169 = vunpack.c.l.b16 %v2116
    %v2170 = vunpack.c.l.b16 %v2117
    %v2171 = vunpack.c.l.b16 %v2118
    %v2172 = vunpack.c.l.b16 %v2119
    %v2173 = vunpack.c.l.b16 %v2120
    %v2174 = vunpack.c.l.b16 %v2121
    %v2175 = vunpack.c.l.b16 %v2122
    %v2176 = vunpack.c.l.b16 %v2123
    %v2177 = vunpack.c.l.b16 %v2124
    %v2178 = vunpack.c.l.b16 %v2125
    %v2179 = vpack.c.b16 %v2157, %v2156
    %v2180 = vpack.c.b16 %v2159, %v2158
    %v2181 = vpack.c.b16 %v2161, %v2160
    %v2182 = vpack.c.b16 %v2163, %v2162
    %v2183 = vpack.c.b16 %v2165, %v2164
    %v2184 = vpack.c.b16 %v2167, %v2166
    %v2185 = vpack.c.b16 %v2169, %v2168
    %v2186 = vpack.c.b16 %v2171, %v2170
    %v2187 = vpack.c.b16 %v2173, %v2172
    %v2188 = vpack.c.b16 %v2175, %v2174
    %v2189 = vpack.c.b16 %v2177, %v2176
    %v2190 = vpack.c.b16 %v2178, %v2178
    %vm2202 = vcmask 441344
    %v2204 = vsel %vm2202, %v2102, 0
    %vm2206 = vcmask 1042432
    %v2208 = vsel %vm2206, %v2190, 0
    %2210 = vmatprep.subr.bf16.mxu0 0
    %2211 = vmatpush1.bf16.msra.mxu0 %v2186
    %2212 = vmatprep.subr.bf16.mxu0 0
    %2213 = vmatpush1.bf16.msra.mxu0 %v2185
    %2214 = vmatprep.subr.bf16.mxu0 0
    %2215 = vmatpush1.bf16.msra.mxu0 %v2184
    %2216 = vmatprep.subr.bf16.mxu0 0
    %2217 = vmatpush1.bf16.msra.mxu0 %v2183
    %2218 = vmatprep.subr.bf16.mxu0 0
    %2219 = vmatpush1.bf16.msra.mxu0 %v2182
    %2220 = vmatprep.subr.bf16.mxu0 0
    %2221 = vmatpush1.bf16.msra.mxu0 %v2181
    %2222 = vmatprep.subr.bf16.mxu0 0
    %2223 = vmatpush1.bf16.msra.mxu0 %v2180
    %2224 = vmatprep.subr.bf16.mxu0 0
    %2225 = vmatpush1.bf16.msra.mxu0 %v2179
    %2226 = vmatprep.subr.bf16.mxu0 0
    %2227 = vmatpush2.bf16.msra.mxu0 0
    %2228 = vmatprep.subr.bf16.mxu0 0
    %2229 = vmatpush2.bf16.msra.mxu0 0
    %2230 = vmatprep.subr.bf16.mxu0 0
    %2231 = vmatpush2.bf16.msra.mxu0 0
    %2232 = vmatprep.subr.bf16.mxu0 0
    %2233 = vmatpush2.bf16.msra.mxu0 0
    %2234 = vmatprep.subr.bf16.mxu0 0
    %2235 = vmatpush2.bf16.msra.mxu0 %v2208
    %2236 = vmatprep.subr.bf16.mxu0 0
    %2237 = vmatpush2.bf16.msra.mxu0 %v2189
    %2238 = vmatprep.subr.bf16.mxu0 0
    %2239 = vmatpush2.bf16.msra.mxu0 %v2188
    %2240 = vmatprep.subr.bf16.mxu0 0
    %2241 = vmatpush2.bf16.msra.mxu0 %v2187
    %2242 = vmatprep.mubr.bf16.mxu0 %v2204
    %2243 = vmatmul.mubr.bf16.gmra.mxu0 %v2101
    %v2244 = vpop.f32.mrf.mxu0
    %v2245 = vadd.f32 %v2131, %v2244
    %v2246 = vpop.f32.mrf.mxu0
    %v2247 = vpop.f32.mrf.mxu0
    %v2248 = vpop.f32.mrf.mxu0
    %2249 = vdwg.mxu0
    %v2250 = vmax.f32 %v2245, 0.0
    %v2251 = vpack.c.bf16 %v2250, %v2250
    %v2252 = vld [vmem:[%s43] sm:$0xf]
    %v2253 = vld [vmem:[%s43 + $0x4] sm:$0xf]
    %v2254 = vld [vmem:[%s43 + $0x8] sm:$0xf]
    %v2255 = vld [vmem:[%s43 + $0xc] sm:$0xf]
    %v2256 = vld [vmem:[%s45] sm:$0x1]
    %v2258 = vlaneseq
    %v2259 = vshrl.u32 %v2258, 7
    %v2260 = vsub.s32 0, %v2259
    %v2261 = vrot.slane %v2256, %v2260
    %v2267 = vunpack.c.l.b16 %v2252
    %v2268 = vunpack.c.l.b16 %v2253
    %v2269 = vunpack.c.l.b16 %v2254
    %v2270 = vunpack.c.l.b16 %v2255
    %v2271 = vpack.c.b16 %v2268, %v2267
    %v2272 = vpack.c.b16 %v2270, %v2269
    %vm2275 = vcmask 261120
    %v2277 = vsel %vm2275, %v2251, 0
    %2279 = vmatprep.subr.bf16.mxu0 0
    %2280 = vmatpush1.bf16.msra.mxu0 0
    %2281 = vmatprep.subr.bf16.mxu0 0
    %2282 = vmatpush1.bf16.msra.mxu0 0
    %2283 = vmatprep.subr.bf16.mxu0 0
    %2284 = vmatpush1.bf16.msra.mxu0 0
    %2285 = vmatprep.subr.bf16.mxu0 0
    %2286 = vmatpush1.bf16.msra.mxu0 0
    %2287 = vmatprep.subr.bf16.mxu0 0
    %2288 = vmatpush1.bf16.msra.mxu0 0
    %2289 = vmatprep.subr.bf16.mxu0 0
    %2290 = vmatpush1.bf16.msra.mxu0 0
    %2291 = vmatprep.subr.bf16.mxu0 0
    %2292 = vmatpush1.bf16.msra.mxu0 %v2272
    %2293 = vmatprep.subr.bf16.mxu0 0
    %2294 = vmatpush1.bf16.msra.mxu0 %v2271
    %2295 = vmatprep.subr.bf16.mxu0 0
    %2296 = vmatpush2.bf16.msra.mxu0 0
    %2297 = vmatprep.subr.bf16.mxu0 0
    %2298 = vmatpush2.bf16.msra.mxu0 0
    %2299 = vmatprep.subr.bf16.mxu0 0
    %2300 = vmatpush2.bf16.msra.mxu0 0
    %2301 = vmatprep.subr.bf16.mxu0 0
    %2302 = vmatpush2.bf16.msra.mxu0 0
    %2303 = vmatprep.subr.bf16.mxu0 0
    %2304 = vmatpush2.bf16.msra.mxu0 0
    %2305 = vmatprep.subr.bf16.mxu0 0
    %2306 = vmatpush2.bf16.msra.mxu0 0
    %2307 = vmatprep.subr.bf16.mxu0 0
    %2308 = vmatpush2.bf16.msra.mxu0 0
    %2309 = vmatprep.subr.bf16.mxu0 0
    %2310 = vmatpush2.bf16.msra.mxu0 0
    %2311 = vmatprep.mubr.bf16.mxu0 0
    %2312 = vmatmul.mubr.bf16.gmra.mxu0 %v2277
    %v2313 = vpop.f32.mrf.mxu0
    %v2314 = vadd.f32 %v2261, %v2313
    %v2315 = vpop.f32.mrf.mxu0
    %v2316 = vpop.f32.mrf.mxu0
    %v2317 = vpop.f32.mrf.mxu0
    %2318 = vdwg.mxu0
    %v2319 = vld [vmem:[%s7] sm:$0x3]
    %v2320 = vmul.f32 %v2314, 0.5
    %v2321 = vmul.f32 %v2320, 1.442695
    %v2322 = vpow.pop %v2321
    %v2323 = vmul.f32 %v2319, %v2322
    %v2324 = vadd.f32 %v2314, %v2323
    %v2325 = vld [vmem:[%s11] sm:$0x3]
    %v2326 = vadd.f32 %v2324, %v2325
    %2328 = vrot.lane.b32.xlu0 %v2326, 6
    %v2329 = vpop.permute.xlu0 %2328
    %2331 = vrot.lane.b32.xlu0 %v1631, 38
    %v2332 = vpop.permute.xlu0 %2331
    %v2334 = vsel %vm2095, %v2081, %v2329
    %v2335 = vsel %vm2097, %v2334, %v2332
    %v2336 = vpack.c.bf16 %v2335, %v2335
    %v2337 = vpack.c.bf16 %v2332, %v2332
    %v2338 = vld [vmem:[%s47] sm:$0xf]
    %v2339 = vld [vmem:[%s47 + $0x4] sm:$0xf]
    %v2340 = vld [vmem:[%s47 + $0x8] sm:$0xf]
    %v2341 = vld [vmem:[%s47 + $0xc] sm:$0xf]
    %v2342 = vld [vmem:[%s47 + $0x10] sm:$0xf]
    %v2343 = vld [vmem:[%s47 + $0x14] sm:$0xf]
    %v2344 = vld [vmem:[%s47 + $0x18] sm:$0xf]
    %v2345 = vld [vmem:[%s47 + $0x1c] sm:$0xf]
    %v2346 = vld [vmem:[%s47 + $0x20] sm:$0xf]
    %v2347 = vld [vmem:[%s47 + $0x24] sm:$0xf]
    %v2348 = vld [vmem:[%s47 + $0x28] sm:$0xf]
    %v2349 = vld [vmem:[%s47 + $0x2c] sm:$0xf]
    %v2350 = vld [vmem:[%s47 + $0x30] sm:$0xf]
    %v2351 = vld [vmem:[%s47 + $0x34] sm:$0xf]
    %v2352 = vld [vmem:[%s47 + $0x38] sm:$0xf]
    %v2353 = vld [vmem:[%s47 + $0x3c] sm:$0xf]
    %v2354 = vld [vmem:[%s47 + $0x40] sm:$0x7]
    %v2355 = vld [vmem:[%s49] sm:$0x1]
    %v2357 = vlaneseq
    %v2358 = vshrl.u32 %v2357, 7
    %v2359 = vsub.s32 0, %v2358
    %v2360 = vrot.slane %v2355, %v2359
    %v2379 = vunpack.c.l.b16 %v2338
    %v2380 = vunpack.c.l.b16 %v2339
    %v2381 = vunpack.c.l.b16 %v2340
    %v2382 = vunpack.c.l.b16 %v2341
    %v2383 = vunpack.c.l.b16 %v2342
    %v2384 = vunpack.c.l.b16 %v2343
    %v2385 = vunpack.c.l.b16 %v2344
    %v2386 = vunpack.c.l.b16 %v2345
    %v2387 = vunpack.c.l.b16 %v2346
    %v2388 = vunpack.c.l.b16 %v2347
    %v2389 = vunpack.c.l.b16 %v2348
    %v2390 = vunpack.c.l.b16 %v2349
    %v2391 = vunpack.c.l.b16 %v2350
    %v2392 = vunpack.c.l.b16 %v2351
    %v2393 = vunpack.c.l.b16 %v2352
    %v2394 = vunpack.c.l.b16 %v2353
    %v2395 = vunpack.c.l.b16 %v2354
    %v2396 = vpack.c.b16 %v2380, %v2379
    %v2397 = vpack.c.b16 %v2382, %v2381
    %v2398 = vpack.c.b16 %v2384, %v2383
    %v2399 = vpack.c.b16 %v2386, %v2385
    %v2400 = vpack.c.b16 %v2388, %v2387
    %v2401 = vpack.c.b16 %v2390, %v2389
    %v2402 = vpack.c.b16 %v2392, %v2391
    %v2403 = vpack.c.b16 %v2394, %v2393
    %v2404 = vpack.c.b16 %v2395, %v2395
    %v2414 = vsel %vm2095, %v2337, 0
    %v2417 = vsel %vm2206, %v2404, 0
    %2419 = vmatprep.subr.bf16.mxu0 0
    %2420 = vmatpush1.bf16.msra.mxu0 %v2403
    %2421 = vmatprep.subr.bf16.mxu0 0
    %2422 = vmatpush1.bf16.msra.mxu0 %v2402
    %2423 = vmatprep.subr.bf16.mxu0 0
    %2424 = vmatpush1.bf16.msra.mxu0 %v2401
    %2425 = vmatprep.subr.bf16.mxu0 0
    %2426 = vmatpush1.bf16.msra.mxu0 %v2400
    %2427 = vmatprep.subr.bf16.mxu0 0
    %2428 = vmatpush1.bf16.msra.mxu0 %v2399
    %2429 = vmatprep.subr.bf16.mxu0 0
    %2430 = vmatpush1.bf16.msra.mxu0 %v2398
    %2431 = vmatprep.subr.bf16.mxu0 0
    %2432 = vmatpush1.bf16.msra.mxu0 %v2397
    %2433 = vmatprep.subr.bf16.mxu0 0
    %2434 = vmatpush1.bf16.msra.mxu0 %v2396
    %2435 = vmatprep.subr.bf16.mxu0 0
    %2436 = vmatpush2.bf16.msra.mxu0 0
    %2437 = vmatprep.subr.bf16.mxu0 0
    %2438 = vmatpush2.bf16.msra.mxu0 0
    %2439 = vmatprep.subr.bf16.mxu0 0
    %2440 = vmatpush2.bf16.msra.mxu0 0
    %2441 = vmatprep.subr.bf16.mxu0 0
    %2442 = vmatpush2.bf16.msra.mxu0 0
    %2443 = vmatprep.subr.bf16.mxu0 0
    %2444 = vmatpush2.bf16.msra.mxu0 0
    %2445 = vmatprep.subr.bf16.mxu0 0
    %2446 = vmatpush2.bf16.msra.mxu0 0
    %2447 = vmatprep.subr.bf16.mxu0 0
    %2448 = vmatpush2.bf16.msra.mxu0 0
    %2449 = vmatprep.subr.bf16.mxu0 0
    %2450 = vmatpush2.bf16.msra.mxu0 %v2417
    %2451 = vmatprep.mubr.bf16.mxu0 %v2414
    %2452 = vmatmul.mubr.bf16.gmra.mxu0 %v2336
    %v2453 = vpop.f32.mrf.mxu0
    %v2454 = vadd.f32 %v2360, %v2453
    %v2455 = vpop.f32.mrf.mxu0
    %v2456 = vpop.f32.mrf.mxu0
    %v2457 = vpop.f32.mrf.mxu0
    %2458 = vdwg.mxu0
    %v2459 = vmax.f32 %v2454, 0.0
    %v2460 = vpack.c.bf16 %v2459, %v2459
    %v2461 = vld [vmem:[%s51] sm:$0xf]
    %v2462 = vld [vmem:[%s51 + $0x4] sm:$0xf]
    %v2463 = vld [vmem:[%s51 + $0x8] sm:$0xf]
    %v2464 = vld [vmem:[%s51 + $0xc] sm:$0xf]
    %v2465 = vld [vmem:[%s53] sm:$0x1]
    %v2467 = vlaneseq
    %v2468 = vshrl.u32 %v2467, 7
    %v2469 = vsub.s32 0, %v2468
    %v2470 = vrot.slane %v2465, %v2469
    %v2476 = vunpack.c.l.b16 %v2461
    %v2477 = vunpack.c.l.b16 %v2462
    %v2478 = vunpack.c.l.b16 %v2463
    %v2479 = vunpack.c.l.b16 %v2464
    %v2480 = vpack.c.b16 %v2477, %v2476
    %v2481 = vpack.c.b16 %v2479, %v2478
    %v2485 = vsel %vm2275, %v2460, 0
    %2487 = vmatprep.subr.bf16.mxu0 0
    %2488 = vmatpush1.bf16.msra.mxu0 0
    %2489 = vmatprep.subr.bf16.mxu0 0
    %2490 = vmatpush1.bf16.msra.mxu0 0
    %2491 = vmatprep.subr.bf16.mxu0 0
    %2492 = vmatpush1.bf16.msra.mxu0 0
    %2493 = vmatprep.subr.bf16.mxu0 0
    %2494 = vmatpush1.bf16.msra.mxu0 0
    %2495 = vmatprep.subr.bf16.mxu0 0
    %2496 = vmatpush1.bf16.msra.mxu0 0
    %2497 = vmatprep.subr.bf16.mxu0 0
    %2498 = vmatpush1.bf16.msra.mxu0 0
    %2499 = vmatprep.subr.bf16.mxu0 0
    %2500 = vmatpush1.bf16.msra.mxu0 %v2481
    %2501 = vmatprep.subr.bf16.mxu0 0
    %2502 = vmatpush1.bf16.msra.mxu0 %v2480
    %2503 = vmatprep.subr.bf16.mxu0 0
    %2504 = vmatpush2.bf16.msra.mxu0 0
    %2505 = vmatprep.subr.bf16.mxu0 0
    %2506 = vmatpush2.bf16.msra.mxu0 0
    %2507 = vmatprep.subr.bf16.mxu0 0
    %2508 = vmatpush2.bf16.msra.mxu0 0
    %2509 = vmatprep.subr.bf16.mxu0 0
    %2510 = vmatpush2.bf16.msra.mxu0 0
    %2511 = vmatprep.subr.bf16.mxu0 0
    %2512 = vmatpush2.bf16.msra.mxu0 0
    %2513 = vmatprep.subr.bf16.mxu0 0
    %2514 = vmatpush2.bf16.msra.mxu0 0
    %2515 = vmatprep.subr.bf16.mxu0 0
    %2516 = vmatpush2.bf16.msra.mxu0 0
    %2517 = vmatprep.subr.bf16.mxu0 0
    %2518 = vmatpush2.bf16.msra.mxu0 0
    %2519 = vmatprep.mubr.bf16.mxu0 0
    %2520 = vmatmul.mubr.bf16.gmra.mxu0 %v2485
    %v2521 = vpop.f32.mrf.mxu0
    %v2522 = vadd.f32 %v2470, %v2521
    %v2523 = vpop.f32.mrf.mxu0
    %v2524 = vpop.f32.mrf.mxu0
    %v2525 = vpop.f32.mrf.mxu0
    %2526 = vdwg.mxu0
    %v2527 = vxor.u32 %v2522, 2147483648
    %v2528 = vmul.f32 %v2527, 1.442695
    %v2529 = vpow.pop %v2528
    %v2530 = vadd.f32 %v2529, 1.0
    %v2531 = vrcp.pop %v2530
    %v2532 = vmul.f32 1.0, %v2531
    %v2533 = vpack.c.bf16 %v2532, %v2532
    %v2534 = vld [vmem:[%s55] sm:$0xff]
    %v2535 = vld [vmem:[%s55 + $0x8] sm:$0xf]
    %v2536 = vld [vmem:[%s55 + $0xc] sm:$0xff]
    %v2537 = vld [vmem:[%s55 + $0x14] sm:$0xf]
    %v2538 = vld [vmem:[%s55 + $0x18] sm:$0xff]
    %v2539 = vld [vmem:[%s55 + $0x20] sm:$0xf]
    %v2540 = vld [vmem:[%s55 + $0x24] sm:$0xff]
    %v2541 = vld [vmem:[%s55 + $0x2c] sm:$0xf]
    %v2542 = vld [vmem:[%s55 + $0x30] sm:$0xff]
    %v2543 = vld [vmem:[%s55 + $0x38] sm:$0xf]
    %v2544 = vld [vmem:[%s55 + $0x3c] sm:$0xff]
    %v2545 = vld [vmem:[%s55 + $0x44] sm:$0xf]
    %v2546 = vld [vmem:[%s57] sm:$0x7]
    %v2548 = vlaneseq
    %v2549 = vshrl.u32 %v2548, 7
    %v2550 = vsub.s32 0, %v2549
    %v2551 = vrot.slane %v2546, %v2550
    %v2552 = vlaneseq
    %v2553 = vshrl.u32 %v2552, 7
    %v2554 = vsub.s32 1, %v2553
    %v2555 = vrot.slane %v2546, %v2554
    %v2556 = vlaneseq
    %v2557 = vshrl.u32 %v2556, 7
    %v2558 = vsub.s32 2, %v2557
    %v2559 = vrot.slane %v2546, %v2558
    %v2575 = vunpack.c.l.b16 %v2534
    %v2576 = vunpack.c.h.b16 %v2534
    %v2577 = vunpack.c.l.b16 %v2535
    %v2578 = vunpack.c.l.b16 %v2536
    %v2579 = vunpack.c.h.b16 %v2536
    %v2580 = vunpack.c.l.b16 %v2537
    %v2581 = vunpack.c.l.b16 %v2538
    %v2582 = vunpack.c.h.b16 %v2538
    %v2583 = vunpack.c.l.b16 %v2539
    %v2584 = vunpack.c.l.b16 %v2540
    %v2585 = vunpack.c.h.b16 %v2540
    %v2586 = vunpack.c.l.b16 %v2541
    %v2587 = vunpack.c.l.b16 %v2542
    %v2588 = vunpack.c.h.b16 %v2542
    %v2589 = vunpack.c.l.b16 %v2543
    %v2590 = vunpack.c.l.b16 %v2544
    %v2591 = vunpack.c.h.b16 %v2544
    %v2592 = vunpack.c.l.b16 %v2545
    %v2593 = vpack.c.b16 %v2578, %v2575
    %v2594 = vpack.c.b16 %v2579, %v2576
    %v2595 = vpack.c.b16 %v2580, %v2577
    %v2596 = vpack.c.b16 %v2584, %v2581
    %v2597 = vpack.c.b16 %v2585, %v2582
    %v2598 = vpack.c.b16 %v2586, %v2583
    %v2599 = vpack.c.b16 %v2590, %v2587
    %v2600 = vpack.c.b16 %v2591, %v2588
    %v2601 = vpack.c.b16 %v2592, %v2589
    %v2612 = vsel %vm1583, %v2533, 0
    %2614 = vmatprep.subr.bf16.mxu0 0
    %2615 = vmatpush1.bf16.msra.mxu0 0
    %2616 = vmatprep.subr.bf16.mxu0 0
    %2617 = vmatpush1.bf16.msra.mxu0 0
    %2618 = vmatprep.subr.bf16.mxu0 0
    %2619 = vmatpush1.bf16.msra.mxu0 0
    %2620 = vmatprep.subr.bf16.mxu0 0
    %2621 = vmatpush1.bf16.msra.mxu0 0
    %2622 = vmatprep.subr.bf16.mxu0 0
    %2623 = vmatpush1.bf16.msra.mxu0 0
    %2624 = vmatprep.subr.bf16.mxu0 %v2600
    %2625 = vmatpush1.bf16.msra.mxu0 %v2599
    %2626 = vmatprep.subr.bf16.mxu0 %v2597
    %2627 = vmatpush1.bf16.msra.mxu0 %v2596
    %2628 = vmatprep.subr.bf16.mxu0 %v2594
    %2629 = vmatpush1.bf16.msra.mxu0 %v2593
    %2630 = vmatprep.subr.bf16.mxu0 0
    %2631 = vmatpush2.bf16.msra.mxu0 0
    %2632 = vmatprep.subr.bf16.mxu0 0
    %2633 = vmatpush2.bf16.msra.mxu0 0
    %2634 = vmatprep.subr.bf16.mxu0 0
    %2635 = vmatpush2.bf16.msra.mxu0 0
    %2636 = vmatprep.subr.bf16.mxu0 0
    %2637 = vmatpush2.bf16.msra.mxu0 0
    %2638 = vmatprep.subr.bf16.mxu0 0
    %2639 = vmatpush2.bf16.msra.mxu0 0
    %2640 = vmatprep.subr.bf16.mxu0 0
    %2641 = vmatpush2.bf16.msra.mxu0 0
    %2642 = vmatprep.subr.bf16.mxu0 0
    %2643 = vmatpush2.bf16.msra.mxu0 0
    %2644 = vmatprep.subr.bf16.mxu0 0
    %2645 = vmatpush2.bf16.msra.mxu0 0
    %2646 = vmatprep.mubr.bf16.mxu0 0
    %2647 = vmatmul.mubr.bf16.gmra.mxu0 %v2612
    %v2648 = vpop.f32.mrf.mxu0
    %v2649 = vadd.f32 %v2551, %v2648
    %v2650 = vpop.f32.mrf.mxu0
    %v2651 = vadd.f32 %v2555, %v2650
    %v2652 = vpop.f32.mrf.mxu0
    %v2653 = vpop.f32.mrf.mxu0
    %2654 = vdwg.mxu0
    %2655 = vmatprep.subr.bf16.mxu0 0
    %2656 = vmatpush1.bf16.msra.mxu0 0
    %2657 = vmatprep.subr.bf16.mxu0 0
    %2658 = vmatpush1.bf16.msra.mxu0 0
    %2659 = vmatprep.subr.bf16.mxu0 0
    %2660 = vmatpush1.bf16.msra.mxu0 0
    %2661 = vmatprep.subr.bf16.mxu0 0
    %2662 = vmatpush1.bf16.msra.mxu0 0
    %2663 = vmatprep.subr.bf16.mxu0 0
    %2664 = vmatpush1.bf16.msra.mxu0 0
    %2665 = vmatprep.subr.bf16.mxu0 0
    %2666 = vmatpush1.bf16.msra.mxu0 %v2601
    %2667 = vmatprep.subr.bf16.mxu0 0
    %2668 = vmatpush1.bf16.msra.mxu0 %v2598
    %2669 = vmatprep.subr.bf16.mxu0 0
    %2670 = vmatpush1.bf16.msra.mxu0 %v2595
    %2671 = vmatprep.subr.bf16.mxu0 0
    %2672 = vmatpush2.bf16.msra.mxu0 0
    %2673 = vmatprep.subr.bf16.mxu0 0
    %2674 = vmatpush2.bf16.msra.mxu0 0
    %2675 = vmatprep.subr.bf16.mxu0 0
    %2676 = vmatpush2.bf16.msra.mxu0 0
    %2677 = vmatprep.subr.bf16.mxu0 0
    %2678 = vmatpush2.bf16.msra.mxu0 0
    %2679 = vmatprep.subr.bf16.mxu0 0
    %2680 = vmatpush2.bf16.msra.mxu0 0
    %2681 = vmatprep.subr.bf16.mxu0 0
    %2682 = vmatpush2.bf16.msra.mxu0 0
    %2683 = vmatprep.subr.bf16.mxu0 0
    %2684 = vmatpush2.bf16.msra.mxu0 0
    %2685 = vmatprep.subr.bf16.mxu0 0
    %2686 = vmatpush2.bf16.msra.mxu0 0
    %2687 = vmatprep.mubr.bf16.mxu0 0
    %2688 = vmatmul.mubr.bf16.gmra.mxu0 %v2612
    %v2689 = vpop.f32.mrf.mxu0
    %v2690 = vadd.f32 %v2559, %v2689
    %v2691 = vpop.f32.mrf.mxu0
    %v2692 = vpop.f32.mrf.mxu0
    %v2693 = vpop.f32.mrf.mxu0
    %2694 = vdwg.mxu0
    %v2695 = vmax.f32 %v2649, 0.0
    %v2696 = vmax.f32 %v2651, 0.0
    %v2697 = vmax.f32 %v2690, 0.0
    %v2698 = vpack.c.bf16 %v2695, %v2695
    %v2699 = vpack.c.bf16 %v2696, %v2696
    %v2700 = vpack.c.bf16 %v2697, %v2697
    %v2701 = vld [vmem:[%s59] sm:$0xf]
    %v2702 = vld [vmem:[%s59 + $0x4] sm:$0xf]
    %v2703 = vld [vmem:[%s59 + $0x8] sm:$0xf]
    %v2704 = vld [vmem:[%s59 + $0xc] sm:$0xf]
    %v2705 = vld [vmem:[%s59 + $0x10] sm:$0xf]
    %v2706 = vld [vmem:[%s59 + $0x14] sm:$0xf]
    %v2707 = vld [vmem:[%s59 + $0x18] sm:$0xf]
    %v2708 = vld [vmem:[%s59 + $0x1c] sm:$0xf]
    %v2709 = vld [vmem:[%s59 + $0x20] sm:$0xf]
    %v2710 = vld [vmem:[%s59 + $0x24] sm:$0xf]
    %v2711 = vld [vmem:[%s59 + $0x28] sm:$0xf]
    %v2712 = vld [vmem:[%s59 + $0x2c] sm:$0xf]
    %v2713 = vld [vmem:[%s59 + $0x30] sm:$0xf]
    %v2714 = vld [vmem:[%s59 + $0x34] sm:$0xf]
    %v2715 = vld [vmem:[%s59 + $0x38] sm:$0xf]
    %v2716 = vld [vmem:[%s59 + $0x3c] sm:$0xf]
    %v2717 = vld [vmem:[%s59 + $0x40] sm:$0xf]
    %v2718 = vld [vmem:[%s59 + $0x44] sm:$0xf]
    %v2719 = vld [vmem:[%s59 + $0x48] sm:$0xf]
    %v2720 = vld [vmem:[%s59 + $0x4c] sm:$0xf]
    %v2721 = vld [vmem:[%s59 + $0x50] sm:$0xf]
    %v2722 = vld [vmem:[%s59 + $0x54] sm:$0xf]
    %v2723 = vld [vmem:[%s59 + $0x58] sm:$0xf]
    %v2724 = vld [vmem:[%s59 + $0x5c] sm:$0xf]
    %v2725 = vld [vmem:[%s59 + $0x60] sm:$0xf]
    %v2726 = vld [vmem:[%s59 + $0x64] sm:$0xf]
    %v2727 = vld [vmem:[%s59 + $0x68] sm:$0xf]
    %v2728 = vld [vmem:[%s59 + $0x6c] sm:$0xf]
    %v2729 = vld [vmem:[%s59 + $0x70] sm:$0xf]
    %v2730 = vld [vmem:[%s59 + $0x74] sm:$0xf]
    %v2731 = vld [vmem:[%s59 + $0x78] sm:$0xf]
    %v2732 = vld [vmem:[%s59 + $0x7c] sm:$0xf]
    %v2733 = vld [vmem:[%s59 + $0x80] sm:$0xf]
    %v2734 = vld [vmem:[%s59 + $0x84] sm:$0xf]
    %v2735 = vld [vmem:[%s59 + $0x88] sm:$0xf]
    %v2736 = vld [vmem:[%s59 + $0x8c] sm:$0xf]
    %v2737 = vld [vmem:[%s59 + $0x90] sm:$0xf]
    %v2738 = vld [vmem:[%s59 + $0x94] sm:$0xf]
    %v2739 = vld [vmem:[%s59 + $0x98] sm:$0xf]
    %v2740 = vld [vmem:[%s59 + $0x9c] sm:$0xf]
    %v2741 = vld [vmem:[%s59 + $0xa0] sm:$0xf]
    %v2742 = vld [vmem:[%s59 + $0xa4] sm:$0xf]
    %v2743 = vld [vmem:[%s59 + $0xa8] sm:$0xf]
    %v2744 = vld [vmem:[%s59 + $0xac] sm:$0xf]
    %v2745 = vld [vmem:[%s59 + $0xb0] sm:$0xf]
    %v2746 = vld [vmem:[%s59 + $0xb4] sm:$0xf]
    %v2747 = vld [vmem:[%s59 + $0xb8] sm:$0xf]
    %v2748 = vld [vmem:[%s59 + $0xbc] sm:$0xf]
    %v2749 = vld [vmem:[%s61] sm:$0xf]
    %v2750 = vld [vmem:[%s61 + $0x4] sm:$0xf]
    %v2751 = vld [vmem:[%s61 + $0x8] sm:$0xf]
    %v2752 = vld [vmem:[%s61 + $0xc] sm:$0xf]
    %v2753 = vld [vmem:[%s61 + $0x10] sm:$0xf]
    %v2754 = vld [vmem:[%s61 + $0x14] sm:$0xf]
    %v2761 = vunpack.c.l.b16 %v2749
    %v2762 = vunpack.c.l.b16 %v2750
    %v2763 = vunpack.c.l.b16 %v2751
    %v2764 = vunpack.c.l.b16 %v2752
    %v2765 = vunpack.c.l.b16 %v2753
    %v2766 = vunpack.c.l.b16 %v2754
    %v2767 = vpack.c.b16 %v2762, %v2761
    %v2768 = vpack.c.b16 %v2764, %v2763
    %v2769 = vpack.c.b16 %v2766, %v2765
    %2773 = vmatprep.subr.bf16.mxu0 0
    %2774 = vmatpush1.bf16.msra.mxu0 0
    %2775 = vmatprep.subr.bf16.mxu0 0
    %2776 = vmatpush1.bf16.msra.mxu0 0
    %2777 = vmatprep.subr.bf16.mxu0 0
    %2778 = vmatpush1.bf16.msra.mxu0 0
    %2779 = vmatprep.subr.bf16.mxu0 0
    %2780 = vmatpush1.bf16.msra.mxu0 0
    %2781 = vmatprep.subr.bf16.mxu0 0
    %2782 = vmatpush1.bf16.msra.mxu0 0
    %2783 = vmatprep.subr.bf16.mxu0 0
    %2784 = vmatpush1.bf16.msra.mxu0 %v2769
    %2785 = vmatprep.subr.bf16.mxu0 0
    %2786 = vmatpush1.bf16.msra.mxu0 %v2768
    %2787 = vmatprep.subr.bf16.mxu0 0
    %2788 = vmatpush1.bf16.msra.mxu0 %v2767
    %2789 = vmatprep.subr.bf16.mxu0 0
    %2790 = vmatpush2.bf16.msra.mxu0 0
    %2791 = vmatprep.subr.bf16.mxu0 0
    %2792 = vmatpush2.bf16.msra.mxu0 0
    %2793 = vmatprep.subr.bf16.mxu0 0
    %2794 = vmatpush2.bf16.msra.mxu0 0
    %2795 = vmatprep.subr.bf16.mxu0 0
    %2796 = vmatpush2.bf16.msra.mxu0 0
    %2797 = vmatprep.subr.bf16.mxu0 0
    %2798 = vmatpush2.bf16.msra.mxu0 0
    %2799 = vmatprep.subr.bf16.mxu0 0
    %2800 = vmatpush2.bf16.msra.mxu0 0
    %2801 = vmatprep.subr.bf16.mxu0 0
    %2802 = vmatpush2.bf16.msra.mxu0 0
    %2803 = vmatprep.subr.bf16.mxu0 0
    %2804 = vmatpush2.bf16.msra.mxu0 0
    %2805 = vmatprep.mubr.bf16.mxu0 0
    %2806 = vmatmul.mubr.bf16.gmra.mxu0 %v2612
    %v2807 = vpop.f32.mrf.mxu0
    %v2808 = vadd.f32 0.0, %v2807
    %v2809 = vpop.f32.mrf.mxu0
    %v2810 = vpop.f32.mrf.mxu0
    %v2811 = vpop.f32.mrf.mxu0
    %2812 = vdwg.mxu0
    %v2861 = vunpack.c.l.b16 %v2701
    %v2862 = vunpack.c.l.b16 %v2702
    %v2863 = vunpack.c.l.b16 %v2703
    %v2864 = vunpack.c.l.b16 %v2704
    %v2865 = vunpack.c.l.b16 %v2705
    %v2866 = vunpack.c.l.b16 %v2706
    %v2867 = vunpack.c.l.b16 %v2707
    %v2868 = vunpack.c.l.b16 %v2708
    %v2869 = vunpack.c.l.b16 %v2709
    %v2870 = vunpack.c.l.b16 %v2710
    %v2871 = vunpack.c.l.b16 %v2711
    %v2872 = vunpack.c.l.b16 %v2712
    %v2873 = vunpack.c.l.b16 %v2713
    %v2874 = vunpack.c.l.b16 %v2714
    %v2875 = vunpack.c.l.b16 %v2715
    %v2876 = vunpack.c.l.b16 %v2716
    %v2877 = vunpack.c.l.b16 %v2717
    %v2878 = vunpack.c.l.b16 %v2718
    %v2879 = vunpack.c.l.b16 %v2719
    %v2880 = vunpack.c.l.b16 %v2720
    %v2881 = vunpack.c.l.b16 %v2721
    %v2882 = vunpack.c.l.b16 %v2722
    %v2883 = vunpack.c.l.b16 %v2723
    %v2884 = vunpack.c.l.b16 %v2724
    %v2885 = vunpack.c.l.b16 %v2725
    %v2886 = vunpack.c.l.b16 %v2726
    %v2887 = vunpack.c.l.b16 %v2727
    %v2888 = vunpack.c.l.b16 %v2728
    %v2889 = vunpack.c.l.b16 %v2729
    %v2890 = vunpack.c.l.b16 %v2730
    %v2891 = vunpack.c.l.b16 %v2731
    %v2892 = vunpack.c.l.b16 %v2732
    %v2893 = vunpack.c.l.b16 %v2733
    %v2894 = vunpack.c.l.b16 %v2734
    %v2895 = vunpack.c.l.b16 %v2735
    %v2896 = vunpack.c.l.b16 %v2736
    %v2897 = vunpack.c.l.b16 %v2737
    %v2898 = vunpack.c.l.b16 %v2738
    %v2899 = vunpack.c.l.b16 %v2739
    %v2900 = vunpack.c.l.b16 %v2740
    %v2901 = vunpack.c.l.b16 %v2741
    %v2902 = vunpack.c.l.b16 %v2742
    %v2903 = vunpack.c.l.b16 %v2743
    %v2904 = vunpack.c.l.b16 %v2744
    %v2905 = vunpack.c.l.b16 %v2745
    %v2906 = vunpack.c.l.b16 %v2746
    %v2907 = vunpack.c.l.b16 %v2747
    %v2908 = vunpack.c.l.b16 %v2748
    %v2909 = vpack.c.b16 %v2862, %v2861
    %v2910 = vpack.c.b16 %v2864, %v2863
    %v2911 = vpack.c.b16 %v2866, %v2865
    %v2912 = vpack.c.b16 %v2868, %v2867
    %v2913 = vpack.c.b16 %v2870, %v2869
    %v2914 = vpack.c.b16 %v2872, %v2871
    %v2915 = vpack.c.b16 %v2874, %v2873
    %v2916 = vpack.c.b16 %v2876, %v2875
    %v2917 = vpack.c.b16 %v2878, %v2877
    %v2918 = vpack.c.b16 %v2880, %v2879
    %v2919 = vpack.c.b16 %v2882, %v2881
    %v2920 = vpack.c.b16 %v2884, %v2883
    %v2921 = vpack.c.b16 %v2886, %v2885
    %v2922 = vpack.c.b16 %v2888, %v2887
    %v2923 = vpack.c.b16 %v2890, %v2889
    %v2924 = vpack.c.b16 %v2892, %v2891
    %v2925 = vpack.c.b16 %v2894, %v2893
    %v2926 = vpack.c.b16 %v2896, %v2895
    %v2927 = vpack.c.b16 %v2898, %v2897
    %v2928 = vpack.c.b16 %v2900, %v2899
    %v2929 = vpack.c.b16 %v2902, %v2901
    %v2930 = vpack.c.b16 %v2904, %v2903
    %v2931 = vpack.c.b16 %v2906, %v2905
    %v2932 = vpack.c.b16 %v2908, %v2907
    %2957 = vmatprep.subr.bf16.mxu0 0
    %2958 = vmatpush1.bf16.msra.mxu0 %v2916
    %2959 = vmatprep.subr.bf16.mxu0 0
    %2960 = vmatpush1.bf16.msra.mxu0 %v2915
    %2961 = vmatprep.subr.bf16.mxu0 0
    %2962 = vmatpush1.bf16.msra.mxu0 %v2914
    %2963 = vmatprep.subr.bf16.mxu0 0
    %2964 = vmatpush1.bf16.msra.mxu0 %v2913
    %2965 = vmatprep.subr.bf16.mxu0 0
    %2966 = vmatpush1.bf16.msra.mxu0 %v2912
    %2967 = vmatprep.subr.bf16.mxu0 0
    %2968 = vmatpush1.bf16.msra.mxu0 %v2911
    %2969 = vmatprep.subr.bf16.mxu0 0
    %2970 = vmatpush1.bf16.msra.mxu0 %v2910
    %2971 = vmatprep.subr.bf16.mxu0 0
    %2972 = vmatpush1.bf16.msra.mxu0 %v2909
    %2973 = vmatprep.subr.bf16.mxu0 0
    %2974 = vmatpush2.bf16.msra.mxu0 %v2924
    %2975 = vmatprep.subr.bf16.mxu0 0
    %2976 = vmatpush2.bf16.msra.mxu0 %v2923
    %2977 = vmatprep.subr.bf16.mxu0 0
    %2978 = vmatpush2.bf16.msra.mxu0 %v2922
    %2979 = vmatprep.subr.bf16.mxu0 0
    %2980 = vmatpush2.bf16.msra.mxu0 %v2921
    %2981 = vmatprep.subr.bf16.mxu0 0
    %2982 = vmatpush2.bf16.msra.mxu0 %v2920
    %2983 = vmatprep.subr.bf16.mxu0 0
    %2984 = vmatpush2.bf16.msra.mxu0 %v2919
    %2985 = vmatprep.subr.bf16.mxu0 0
    %2986 = vmatpush2.bf16.msra.mxu0 %v2918
    %2987 = vmatprep.subr.bf16.mxu0 0
    %2988 = vmatpush2.bf16.msra.mxu0 %v2917
    %2989 = vmatprep.mubr.bf16.mxu0 %v2699
    %2990 = vmatmul.mubr.bf16.gmra.mxu0 %v2698
    %v2991 = vpop.f32.mrf.mxu0
    %v2992 = vadd.f32 %v2808, %v2991
    %v2993 = vpop.f32.mrf.mxu0
    %v2994 = vpop.f32.mrf.mxu0
    %v2995 = vpop.f32.mrf.mxu0
    %2996 = vdwg.mxu0
    %2997 = vmatprep.subr.bf16.mxu0 0
    %2998 = vmatpush1.bf16.msra.mxu0 %v2932
    %2999 = vmatprep.subr.bf16.mxu0 0
    %3000 = vmatpush1.bf16.msra.mxu0 %v2931
    %3001 = vmatprep.subr.bf16.mxu0 0
    %3002 = vmatpush1.bf16.msra.mxu0 %v2930
    %3003 = vmatprep.subr.bf16.mxu0 0
    %3004 = vmatpush1.bf16.msra.mxu0 %v2929
    %3005 = vmatprep.subr.bf16.mxu0 0
    %3006 = vmatpush1.bf16.msra.mxu0 %v2928
    %3007 = vmatprep.subr.bf16.mxu0 0
    %3008 = vmatpush1.bf16.msra.mxu0 %v2927
    %3009 = vmatprep.subr.bf16.mxu0 0
    %3010 = vmatpush1.bf16.msra.mxu0 %v2926
    %3011 = vmatprep.subr.bf16.mxu0 0
    %3012 = vmatpush1.bf16.msra.mxu0 %v2925
    %3013 = vmatprep.subr.bf16.mxu0 0
    %3014 = vmatpush2.bf16.msra.mxu0 0
    %3015 = vmatprep.subr.bf16.mxu0 0
    %3016 = vmatpush2.bf16.msra.mxu0 0
    %3017 = vmatprep.subr.bf16.mxu0 0
    %3018 = vmatpush2.bf16.msra.mxu0 0
    %3019 = vmatprep.subr.bf16.mxu0 0
    %3020 = vmatpush2.bf16.msra.mxu0 0
    %3021 = vmatprep.subr.bf16.mxu0 0
    %3022 = vmatpush2.bf16.msra.mxu0 0
    %3023 = vmatprep.subr.bf16.mxu0 0
    %3024 = vmatpush2.bf16.msra.mxu0 0
    %3025 = vmatprep.subr.bf16.mxu0 0
    %3026 = vmatpush2.bf16.msra.mxu0 0
    %3027 = vmatprep.subr.bf16.mxu0 0
    %3028 = vmatpush2.bf16.msra.mxu0 0
    %3029 = vmatprep.mubr.bf16.mxu0 0
    %3030 = vmatmul.mubr.bf16.gmra.mxu0 %v2700
    %v3031 = vpop.f32.mrf.mxu0
    %v3032 = vadd.f32 %v2992, %v3031
    %v3033 = vpop.f32.mrf.mxu0
    %v3034 = vpop.f32.mrf.mxu0
    %v3035 = vpop.f32.mrf.mxu0
    %3036 = vdwg.mxu0
    %v3037 = vld [vmem:[%s63] sm:$0x1]
    %v3039 = vlaneseq
    %v3040 = vshrl.u32 %v3039, 7
    %v3041 = vsub.s32 0, %v3040
    %v3042 = vrot.slane %v3037, %v3041
    %v3044 = vadd.f32 %v3032, %v3042
    %3046 = vrot.lane.b32.xlu0 %v2314, 48
    %v3047 = vpop.permute.xlu0 %3046
    %3050 = vrot.lane.b32.xlu0 %v2324, 80
    %v3051 = vpop.permute.xlu0 %3050
    %v3053 = vsel %vm1583, %v3044, %v3047
    %vm3054 = vcmask 654336
    %v3055 = vsel %vm3054, %v3053, %v3051
    %vm3056 = vcmask 916480
    %v3057 = vsel %vm3056, %v3055, 0.0
    %3058 = vst [vmem:[%s67] sm:$0x3] %v3057
    // Predicated region
    $region130: #{audio2pose_forward.1} parent=1 // pred_check
      _
    $region131: #{audio2pose_forward.1} parent=1 // pred_check_branch
      %3060 = sbr.rel (0) target = $region133
    $region132: #{audio2pose_forward.1} parent=1 // pred_region
      %s3062 = ssub.s32 256, 256
      %3063 = vsyncadd [#allocation3], %s3062
      %s3064 = sshll.u32 [#allocation2], 4
      %s3065 = int_to_ptr.vmem [resolvable:$true] %s3064
      %3070 = dma.vmem_to_hbm [thread:$0]  %s3065, 256, %s65, [#allocation3], 128, 128, 8
    $region133: #{audio2pose_forward.1} parent=1 // pred_fallthru
      _
    // Predicated region
    $region134: #{audio2pose_forward.1} parent=1 // pred_check
      _
    $region135: #{audio2pose_forward.1} parent=1 // pred_check_branch
      %3072 = sbr.rel (0) target = $region137
    $region136: #{audio2pose_forward.1} parent=1 // pred_region
      _
    $region137: #{audio2pose_forward.1} parent=1 // pred_fallthru
      _
    // Predicated region
    $region138: #{audio2pose_forward.1} parent=1 // pred_check
      _
    $region139: #{audio2pose_forward.1} parent=1 // pred_check_branch
      %3074 = sbr.rel (0) target = $region141
    $region140: #{audio2pose_forward.1} parent=1 // pred_region
      %3075 = dma.done [#allocation3], 256
    $region141: #{audio2pose_forward.1} parent=1 // pred_fallthru
      _
    // Predicated region
    $region142: #{audio2pose_forward.1} parent=1 // pred_check
      _
    $region143: #{audio2pose_forward.1} parent=1 // pred_check_branch
      %3077 = sbr.rel (0) target = $region145
    $region144: #{audio2pose_forward.1} parent=1 // pred_region
      _
    $region145: #{audio2pose_forward.1} parent=1 // pred_fallthru
      _
    %3078 = vsyncpa [#allocation3], 1

</llo_original>
